<compile_context>
chip_gen: v7x
topology: tpu7x:2x2x1
jax: 0.10.0
libtpu: 0.0.40
codegen_flags: <defaults>
</compile_context>

<pallas_src>
import jax
import jax.numpy as jnp
from jax.experimental import pallas as pl
from jax.experimental.pallas import tpu as pltpu

NEG_SLOPE = 0.01  # torch.nn.LeakyReLU default negative_slope


def _make_kernel(n_act_layers: int, traj_len: int):
    """Kernel ref order: t1_block, t2_block, Wt0, b0, ..., Wt_{L-1}, b_{L-1}, w_last, out.

    Trajectory blocks are (T, F, bb) with the batch block `bb` in the lane axis.
    """

    def kernel(t1_ref, t2_ref, *refs):
        out_ref = refs[-1]
        p = refs[:-1]
        bb = out_ref.shape[-1]

        def reward(x):                       # x: (F, bb) f32 -> (1, bb) f32
            h = x
            for i in range(n_act_layers):
                wt = p[2 * i][...]           # (out, in)  (pre-transposed in wrapper)
                b = p[2 * i + 1][...]        # (out, 1)
                h = jnp.dot(wt, h, preferred_element_type=jnp.float32) + b
                h = jnp.maximum(h, NEG_SLOPE * h)   # LeakyReLU
                # TODO(synk): Dropout is identity in eval mode; no stochastic op.
            return h                         # (1, bb)

        # Running per-batch-element difference of per-timestep rewards.
        acc = jnp.zeros((1, bb), jnp.float32)
        for t in range(traj_len):            # static unroll; traj_len is small here
            acc = acc + (reward(t2_ref[t]) - reward(t1_ref[t]))
        # TODO(synk): very long trajectories would want an inner grid axis /
        # fori_loop instead of a full static unroll.

        # Final Linear(1, 1) hoisted: its bias contributes T*b to both reward
        # sums and cancels exactly in the difference; only the weight remains.
        z = acc * p[-1][...]                 # (1, bb) * (1, 1)
        out_ref[...] = 1.0 / (1.0 + jnp.exp(-z))

    return kernel


def _vmem_capacity_bytes() -> int:
    try:
        cap = getattr(pltpu.get_tpu_info(), "vmem_capacity_bytes", None)
        if cap:
            return int(cap)
    except Exception:
        pass
    return 64 * 1024 * 1024   # conservative default (v7x per-TensorCore VMEM)


def _choose_batch_block(batch: int, traj_len: int, feat: int,
                        target_rows: int, vmem_budget: int):
    """Pick the lane-axis batch-block size `bb` and the padded batch size.

    The batch dim lives in the lane axis of every block, so `bb` must be a
    multiple of 128 unless the block spans the whole batch. Targets roughly
    `target_rows` trajectory rows (= bb * traj_len) per grid step, keeps the
    double-buffered input blocks inside `vmem_budget`, and for large batches
    guarantees >= 2 grid steps so "parallel" sharding has work to split.
    """
    if batch <= 256:
        # Single block: lane dim equals the full array dim, no padding needed.
        return batch, batch
    feat_pad = -(-feat // 8) * 8
    row_bytes = traj_len * feat_pad * 4                      # one batch column, f32
    target_bb = max(128, (target_rows // max(traj_len, 1)) // 128 * 128)
    padded128 = -(-batch // 128) * 128
    bb = min(target_bb, max(128, (padded128 // 2) // 128 * 128))   # >= 2 steps
    while bb > 128 and 4 * row_bytes * bb > vmem_budget:     # 2 inputs x 2 buffers
        bb -= 128
    padded = -(-batch // bb) * bb
    return bb, padded


def init_reward_encoder_params(key, n_dct_fns, n_actions, hidden_dims):
    """Deterministic init mimicking torch.nn.Linear defaults (uniform 1/sqrt(fan_in))."""
    input_dim = n_dct_fns ** 2 + n_actions
    dims = [input_dim] + list(hidden_dims) + [1]
    layer_shapes = [(dims[i], dims[i + 1]) for i in range(len(dims) - 1)]
    layer_shapes.append((dims[-1], 1))  # final Linear(1, 1)

    params = []
    for fan_in, fan_out in layer_shapes:
        key, kw, kb = jax.random.split(key, 3)
        bound = 1.0 / jnp.sqrt(float(fan_in))
        w = jax.random.uniform(kw, (fan_in, fan_out), jnp.float32, -bound, bound)
        b = jax.random.uniform(kb, (1, fan_out), jnp.float32, -bound, bound)
        params.append((w, b))
    return params


def preference_model_forward(t1, t2, params):
    """Pallas implementation of PreferenceModel.forward.

    t1, t2: (B, T, F) float32. Returns (B, 1) float32 preference probabilities.
    """
    B, T, F = t1.shape
    assert t2.shape == (B, T, F)
    t1 = t1.astype(jnp.float32)
    t2 = t2.astype(jnp.float32)

    # Generation-aware sizing: v7x has 64 MiB VMEM per TensorCore, v5e/v6e 128 MiB.
    vmem_cap = _vmem_capacity_bytes()
    small_vmem = vmem_cap <= 64 * 1024 * 1024
    vmem_limit = 32 * 1024 * 1024 if small_vmem else 64 * 1024 * 1024
    target_rows = 4096 if small_vmem else 8192

    bb, Bp = _choose_batch_block(B, T, F, target_rows, vmem_limit // 2)

    # Lane-major layout: (T, F, B) so the batch dim is the lane axis of every
    # block (layout plumbing done once by XLA outside the kernel). Padded batch
    # entries are zeros in both trajectories -> diff 0 -> sliced off below.
    def prep(x):
        xt = jnp.transpose(x, (1, 2, 0))          # (T, F, B)
        if Bp != B:
            xt = jnp.pad(xt, ((0, 0), (0, 0), (0, Bp - B)))
        return xt

    t1_T = prep(t1)
    t2_T = prep(t2)

    # Pre-transposed weights: Wt (out, in), b (out, 1). Final Linear(1,1) keeps
    # only its scalar weight (its bias cancels in the reward-sum difference).
    weight_args = []
    for w, b in params[:-1]:
        weight_args.append(w.T)
        weight_args.append(b.reshape(-1, 1))
    weight_args.append(params[-1][0])

    grid = (Bp // bb,)
    traj_spec = pl.BlockSpec((T, F, bb), lambda i: (0, 0, i))
    param_specs = [pl.BlockSpec(p.shape, lambda i: (0, 0)) for p in weight_args]

    out = pl.pallas_call(
        _make_kernel(len(params) - 1, T),
        out_shape=jax.ShapeDtypeStruct((1, Bp), jnp.float32),
        grid=grid,
        in_specs=[traj_spec, traj_spec] + param_specs,
        out_specs=pl.BlockSpec((1, bb), lambda i: (0, i)),     # lane-dense output
        compiler_params=pltpu.CompilerParams(
            dimension_semantics=("parallel",),
            vmem_limit_bytes=vmem_limit,
        ),
    )(t1_T, t2_T, *weight_args)
    return out[:, :B].reshape(B, 1)


def preference_model_reference(t1, t2, params):
    """Plain-JAX reference matching the torch module exactly (all 4 Linear layers)."""
    def mlp(x):
        h = x
        n_layers = len(params)
        for i, (w, b) in enumerate(params):
            h = h @ w + b
            if i < n_layers - 1:
                h = jnp.where(h >= 0.0, h, NEG_SLOPE * h)
        return h

    B, T, F = t1.shape
    r1 = mlp(t1.reshape(-1, F)).reshape(B, T)
    r2 = mlp(t2.reshape(-1, F)).reshape(B, T)
    return jax.nn.sigmoid(r2.sum(1, keepdims=True) - r1.sum(1, keepdims=True))


if __name__ == "__main__":
    n_dct_fns = 4
    n_actions = 4
    hidden_dims = [32, 32]
    B, T = 2, 8
    F = n_dct_fns ** 2 + n_actions  # 20

    key = jax.random.PRNGKey(0)
    key, k1, k2, kp = jax.random.split(key, 4)
    t1 = jax.random.normal(k1, (B, T, F), jnp.float32)
    t2 = jax.random.normal(k2, (B, T, F), jnp.float32)
    params = init_reward_encoder_params(kp, n_dct_fns, n_actions, hidden_dims)

    out = preference_model_forward(t1, t2, params)
    out = jax.block_until_ready(out)

    ref = preference_model_reference(t1, t2, params)
    assert out.shape == (B, 1), out.shape
    assert jnp.allclose(out, ref, atol=1e-5, rtol=1e-5), (out, ref)

    print("KERNEL_OK")
</pallas_src>

<mosaic_0001>
module attributes {stable_mosaic.version = 11 : i64} {
  func.func @kernel(%arg0: i32, %arg1: memref<8x20x2xf32, #tpu.memory_space<vmem>>, %arg2: memref<8x20x2xf32, #tpu.memory_space<vmem>>, %arg3: memref<32x20xf32, #tpu.memory_space<vmem>>, %arg4: memref<32x1xf32, #tpu.memory_space<vmem>>, %arg5: memref<32x32xf32, #tpu.memory_space<vmem>>, %arg6: memref<32x1xf32, #tpu.memory_space<vmem>>, %arg7: memref<1x32xf32, #tpu.memory_space<vmem>>, %arg8: memref<1x1xf32, #tpu.memory_space<vmem>>, %arg9: memref<1x1xf32, #tpu.memory_space<vmem>>, %arg10: memref<1x2xf32, #tpu.memory_space<vmem>>) attributes {dimension_semantics = [#tpu.dimension_semantics<parallel>], iteration_bounds = array<i64: 1>, scalar_prefetch = 0 : i64, scratch_operands = 0 : i64, tpu.core_type = #tpu.core_type<tc>, window_params = [{transform_indices = @transform_0, window_bounds = array<i64: 8, 20, 2>}, {transform_indices = @transform_1, window_bounds = array<i64: 8, 20, 2>}, {pipeline_mode = #tpu.pipeline_mode<synchronous>, transform_indices = @transform_2, window_bounds = array<i64: 32, 20>}, {pipeline_mode = #tpu.pipeline_mode<synchronous>, transform_indices = @transform_3, window_bounds = array<i64: 32, 1>}, {pipeline_mode = #tpu.pipeline_mode<synchronous>, transform_indices = @transform_4, window_bounds = array<i64: 32, 32>}, {pipeline_mode = #tpu.pipeline_mode<synchronous>, transform_indices = @transform_5, window_bounds = array<i64: 32, 1>}, {pipeline_mode = #tpu.pipeline_mode<synchronous>, transform_indices = @transform_6, window_bounds = array<i64: 1, 32>}, {pipeline_mode = #tpu.pipeline_mode<synchronous>, transform_indices = @transform_7, window_bounds = array<i64: 1, 1>}, {pipeline_mode = #tpu.pipeline_mode<synchronous>, transform_indices = @transform_8, window_bounds = array<i64: 1, 1>}, {transform_indices = @transform_9, window_bounds = array<i64: 1, 2>}]} {
    %cst = arith.constant 0.000000e+00 : f32
    %0 = vector.broadcast %cst : f32 to vector<1x2xf32>
    %c0 = arith.constant 0 : index
    %c0_0 = arith.constant 0 : index
    %c0_1 = arith.constant 0 : index
    %1 = vector.load %arg2[%c0, %c0_0, %c0_1] : memref<8x20x2xf32, #tpu.memory_space<vmem>>, vector<1x20x2xf32>
    %2 = vector.shape_cast %1 : vector<1x20x2xf32> to vector<20x2xf32>
    %c0_2 = arith.constant 0 : index
    %c0_3 = arith.constant 0 : index
    %3 = vector.load %arg3[%c0_2, %c0_3] : memref<32x20xf32, #tpu.memory_space<vmem>>, vector<32x20xf32>
    %c0_4 = arith.constant 0 : index
    %c0_5 = arith.constant 0 : index
    %4 = vector.load %arg4[%c0_4, %c0_5] : memref<32x1xf32, #tpu.memory_space<vmem>>, vector<32x1xf32>
    %cst_6 = arith.constant dense<0.000000e+00> : vector<32x2xf32>
    %5 = tpu.matmul %3, %2, %cst_6 {dimension_numbers = #tpu.dot_dimension_numbers<[1], [0], [0], [1], [0, 0, 1, 1], [], []>} : vector<32x20xf32>, vector<20x2xf32>, vector<32x2xf32> -> vector<32x2xf32>
    %6 = vector.broadcast %4 : vector<32x1xf32> to vector<32x2xf32>
    %7 = arith.addf %5, %6 : vector<32x2xf32>
    %cst_7 = arith.constant 0.00999999977 : f32
    %8 = vector.broadcast %cst_7 : f32 to vector<32x2xf32>
    %9 = arith.mulf %8, %7 : vector<32x2xf32>
    %10 = arith.maximumf %7, %9 : vector<32x2xf32>
    %c0_8 = arith.constant 0 : index
    %c0_9 = arith.constant 0 : index
    %11 = vector.load %arg5[%c0_8, %c0_9] : memref<32x32xf32, #tpu.memory_space<vmem>>, vector<32x32xf32>
    %c0_10 = arith.constant 0 : index
    %c0_11 = arith.constant 0 : index
    %12 = vector.load %arg6[%c0_10, %c0_11] : memref<32x1xf32, #tpu.memory_space<vmem>>, vector<32x1xf32>
    %cst_12 = arith.constant dense<0.000000e+00> : vector<32x2xf32>
    %13 = tpu.matmul %11, %10, %cst_12 {dimension_numbers = #tpu.dot_dimension_numbers<[1], [0], [0], [1], [0, 0, 1, 1], [], []>} : vector<32x32xf32>, vector<32x2xf32>, vector<32x2xf32> -> vector<32x2xf32>
    %14 = vector.broadcast %12 : vector<32x1xf32> to vector<32x2xf32>
    %15 = arith.addf %13, %14 : vector<32x2xf32>
    %cst_13 = arith.constant 0.00999999977 : f32
    %16 = vector.broadcast %cst_13 : f32 to vector<32x2xf32>
    %17 = arith.mulf %16, %15 : vector<32x2xf32>
    %18 = arith.maximumf %15, %17 : vector<32x2xf32>
    %c0_14 = arith.constant 0 : index
    %c0_15 = arith.constant 0 : index
    %19 = vector.load %arg7[%c0_14, %c0_15] : memref<1x32xf32, #tpu.memory_space<vmem>>, vector<1x32xf32>
    %c0_16 = arith.constant 0 : index
    %c0_17 = arith.constant 0 : index
    %20 = vector.load %arg8[%c0_16, %c0_17] : memref<1x1xf32, #tpu.memory_space<vmem>>, vector<1x1xf32>
    %cst_18 = arith.constant dense<0.000000e+00> : vector<1x2xf32>
    %21 = tpu.matmul %19, %18, %cst_18 {dimension_numbers = #tpu.dot_dimension_numbers<[1], [0], [0], [1], [0, 0, 1, 1], [], []>} : vector<1x32xf32>, vector<32x2xf32>, vector<1x2xf32> -> vector<1x2xf32>
    %22 = vector.broadcast %20 : vector<1x1xf32> to vector<1x2xf32>
    %23 = arith.addf %21, %22 : vector<1x2xf32>
    %cst_19 = arith.constant 0.00999999977 : f32
    %24 = vector.broadcast %cst_19 : f32 to vector<1x2xf32>
    %25 = arith.mulf %24, %23 : vector<1x2xf32>
    %26 = arith.maximumf %23, %25 : vector<1x2xf32>
    %c0_20 = arith.constant 0 : index
    %c0_21 = arith.constant 0 : index
    %c0_22 = arith.constant 0 : index
    %27 = vector.load %arg1[%c0_20, %c0_21, %c0_22] : memref<8x20x2xf32, #tpu.memory_space<vmem>>, vector<1x20x2xf32>
    %28 = vector.shape_cast %27 : vector<1x20x2xf32> to vector<20x2xf32>
    %c0_23 = arith.constant 0 : index
    %c0_24 = arith.constant 0 : index
    %29 = vector.load %arg3[%c0_23, %c0_24] : memref<32x20xf32, #tpu.memory_space<vmem>>, vector<32x20xf32>
    %c0_25 = arith.constant 0 : index
    %c0_26 = arith.constant 0 : index
    %30 = vector.load %arg4[%c0_25, %c0_26] : memref<32x1xf32, #tpu.memory_space<vmem>>, vector<32x1xf32>
    %cst_27 = arith.constant dense<0.000000e+00> : vector<32x2xf32>
    %31 = tpu.matmul %29, %28, %cst_27 {dimension_numbers = #tpu.dot_dimension_numbers<[1], [0], [0], [1], [0, 0, 1, 1], [], []>} : vector<32x20xf32>, vector<20x2xf32>, vector<32x2xf32> -> vector<32x2xf32>
    %32 = vector.broadcast %30 : vector<32x1xf32> to vector<32x2xf32>
    %33 = arith.addf %31, %32 : vector<32x2xf32>
    %cst_28 = arith.constant 0.00999999977 : f32
    %34 = vector.broadcast %cst_28 : f32 to vector<32x2xf32>
    %35 = arith.mulf %34, %33 : vector<32x2xf32>
    %36 = arith.maximumf %33, %35 : vector<32x2xf32>
    %c0_29 = arith.constant 0 : index
    %c0_30 = arith.constant 0 : index
    %37 = vector.load %arg5[%c0_29, %c0_30] : memref<32x32xf32, #tpu.memory_space<vmem>>, vector<32x32xf32>
    %c0_31 = arith.constant 0 : index
    %c0_32 = arith.constant 0 : index
    %38 = vector.load %arg6[%c0_31, %c0_32] : memref<32x1xf32, #tpu.memory_space<vmem>>, vector<32x1xf32>
    %cst_33 = arith.constant dense<0.000000e+00> : vector<32x2xf32>
    %39 = tpu.matmul %37, %36, %cst_33 {dimension_numbers = #tpu.dot_dimension_numbers<[1], [0], [0], [1], [0, 0, 1, 1], [], []>} : vector<32x32xf32>, vector<32x2xf32>, vector<32x2xf32> -> vector<32x2xf32>
    %40 = vector.broadcast %38 : vector<32x1xf32> to vector<32x2xf32>
    %41 = arith.addf %39, %40 : vector<32x2xf32>
    %cst_34 = arith.constant 0.00999999977 : f32
    %42 = vector.broadcast %cst_34 : f32 to vector<32x2xf32>
    %43 = arith.mulf %42, %41 : vector<32x2xf32>
    %44 = arith.maximumf %41, %43 : vector<32x2xf32>
    %c0_35 = arith.constant 0 : index
    %c0_36 = arith.constant 0 : index
    %45 = vector.load %arg7[%c0_35, %c0_36] : memref<1x32xf32, #tpu.memory_space<vmem>>, vector<1x32xf32>
    %c0_37 = arith.constant 0 : index
    %c0_38 = arith.constant 0 : index
    %46 = vector.load %arg8[%c0_37, %c0_38] : memref<1x1xf32, #tpu.memory_space<vmem>>, vector<1x1xf32>
    %cst_39 = arith.constant dense<0.000000e+00> : vector<1x2xf32>
    %47 = tpu.matmul %45, %44, %cst_39 {dimension_numbers = #tpu.dot_dimension_numbers<[1], [0], [0], [1], [0, 0, 1, 1], [], []>} : vector<1x32xf32>, vector<32x2xf32>, vector<1x2xf32> -> vector<1x2xf32>
    %48 = vector.broadcast %46 : vector<1x1xf32> to vector<1x2xf32>
    %49 = arith.addf %47, %48 : vector<1x2xf32>
    %cst_40 = arith.constant 0.00999999977 : f32
    %50 = vector.broadcast %cst_40 : f32 to vector<1x2xf32>
    %51 = arith.mulf %50, %49 : vector<1x2xf32>
    %52 = arith.maximumf %49, %51 : vector<1x2xf32>
    %53 = arith.subf %26, %52 : vector<1x2xf32>
    %54 = arith.addf %0, %53 : vector<1x2xf32>
    %c1 = arith.constant 1 : index
    %c0_41 = arith.constant 0 : index
    %c0_42 = arith.constant 0 : index
    %55 = vector.load %arg2[%c1, %c0_41, %c0_42] : memref<8x20x2xf32, #tpu.memory_space<vmem>>, vector<1x20x2xf32>
    %56 = vector.shape_cast %55 : vector<1x20x2xf32> to vector<20x2xf32>
    %c0_43 = arith.constant 0 : index
    %c0_44 = arith.constant 0 : index
    %57 = vector.load %arg3[%c0_43, %c0_44] : memref<32x20xf32, #tpu.memory_space<vmem>>, vector<32x20xf32>
    %c0_45 = arith.constant 0 : index
    %c0_46 = arith.constant 0 : index
    %58 = vector.load %arg4[%c0_45, %c0_46] : memref<32x1xf32, #tpu.memory_space<vmem>>, vector<32x1xf32>
    %cst_47 = arith.constant dense<0.000000e+00> : vector<32x2xf32>
    %59 = tpu.matmul %57, %56, %cst_47 {dimension_numbers = #tpu.dot_dimension_numbers<[1], [0], [0], [1], [0, 0, 1, 1], [], []>} : vector<32x20xf32>, vector<20x2xf32>, vector<32x2xf32> -> vector<32x2xf32>
    %60 = vector.broadcast %58 : vector<32x1xf32> to vector<32x2xf32>
    %61 = arith.addf %59, %60 : vector<32x2xf32>
    %cst_48 = arith.constant 0.00999999977 : f32
    %62 = vector.broadcast %cst_48 : f32 to vector<32x2xf32>
    %63 = arith.mulf %62, %61 : vector<32x2xf32>
    %64 = arith.maximumf %61, %63 : vector<32x2xf32>
    %c0_49 = arith.constant 0 : index
    %c0_50 = arith.constant 0 : index
    %65 = vector.load %arg5[%c0_49, %c0_50] : memref<32x32xf32, #tpu.memory_space<vmem>>, vector<32x32xf32>
    %c0_51 = arith.constant 0 : index
    %c0_52 = arith.constant 0 : index
    %66 = vector.load %arg6[%c0_51, %c0_52] : memref<32x1xf32, #tpu.memory_space<vmem>>, vector<32x1xf32>
    %cst_53 = arith.constant dense<0.000000e+00> : vector<32x2xf32>
    %67 = tpu.matmul %65, %64, %cst_53 {dimension_numbers = #tpu.dot_dimension_numbers<[1], [0], [0], [1], [0, 0, 1, 1], [], []>} : vector<32x32xf32>, vector<32x2xf32>, vector<32x2xf32> -> vector<32x2xf32>
    %68 = vector.broadcast %66 : vector<32x1xf32> to vector<32x2xf32>
    %69 = arith.addf %67, %68 : vector<32x2xf32>
    %cst_54 = arith.constant 0.00999999977 : f32
    %70 = vector.broadcast %cst_54 : f32 to vector<32x2xf32>
    %71 = arith.mulf %70, %69 : vector<32x2xf32>
    %72 = arith.maximumf %69, %71 : vector<32x2xf32>
    %c0_55 = arith.constant 0 : index
    %c0_56 = arith.constant 0 : index
    %73 = vector.load %arg7[%c0_55, %c0_56] : memref<1x32xf32, #tpu.memory_space<vmem>>, vector<1x32xf32>
    %c0_57 = arith.constant 0 : index
    %c0_58 = arith.constant 0 : index
    %74 = vector.load %arg8[%c0_57, %c0_58] : memref<1x1xf32, #tpu.memory_space<vmem>>, vector<1x1xf32>
    %cst_59 = arith.constant dense<0.000000e+00> : vector<1x2xf32>
    %75 = tpu.matmul %73, %72, %cst_59 {dimension_numbers = #tpu.dot_dimension_numbers<[1], [0], [0], [1], [0, 0, 1, 1], [], []>} : vector<1x32xf32>, vector<32x2xf32>, vector<1x2xf32> -> vector<1x2xf32>
    %76 = vector.broadcast %74 : vector<1x1xf32> to vector<1x2xf32>
    %77 = arith.addf %75, %76 : vector<1x2xf32>
    %cst_60 = arith.constant 0.00999999977 : f32
    %78 = vector.broadcast %cst_60 : f32 to vector<1x2xf32>
    %79 = arith.mulf %78, %77 : vector<1x2xf32>
    %80 = arith.maximumf %77, %79 : vector<1x2xf32>
    %c1_61 = arith.constant 1 : index
    %c0_62 = arith.constant 0 : index
    %c0_63 = arith.constant 0 : index
    %81 = vector.load %arg1[%c1_61, %c0_62, %c0_63] : memref<8x20x2xf32, #tpu.memory_space<vmem>>, vector<1x20x2xf32>
    %82 = vector.shape_cast %81 : vector<1x20x2xf32> to vector<20x2xf32>
    %c0_64 = arith.constant 0 : index
    %c0_65 = arith.constant 0 : index
    %83 = vector.load %arg3[%c0_64, %c0_65] : memref<32x20xf32, #tpu.memory_space<vmem>>, vector<32x20xf32>
    %c0_66 = arith.constant 0 : index
    %c0_67 = arith.constant 0 : index
    %84 = vector.load %arg4[%c0_66, %c0_67] : memref<32x1xf32, #tpu.memory_space<vmem>>, vector<32x1xf32>
    %cst_68 = arith.constant dense<0.000000e+00> : vector<32x2xf32>
    %85 = tpu.matmul %83, %82, %cst_68 {dimension_numbers = #tpu.dot_dimension_numbers<[1], [0], [0], [1], [0, 0, 1, 1], [], []>} : vector<32x20xf32>, vector<20x2xf32>, vector<32x2xf32> -> vector<32x2xf32>
    %86 = vector.broadcast %84 : vector<32x1xf32> to vector<32x2xf32>
    %87 = arith.addf %85, %86 : vector<32x2xf32>
    %cst_69 = arith.constant 0.00999999977 : f32
    %88 = vector.broadcast %cst_69 : f32 to vector<32x2xf32>
    %89 = arith.mulf %88, %87 : vector<32x2xf32>
    %90 = arith.maximumf %87, %89 : vector<32x2xf32>
    %c0_70 = arith.constant 0 : index
    %c0_71 = arith.constant 0 : index
    %91 = vector.load %arg5[%c0_70, %c0_71] : memref<32x32xf32, #tpu.memory_space<vmem>>, vector<32x32xf32>
    %c0_72 = arith.constant 0 : index
    %c0_73 = arith.constant 0 : index
    %92 = vector.load %arg6[%c0_72, %c0_73] : memref<32x1xf32, #tpu.memory_space<vmem>>, vector<32x1xf32>
    %cst_74 = arith.constant dense<0.000000e+00> : vector<32x2xf32>
    %93 = tpu.matmul %91, %90, %cst_74 {dimension_numbers = #tpu.dot_dimension_numbers<[1], [0], [0], [1], [0, 0, 1, 1], [], []>} : vector<32x32xf32>, vector<32x2xf32>, vector<32x2xf32> -> vector<32x2xf32>
    %94 = vector.broadcast %92 : vector<32x1xf32> to vector<32x2xf32>
    %95 = arith.addf %93, %94 : vector<32x2xf32>
    %cst_75 = arith.constant 0.00999999977 : f32
    %96 = vector.broadcast %cst_75 : f32 to vector<32x2xf32>
    %97 = arith.mulf %96, %95 : vector<32x2xf32>
    %98 = arith.maximumf %95, %97 : vector<32x2xf32>
    %c0_76 = arith.constant 0 : index
    %c0_77 = arith.constant 0 : index
    %99 = vector.load %arg7[%c0_76, %c0_77] : memref<1x32xf32, #tpu.memory_space<vmem>>, vector<1x32xf32>
    %c0_78 = arith.constant 0 : index
    %c0_79 = arith.constant 0 : index
    %100 = vector.load %arg8[%c0_78, %c0_79] : memref<1x1xf32, #tpu.memory_space<vmem>>, vector<1x1xf32>
    %cst_80 = arith.constant dense<0.000000e+00> : vector<1x2xf32>
    %101 = tpu.matmul %99, %98, %cst_80 {dimension_numbers = #tpu.dot_dimension_numbers<[1], [0], [0], [1], [0, 0, 1, 1], [], []>} : vector<1x32xf32>, vector<32x2xf32>, vector<1x2xf32> -> vector<1x2xf32>
    %102 = vector.broadcast %100 : vector<1x1xf32> to vector<1x2xf32>
    %103 = arith.addf %101, %102 : vector<1x2xf32>
    %cst_81 = arith.constant 0.00999999977 : f32
    %104 = vector.broadcast %cst_81 : f32 to vector<1x2xf32>
    %105 = arith.mulf %104, %103 : vector<1x2xf32>
    %106 = arith.maximumf %103, %105 : vector<1x2xf32>
    %107 = arith.subf %80, %106 : vector<1x2xf32>
    %108 = arith.addf %54, %107 : vector<1x2xf32>
    %c2 = arith.constant 2 : index
    %c0_82 = arith.constant 0 : index
    %c0_83 = arith.constant 0 : index
    %109 = vector.load %arg2[%c2, %c0_82, %c0_83] : memref<8x20x2xf32, #tpu.memory_space<vmem>>, vector<1x20x2xf32>
    %110 = vector.shape_cast %109 : vector<1x20x2xf32> to vector<20x2xf32>
    %c0_84 = arith.constant 0 : index
    %c0_85 = arith.constant 0 : index
    %111 = vector.load %arg3[%c0_84, %c0_85] : memref<32x20xf32, #tpu.memory_space<vmem>>, vector<32x20xf32>
    %c0_86 = arith.constant 0 : index
    %c0_87 = arith.constant 0 : index
    %112 = vector.load %arg4[%c0_86, %c0_87] : memref<32x1xf32, #tpu.memory_space<vmem>>, vector<32x1xf32>
    %cst_88 = arith.constant dense<0.000000e+00> : vector<32x2xf32>
    %113 = tpu.matmul %111, %110, %cst_88 {dimension_numbers = #tpu.dot_dimension_numbers<[1], [0], [0], [1], [0, 0, 1, 1], [], []>} : vector<32x20xf32>, vector<20x2xf32>, vector<32x2xf32> -> vector<32x2xf32>
    %114 = vector.broadcast %112 : vector<32x1xf32> to vector<32x2xf32>
    %115 = arith.addf %113, %114 : vector<32x2xf32>
    %cst_89 = arith.constant 0.00999999977 : f32
    %116 = vector.broadcast %cst_89 : f32 to vector<32x2xf32>
    %117 = arith.mulf %116, %115 : vector<32x2xf32>
    %118 = arith.maximumf %115, %117 : vector<32x2xf32>
    %c0_90 = arith.constant 0 : index
    %c0_91 = arith.constant 0 : index
    %119 = vector.load %arg5[%c0_90, %c0_91] : memref<32x32xf32, #tpu.memory_space<vmem>>, vector<32x32xf32>
    %c0_92 = arith.constant 0 : index
    %c0_93 = arith.constant 0 : index
    %120 = vector.load %arg6[%c0_92, %c0_93] : memref<32x1xf32, #tpu.memory_space<vmem>>, vector<32x1xf32>
    %cst_94 = arith.constant dense<0.000000e+00> : vector<32x2xf32>
    %121 = tpu.matmul %119, %118, %cst_94 {dimension_numbers = #tpu.dot_dimension_numbers<[1], [0], [0], [1], [0, 0, 1, 1], [], []>} : vector<32x32xf32>, vector<32x2xf32>, vector<32x2xf32> -> vector<32x2xf32>
    %122 = vector.broadcast %120 : vector<32x1xf32> to vector<32x2xf32>
    %123 = arith.addf %121, %122 : vector<32x2xf32>
    %cst_95 = arith.constant 0.00999999977 : f32
    %124 = vector.broadcast %cst_95 : f32 to vector<32x2xf32>
    %125 = arith.mulf %124, %123 : vector<32x2xf32>
    %126 = arith.maximumf %123, %125 : vector<32x2xf32>
    %c0_96 = arith.constant 0 : index
    %c0_97 = arith.constant 0 : index
    %127 = vector.load %arg7[%c0_96, %c0_97] : memref<1x32xf32, #tpu.memory_space<vmem>>, vector<1x32xf32>
    %c0_98 = arith.constant 0 : index
    %c0_99 = arith.constant 0 : index
    %128 = vector.load %arg8[%c0_98, %c0_99] : memref<1x1xf32, #tpu.memory_space<vmem>>, vector<1x1xf32>
    %cst_100 = arith.constant dense<0.000000e+00> : vector<1x2xf32>
    %129 = tpu.matmul %127, %126, %cst_100 {dimension_numbers = #tpu.dot_dimension_numbers<[1], [0], [0], [1], [0, 0, 1, 1], [], []>} : vector<1x32xf32>, vector<32x2xf32>, vector<1x2xf32> -> vector<1x2xf32>
    %130 = vector.broadcast %128 : vector<1x1xf32> to vector<1x2xf32>
    %131 = arith.addf %129, %130 : vector<1x2xf32>
    %cst_101 = arith.constant 0.00999999977 : f32
    %132 = vector.broadcast %cst_101 : f32 to vector<1x2xf32>
    %133 = arith.mulf %132, %131 : vector<1x2xf32>
    %134 = arith.maximumf %131, %133 : vector<1x2xf32>
    %c2_102 = arith.constant 2 : index
    %c0_103 = arith.constant 0 : index
    %c0_104 = arith.constant 0 : index
    %135 = vector.load %arg1[%c2_102, %c0_103, %c0_104] : memref<8x20x2xf32, #tpu.memory_space<vmem>>, vector<1x20x2xf32>
    %136 = vector.shape_cast %135 : vector<1x20x2xf32> to vector<20x2xf32>
    %c0_105 = arith.constant 0 : index
    %c0_106 = arith.constant 0 : index
    %137 = vector.load %arg3[%c0_105, %c0_106] : memref<32x20xf32, #tpu.memory_space<vmem>>, vector<32x20xf32>
    %c0_107 = arith.constant 0 : index
    %c0_108 = arith.constant 0 : index
    %138 = vector.load %arg4[%c0_107, %c0_108] : memref<32x1xf32, #tpu.memory_space<vmem>>, vector<32x1xf32>
    %cst_109 = arith.constant dense<0.000000e+00> : vector<32x2xf32>
    %139 = tpu.matmul %137, %136, %cst_109 {dimension_numbers = #tpu.dot_dimension_numbers<[1], [0], [0], [1], [0, 0, 1, 1], [], []>} : vector<32x20xf32>, vector<20x2xf32>, vector<32x2xf32> -> vector<32x2xf32>
    %140 = vector.broadcast %138 : vector<32x1xf32> to vector<32x2xf32>
    %141 = arith.addf %139, %140 : vector<32x2xf32>
    %cst_110 = arith.constant 0.00999999977 : f32
    %142 = vector.broadcast %cst_110 : f32 to vector<32x2xf32>
    %143 = arith.mulf %142, %141 : vector<32x2xf32>
    %144 = arith.maximumf %141, %143 : vector<32x2xf32>
    %c0_111 = arith.constant 0 : index
    %c0_112 = arith.constant 0 : index
    %145 = vector.load %arg5[%c0_111, %c0_112] : memref<32x32xf32, #tpu.memory_space<vmem>>, vector<32x32xf32>
    %c0_113 = arith.constant 0 : index
    %c0_114 = arith.constant 0 : index
    %146 = vector.load %arg6[%c0_113, %c0_114] : memref<32x1xf32, #tpu.memory_space<vmem>>, vector<32x1xf32>
    %cst_115 = arith.constant dense<0.000000e+00> : vector<32x2xf32>
    %147 = tpu.matmul %145, %144, %cst_115 {dimension_numbers = #tpu.dot_dimension_numbers<[1], [0], [0], [1], [0, 0, 1, 1], [], []>} : vector<32x32xf32>, vector<32x2xf32>, vector<32x2xf32> -> vector<32x2xf32>
    %148 = vector.broadcast %146 : vector<32x1xf32> to vector<32x2xf32>
    %149 = arith.addf %147, %148 : vector<32x2xf32>
    %cst_116 = arith.constant 0.00999999977 : f32
    %150 = vector.broadcast %cst_116 : f32 to vector<32x2xf32>
    %151 = arith.mulf %150, %149 : vector<32x2xf32>
    %152 = arith.maximumf %149, %151 : vector<32x2xf32>
    %c0_117 = arith.constant 0 : index
    %c0_118 = arith.constant 0 : index
    %153 = vector.load %arg7[%c0_117, %c0_118] : memref<1x32xf32, #tpu.memory_space<vmem>>, vector<1x32xf32>
    %c0_119 = arith.constant 0 : index
    %c0_120 = arith.constant 0 : index
    %154 = vector.load %arg8[%c0_119, %c0_120] : memref<1x1xf32, #tpu.memory_space<vmem>>, vector<1x1xf32>
    %cst_121 = arith.constant dense<0.000000e+00> : vector<1x2xf32>
    %155 = tpu.matmul %153, %152, %cst_121 {dimension_numbers = #tpu.dot_dimension_numbers<[1], [0], [0], [1], [0, 0, 1, 1], [], []>} : vector<1x32xf32>, vector<32x2xf32>, vector<1x2xf32> -> vector<1x2xf32>
    %156 = vector.broadcast %154 : vector<1x1xf32> to vector<1x2xf32>
    %157 = arith.addf %155, %156 : vector<1x2xf32>
    %cst_122 = arith.constant 0.00999999977 : f32
    %158 = vector.broadcast %cst_122 : f32 to vector<1x2xf32>
    %159 = arith.mulf %158, %157 : vector<1x2xf32>
    %160 = arith.maximumf %157, %159 : vector<1x2xf32>
    %161 = arith.subf %134, %160 : vector<1x2xf32>
    %162 = arith.addf %108, %161 : vector<1x2xf32>
    %c3 = arith.constant 3 : index
    %c0_123 = arith.constant 0 : index
    %c0_124 = arith.constant 0 : index
    %163 = vector.load %arg2[%c3, %c0_123, %c0_124] : memref<8x20x2xf32, #tpu.memory_space<vmem>>, vector<1x20x2xf32>
    %164 = vector.shape_cast %163 : vector<1x20x2xf32> to vector<20x2xf32>
    %c0_125 = arith.constant 0 : index
    %c0_126 = arith.constant 0 : index
    %165 = vector.load %arg3[%c0_125, %c0_126] : memref<32x20xf32, #tpu.memory_space<vmem>>, vector<32x20xf32>
    %c0_127 = arith.constant 0 : index
    %c0_128 = arith.constant 0 : index
    %166 = vector.load %arg4[%c0_127, %c0_128] : memref<32x1xf32, #tpu.memory_space<vmem>>, vector<32x1xf32>
    %cst_129 = arith.constant dense<0.000000e+00> : vector<32x2xf32>
    %167 = tpu.matmul %165, %164, %cst_129 {dimension_numbers = #tpu.dot_dimension_numbers<[1], [0], [0], [1], [0, 0, 1, 1], [], []>} : vector<32x20xf32>, vector<20x2xf32>, vector<32x2xf32> -> vector<32x2xf32>
    %168 = vector.broadcast %166 : vector<32x1xf32> to vector<32x2xf32>
    %169 = arith.addf %167, %168 : vector<32x2xf32>
    %cst_130 = arith.constant 0.00999999977 : f32
    %170 = vector.broadcast %cst_130 : f32 to vector<32x2xf32>
    %171 = arith.mulf %170, %169 : vector<32x2xf32>
    %172 = arith.maximumf %169, %171 : vector<32x2xf32>
    %c0_131 = arith.constant 0 : index
    %c0_132 = arith.constant 0 : index
    %173 = vector.load %arg5[%c0_131, %c0_132] : memref<32x32xf32, #tpu.memory_space<vmem>>, vector<32x32xf32>
    %c0_133 = arith.constant 0 : index
    %c0_134 = arith.constant 0 : index
    %174 = vector.load %arg6[%c0_133, %c0_134] : memref<32x1xf32, #tpu.memory_space<vmem>>, vector<32x1xf32>
    %cst_135 = arith.constant dense<0.000000e+00> : vector<32x2xf32>
    %175 = tpu.matmul %173, %172, %cst_135 {dimension_numbers = #tpu.dot_dimension_numbers<[1], [0], [0], [1], [0, 0, 1, 1], [], []>} : vector<32x32xf32>, vector<32x2xf32>, vector<32x2xf32> -> vector<32x2xf32>
    %176 = vector.broadcast %174 : vector<32x1xf32> to vector<32x2xf32>
    %177 = arith.addf %175, %176 : vector<32x2xf32>
    %cst_136 = arith.constant 0.00999999977 : f32
    %178 = vector.broadcast %cst_136 : f32 to vector<32x2xf32>
    %179 = arith.mulf %178, %177 : vector<32x2xf32>
    %180 = arith.maximumf %177, %179 : vector<32x2xf32>
    %c0_137 = arith.constant 0 : index
    %c0_138 = arith.constant 0 : index
    %181 = vector.load %arg7[%c0_137, %c0_138] : memref<1x32xf32, #tpu.memory_space<vmem>>, vector<1x32xf32>
    %c0_139 = arith.constant 0 : index
    %c0_140 = arith.constant 0 : index
    %182 = vector.load %arg8[%c0_139, %c0_140] : memref<1x1xf32, #tpu.memory_space<vmem>>, vector<1x1xf32>
    %cst_141 = arith.constant dense<0.000000e+00> : vector<1x2xf32>
    %183 = tpu.matmul %181, %180, %cst_141 {dimension_numbers = #tpu.dot_dimension_numbers<[1], [0], [0], [1], [0, 0, 1, 1], [], []>} : vector<1x32xf32>, vector<32x2xf32>, vector<1x2xf32> -> vector<1x2xf32>
    %184 = vector.broadcast %182 : vector<1x1xf32> to vector<1x2xf32>
    %185 = arith.addf %183, %184 : vector<1x2xf32>
    %cst_142 = arith.constant 0.00999999977 : f32
    %186 = vector.broadcast %cst_142 : f32 to vector<1x2xf32>
    %187 = arith.mulf %186, %185 : vector<1x2xf32>
    %188 = arith.maximumf %185, %187 : vector<1x2xf32>
    %c3_143 = arith.constant 3 : index
    %c0_144 = arith.constant 0 : index
    %c0_145 = arith.constant 0 : index
    %189 = vector.load %arg1[%c3_143, %c0_144, %c0_145] : memref<8x20x2xf32, #tpu.memory_space<vmem>>, vector<1x20x2xf32>
    %190 = vector.shape_cast %189 : vector<1x20x2xf32> to vector<20x2xf32>
    %c0_146 = arith.constant 0 : index
    %c0_147 = arith.constant 0 : index
    %191 = vector.load %arg3[%c0_146, %c0_147] : memref<32x20xf32, #tpu.memory_space<vmem>>, vector<32x20xf32>
    %c0_148 = arith.constant 0 : index
    %c0_149 = arith.constant 0 : index
    %192 = vector.load %arg4[%c0_148, %c0_149] : memref<32x1xf32, #tpu.memory_space<vmem>>, vector<32x1xf32>
    %cst_150 = arith.constant dense<0.000000e+00> : vector<32x2xf32>
    %193 = tpu.matmul %191, %190, %cst_150 {dimension_numbers = #tpu.dot_dimension_numbers<[1], [0], [0], [1], [0, 0, 1, 1], [], []>} : vector<32x20xf32>, vector<20x2xf32>, vector<32x2xf32> -> vector<32x2xf32>
    %194 = vector.broadcast %192 : vector<32x1xf32> to vector<32x2xf32>
    %195 = arith.addf %193, %194 : vector<32x2xf32>
    %cst_151 = arith.constant 0.00999999977 : f32
    %196 = vector.broadcast %cst_151 : f32 to vector<32x2xf32>
    %197 = arith.mulf %196, %195 : vector<32x2xf32>
    %198 = arith.maximumf %195, %197 : vector<32x2xf32>
    %c0_152 = arith.constant 0 : index
    %c0_153 = arith.constant 0 : index
    %199 = vector.load %arg5[%c0_152, %c0_153] : memref<32x32xf32, #tpu.memory_space<vmem>>, vector<32x32xf32>
    %c0_154 = arith.constant 0 : index
    %c0_155 = arith.constant 0 : index
    %200 = vector.load %arg6[%c0_154, %c0_155] : memref<32x1xf32, #tpu.memory_space<vmem>>, vector<32x1xf32>
    %cst_156 = arith.constant dense<0.000000e+00> : vector<32x2xf32>
    %201 = tpu.matmul %199, %198, %cst_156 {dimension_numbers = #tpu.dot_dimension_numbers<[1], [0], [0], [1], [0, 0, 1, 1], [], []>} : vector<32x32xf32>, vector<32x2xf32>, vector<32x2xf32> -> vector<32x2xf32>
    %202 = vector.broadcast %200 : vector<32x1xf32> to vector<32x2xf32>
    %203 = arith.addf %201, %202 : vector<32x2xf32>
    %cst_157 = arith.constant 0.00999999977 : f32
    %204 = vector.broadcast %cst_157 : f32 to vector<32x2xf32>
    %205 = arith.mulf %204, %203 : vector<32x2xf32>
    %206 = arith.maximumf %203, %205 : vector<32x2xf32>
    %c0_158 = arith.constant 0 : index
    %c0_159 = arith.constant 0 : index
    %207 = vector.load %arg7[%c0_158, %c0_159] : memref<1x32xf32, #tpu.memory_space<vmem>>, vector<1x32xf32>
    %c0_160 = arith.constant 0 : index
    %c0_161 = arith.constant 0 : index
    %208 = vector.load %arg8[%c0_160, %c0_161] : memref<1x1xf32, #tpu.memory_space<vmem>>, vector<1x1xf32>
    %cst_162 = arith.constant dense<0.000000e+00> : vector<1x2xf32>
    %209 = tpu.matmul %207, %206, %cst_162 {dimension_numbers = #tpu.dot_dimension_numbers<[1], [0], [0], [1], [0, 0, 1, 1], [], []>} : vector<1x32xf32>, vector<32x2xf32>, vector<1x2xf32> -> vector<1x2xf32>
    %210 = vector.broadcast %208 : vector<1x1xf32> to vector<1x2xf32>
    %211 = arith.addf %209, %210 : vector<1x2xf32>
    %cst_163 = arith.constant 0.00999999977 : f32
    %212 = vector.broadcast %cst_163 : f32 to vector<1x2xf32>
    %213 = arith.mulf %212, %211 : vector<1x2xf32>
    %214 = arith.maximumf %211, %213 : vector<1x2xf32>
    %215 = arith.subf %188, %214 : vector<1x2xf32>
    %216 = arith.addf %162, %215 : vector<1x2xf32>
    %c4 = arith.constant 4 : index
    %c0_164 = arith.constant 0 : index
    %c0_165 = arith.constant 0 : index
    %217 = vector.load %arg2[%c4, %c0_164, %c0_165] : memref<8x20x2xf32, #tpu.memory_space<vmem>>, vector<1x20x2xf32>
    %218 = vector.shape_cast %217 : vector<1x20x2xf32> to vector<20x2xf32>
    %c0_166 = arith.constant 0 : index
    %c0_167 = arith.constant 0 : index
    %219 = vector.load %arg3[%c0_166, %c0_167] : memref<32x20xf32, #tpu.memory_space<vmem>>, vector<32x20xf32>
    %c0_168 = arith.constant 0 : index
    %c0_169 = arith.constant 0 : index
    %220 = vector.load %arg4[%c0_168, %c0_169] : memref<32x1xf32, #tpu.memory_space<vmem>>, vector<32x1xf32>
    %cst_170 = arith.constant dense<0.000000e+00> : vector<32x2xf32>
    %221 = tpu.matmul %219, %218, %cst_170 {dimension_numbers = #tpu.dot_dimension_numbers<[1], [0], [0], [1], [0, 0, 1, 1], [], []>} : vector<32x20xf32>, vector<20x2xf32>, vector<32x2xf32> -> vector<32x2xf32>
    %222 = vector.broadcast %220 : vector<32x1xf32> to vector<32x2xf32>
    %223 = arith.addf %221, %222 : vector<32x2xf32>
    %cst_171 = arith.constant 0.00999999977 : f32
    %224 = vector.broadcast %cst_171 : f32 to vector<32x2xf32>
    %225 = arith.mulf %224, %223 : vector<32x2xf32>
    %226 = arith.maximumf %223, %225 : vector<32x2xf32>
    %c0_172 = arith.constant 0 : index
    %c0_173 = arith.constant 0 : index
    %227 = vector.load %arg5[%c0_172, %c0_173] : memref<32x32xf32, #tpu.memory_space<vmem>>, vector<32x32xf32>
    %c0_174 = arith.constant 0 : index
    %c0_175 = arith.constant 0 : index
    %228 = vector.load %arg6[%c0_174, %c0_175] : memref<32x1xf32, #tpu.memory_space<vmem>>, vector<32x1xf32>
    %cst_176 = arith.constant dense<0.000000e+00> : vector<32x2xf32>
    %229 = tpu.matmul %227, %226, %cst_176 {dimension_numbers = #tpu.dot_dimension_numbers<[1], [0], [0], [1], [0, 0, 1, 1], [], []>} : vector<32x32xf32>, vector<32x2xf32>, vector<32x2xf32> -> vector<32x2xf32>
    %230 = vector.broadcast %228 : vector<32x1xf32> to vector<32x2xf32>
    %231 = arith.addf %229, %230 : vector<32x2xf32>
    %cst_177 = arith.constant 0.00999999977 : f32
    %232 = vector.broadcast %cst_177 : f32 to vector<32x2xf32>
    %233 = arith.mulf %232, %231 : vector<32x2xf32>
    %234 = arith.maximumf %231, %233 : vector<32x2xf32>
    %c0_178 = arith.constant 0 : index
    %c0_179 = arith.constant 0 : index
    %235 = vector.load %arg7[%c0_178, %c0_179] : memref<1x32xf32, #tpu.memory_space<vmem>>, vector<1x32xf32>
    %c0_180 = arith.constant 0 : index
    %c0_181 = arith.constant 0 : index
    %236 = vector.load %arg8[%c0_180, %c0_181] : memref<1x1xf32, #tpu.memory_space<vmem>>, vector<1x1xf32>
    %cst_182 = arith.constant dense<0.000000e+00> : vector<1x2xf32>
    %237 = tpu.matmul %235, %234, %cst_182 {dimension_numbers = #tpu.dot_dimension_numbers<[1], [0], [0], [1], [0, 0, 1, 1], [], []>} : vector<1x32xf32>, vector<32x2xf32>, vector<1x2xf32> -> vector<1x2xf32>
    %238 = vector.broadcast %236 : vector<1x1xf32> to vector<1x2xf32>
    %239 = arith.addf %237, %238 : vector<1x2xf32>
    %cst_183 = arith.constant 0.00999999977 : f32
    %240 = vector.broadcast %cst_183 : f32 to vector<1x2xf32>
    %241 = arith.mulf %240, %239 : vector<1x2xf32>
    %242 = arith.maximumf %239, %241 : vector<1x2xf32>
    %c4_184 = arith.constant 4 : index
    %c0_185 = arith.constant 0 : index
    %c0_186 = arith.constant 0 : index
    %243 = vector.load %arg1[%c4_184, %c0_185, %c0_186] : memref<8x20x2xf32, #tpu.memory_space<vmem>>, vector<1x20x2xf32>
    %244 = vector.shape_cast %243 : vector<1x20x2xf32> to vector<20x2xf32>
    %c0_187 = arith.constant 0 : index
    %c0_188 = arith.constant 0 : index
    %245 = vector.load %arg3[%c0_187, %c0_188] : memref<32x20xf32, #tpu.memory_space<vmem>>, vector<32x20xf32>
    %c0_189 = arith.constant 0 : index
    %c0_190 = arith.constant 0 : index
    %246 = vector.load %arg4[%c0_189, %c0_190] : memref<32x1xf32, #tpu.memory_space<vmem>>, vector<32x1xf32>
    %cst_191 = arith.constant dense<0.000000e+00> : vector<32x2xf32>
    %247 = tpu.matmul %245, %244, %cst_191 {dimension_numbers = #tpu.dot_dimension_numbers<[1], [0], [0], [1], [0, 0, 1, 1], [], []>} : vector<32x20xf32>, vector<20x2xf32>, vector<32x2xf32> -> vector<32x2xf32>
    %248 = vector.broadcast %246 : vector<32x1xf32> to vector<32x2xf32>
    %249 = arith.addf %247, %248 : vector<32x2xf32>
    %cst_192 = arith.constant 0.00999999977 : f32
    %250 = vector.broadcast %cst_192 : f32 to vector<32x2xf32>
    %251 = arith.mulf %250, %249 : vector<32x2xf32>
    %252 = arith.maximumf %249, %251 : vector<32x2xf32>
    %c0_193 = arith.constant 0 : index
    %c0_194 = arith.constant 0 : index
    %253 = vector.load %arg5[%c0_193, %c0_194] : memref<32x32xf32, #tpu.memory_space<vmem>>, vector<32x32xf32>
    %c0_195 = arith.constant 0 : index
    %c0_196 = arith.constant 0 : index
    %254 = vector.load %arg6[%c0_195, %c0_196] : memref<32x1xf32, #tpu.memory_space<vmem>>, vector<32x1xf32>
    %cst_197 = arith.constant dense<0.000000e+00> : vector<32x2xf32>
    %255 = tpu.matmul %253, %252, %cst_197 {dimension_numbers = #tpu.dot_dimension_numbers<[1], [0], [0], [1], [0, 0, 1, 1], [], []>} : vector<32x32xf32>, vector<32x2xf32>, vector<32x2xf32> -> vector<32x2xf32>
    %256 = vector.broadcast %254 : vector<32x1xf32> to vector<32x2xf32>
    %257 = arith.addf %255, %256 : vector<32x2xf32>
    %cst_198 = arith.constant 0.00999999977 : f32
    %258 = vector.broadcast %cst_198 : f32 to vector<32x2xf32>
    %259 = arith.mulf %258, %257 : vector<32x2xf32>
    %260 = arith.maximumf %257, %259 : vector<32x2xf32>
    %c0_199 = arith.constant 0 : index
    %c0_200 = arith.constant 0 : index
    %261 = vector.load %arg7[%c0_199, %c0_200] : memref<1x32xf32, #tpu.memory_space<vmem>>, vector<1x32xf32>
    %c0_201 = arith.constant 0 : index
    %c0_202 = arith.constant 0 : index
    %262 = vector.load %arg8[%c0_201, %c0_202] : memref<1x1xf32, #tpu.memory_space<vmem>>, vector<1x1xf32>
    %cst_203 = arith.constant dense<0.000000e+00> : vector<1x2xf32>
    %263 = tpu.matmul %261, %260, %cst_203 {dimension_numbers = #tpu.dot_dimension_numbers<[1], [0], [0], [1], [0, 0, 1, 1], [], []>} : vector<1x32xf32>, vector<32x2xf32>, vector<1x2xf32> -> vector<1x2xf32>
    %264 = vector.broadcast %262 : vector<1x1xf32> to vector<1x2xf32>
    %265 = arith.addf %263, %264 : vector<1x2xf32>
    %cst_204 = arith.constant 0.00999999977 : f32
    %266 = vector.broadcast %cst_204 : f32 to vector<1x2xf32>
    %267 = arith.mulf %266, %265 : vector<1x2xf32>
    %268 = arith.maximumf %265, %267 : vector<1x2xf32>
    %269 = arith.subf %242, %268 : vector<1x2xf32>
    %270 = arith.addf %216, %269 : vector<1x2xf32>
    %c5 = arith.constant 5 : index
    %c0_205 = arith.constant 0 : index
    %c0_206 = arith.constant 0 : index
    %271 = vector.load %arg2[%c5, %c0_205, %c0_206] : memref<8x20x2xf32, #tpu.memory_space<vmem>>, vector<1x20x2xf32>
    %272 = vector.shape_cast %271 : vector<1x20x2xf32> to vector<20x2xf32>
    %c0_207 = arith.constant 0 : index
    %c0_208 = arith.constant 0 : index
    %273 = vector.load %arg3[%c0_207, %c0_208] : memref<32x20xf32, #tpu.memory_space<vmem>>, vector<32x20xf32>
    %c0_209 = arith.constant 0 : index
    %c0_210 = arith.constant 0 : index
    %274 = vector.load %arg4[%c0_209, %c0_210] : memref<32x1xf32, #tpu.memory_space<vmem>>, vector<32x1xf32>
    %cst_211 = arith.constant dense<0.000000e+00> : vector<32x2xf32>
    %275 = tpu.matmul %273, %272, %cst_211 {dimension_numbers = #tpu.dot_dimension_numbers<[1], [0], [0], [1], [0, 0, 1, 1], [], []>} : vector<32x20xf32>, vector<20x2xf32>, vector<32x2xf32> -> vector<32x2xf32>
    %276 = vector.broadcast %274 : vector<32x1xf32> to vector<32x2xf32>
    %277 = arith.addf %275, %276 : vector<32x2xf32>
    %cst_212 = arith.constant 0.00999999977 : f32
    %278 = vector.broadcast %cst_212 : f32 to vector<32x2xf32>
    %279 = arith.mulf %278, %277 : vector<32x2xf32>
    %280 = arith.maximumf %277, %279 : vector<32x2xf32>
    %c0_213 = arith.constant 0 : index
    %c0_214 = arith.constant 0 : index
    %281 = vector.load %arg5[%c0_213, %c0_214] : memref<32x32xf32, #tpu.memory_space<vmem>>, vector<32x32xf32>
    %c0_215 = arith.constant 0 : index
    %c0_216 = arith.constant 0 : index
    %282 = vector.load %arg6[%c0_215, %c0_216] : memref<32x1xf32, #tpu.memory_space<vmem>>, vector<32x1xf32>
    %cst_217 = arith.constant dense<0.000000e+00> : vector<32x2xf32>
    %283 = tpu.matmul %281, %280, %cst_217 {dimension_numbers = #tpu.dot_dimension_numbers<[1], [0], [0], [1], [0, 0, 1, 1], [], []>} : vector<32x32xf32>, vector<32x2xf32>, vector<32x2xf32> -> vector<32x2xf32>
    %284 = vector.broadcast %282 : vector<32x1xf32> to vector<32x2xf32>
    %285 = arith.addf %283, %284 : vector<32x2xf32>
    %cst_218 = arith.constant 0.00999999977 : f32
    %286 = vector.broadcast %cst_218 : f32 to vector<32x2xf32>
    %287 = arith.mulf %286, %285 : vector<32x2xf32>
    %288 = arith.maximumf %285, %287 : vector<32x2xf32>
    %c0_219 = arith.constant 0 : index
    %c0_220 = arith.constant 0 : index
    %289 = vector.load %arg7[%c0_219, %c0_220] : memref<1x32xf32, #tpu.memory_space<vmem>>, vector<1x32xf32>
    %c0_221 = arith.constant 0 : index
    %c0_222 = arith.constant 0 : index
    %290 = vector.load %arg8[%c0_221, %c0_222] : memref<1x1xf32, #tpu.memory_space<vmem>>, vector<1x1xf32>
    %cst_223 = arith.constant dense<0.000000e+00> : vector<1x2xf32>
    %291 = tpu.matmul %289, %288, %cst_223 {dimension_numbers = #tpu.dot_dimension_numbers<[1], [0], [0], [1], [0, 0, 1, 1], [], []>} : vector<1x32xf32>, vector<32x2xf32>, vector<1x2xf32> -> vector<1x2xf32>
    %292 = vector.broadcast %290 : vector<1x1xf32> to vector<1x2xf32>
    %293 = arith.addf %291, %292 : vector<1x2xf32>
    %cst_224 = arith.constant 0.00999999977 : f32
    %294 = vector.broadcast %cst_224 : f32 to vector<1x2xf32>
    %295 = arith.mulf %294, %293 : vector<1x2xf32>
    %296 = arith.maximumf %293, %295 : vector<1x2xf32>
    %c5_225 = arith.constant 5 : index
    %c0_226 = arith.constant 0 : index
    %c0_227 = arith.constant 0 : index
    %297 = vector.load %arg1[%c5_225, %c0_226, %c0_227] : memref<8x20x2xf32, #tpu.memory_space<vmem>>, vector<1x20x2xf32>
    %298 = vector.shape_cast %297 : vector<1x20x2xf32> to vector<20x2xf32>
    %c0_228 = arith.constant 0 : index
    %c0_229 = arith.constant 0 : index
    %299 = vector.load %arg3[%c0_228, %c0_229] : memref<32x20xf32, #tpu.memory_space<vmem>>, vector<32x20xf32>
    %c0_230 = arith.constant 0 : index
    %c0_231 = arith.constant 0 : index
    %300 = vector.load %arg4[%c0_230, %c0_231] : memref<32x1xf32, #tpu.memory_space<vmem>>, vector<32x1xf32>
    %cst_232 = arith.constant dense<0.000000e+00> : vector<32x2xf32>
    %301 = tpu.matmul %299, %298, %cst_232 {dimension_numbers = #tpu.dot_dimension_numbers<[1], [0], [0], [1], [0, 0, 1, 1], [], []>} : vector<32x20xf32>, vector<20x2xf32>, vector<32x2xf32> -> vector<32x2xf32>
    %302 = vector.broadcast %300 : vector<32x1xf32> to vector<32x2xf32>
    %303 = arith.addf %301, %302 : vector<32x2xf32>
    %cst_233 = arith.constant 0.00999999977 : f32
    %304 = vector.broadcast %cst_233 : f32 to vector<32x2xf32>
    %305 = arith.mulf %304, %303 : vector<32x2xf32>
    %306 = arith.maximumf %303, %305 : vector<32x2xf32>
    %c0_234 = arith.constant 0 : index
    %c0_235 = arith.constant 0 : index
    %307 = vector.load %arg5[%c0_234, %c0_235] : memref<32x32xf32, #tpu.memory_space<vmem>>, vector<32x32xf32>
    %c0_236 = arith.constant 0 : index
    %c0_237 = arith.constant 0 : index
    %308 = vector.load %arg6[%c0_236, %c0_237] : memref<32x1xf32, #tpu.memory_space<vmem>>, vector<32x1xf32>
    %cst_238 = arith.constant dense<0.000000e+00> : vector<32x2xf32>
    %309 = tpu.matmul %307, %306, %cst_238 {dimension_numbers = #tpu.dot_dimension_numbers<[1], [0], [0], [1], [0, 0, 1, 1], [], []>} : vector<32x32xf32>, vector<32x2xf32>, vector<32x2xf32> -> vector<32x2xf32>
    %310 = vector.broadcast %308 : vector<32x1xf32> to vector<32x2xf32>
    %311 = arith.addf %309, %310 : vector<32x2xf32>
    %cst_239 = arith.constant 0.00999999977 : f32
    %312 = vector.broadcast %cst_239 : f32 to vector<32x2xf32>
    %313 = arith.mulf %312, %311 : vector<32x2xf32>
    %314 = arith.maximumf %311, %313 : vector<32x2xf32>
    %c0_240 = arith.constant 0 : index
    %c0_241 = arith.constant 0 : index
    %315 = vector.load %arg7[%c0_240, %c0_241] : memref<1x32xf32, #tpu.memory_space<vmem>>, vector<1x32xf32>
    %c0_242 = arith.constant 0 : index
    %c0_243 = arith.constant 0 : index
    %316 = vector.load %arg8[%c0_242, %c0_243] : memref<1x1xf32, #tpu.memory_space<vmem>>, vector<1x1xf32>
    %cst_244 = arith.constant dense<0.000000e+00> : vector<1x2xf32>
    %317 = tpu.matmul %315, %314, %cst_244 {dimension_numbers = #tpu.dot_dimension_numbers<[1], [0], [0], [1], [0, 0, 1, 1], [], []>} : vector<1x32xf32>, vector<32x2xf32>, vector<1x2xf32> -> vector<1x2xf32>
    %318 = vector.broadcast %316 : vector<1x1xf32> to vector<1x2xf32>
    %319 = arith.addf %317, %318 : vector<1x2xf32>
    %cst_245 = arith.constant 0.00999999977 : f32
    %320 = vector.broadcast %cst_245 : f32 to vector<1x2xf32>
    %321 = arith.mulf %320, %319 : vector<1x2xf32>
    %322 = arith.maximumf %319, %321 : vector<1x2xf32>
    %323 = arith.subf %296, %322 : vector<1x2xf32>
    %324 = arith.addf %270, %323 : vector<1x2xf32>
    %c6 = arith.constant 6 : index
    %c0_246 = arith.constant 0 : index
    %c0_247 = arith.constant 0 : index
    %325 = vector.load %arg2[%c6, %c0_246, %c0_247] : memref<8x20x2xf32, #tpu.memory_space<vmem>>, vector<1x20x2xf32>
    %326 = vector.shape_cast %325 : vector<1x20x2xf32> to vector<20x2xf32>
    %c0_248 = arith.constant 0 : index
    %c0_249 = arith.constant 0 : index
    %327 = vector.load %arg3[%c0_248, %c0_249] : memref<32x20xf32, #tpu.memory_space<vmem>>, vector<32x20xf32>
    %c0_250 = arith.constant 0 : index
    %c0_251 = arith.constant 0 : index
    %328 = vector.load %arg4[%c0_250, %c0_251] : memref<32x1xf32, #tpu.memory_space<vmem>>, vector<32x1xf32>
    %cst_252 = arith.constant dense<0.000000e+00> : vector<32x2xf32>
    %329 = tpu.matmul %327, %326, %cst_252 {dimension_numbers = #tpu.dot_dimension_numbers<[1], [0], [0], [1], [0, 0, 1, 1], [], []>} : vector<32x20xf32>, vector<20x2xf32>, vector<32x2xf32> -> vector<32x2xf32>
    %330 = vector.broadcast %328 : vector<32x1xf32> to vector<32x2xf32>
    %331 = arith.addf %329, %330 : vector<32x2xf32>
    %cst_253 = arith.constant 0.00999999977 : f32
    %332 = vector.broadcast %cst_253 : f32 to vector<32x2xf32>
    %333 = arith.mulf %332, %331 : vector<32x2xf32>
    %334 = arith.maximumf %331, %333 : vector<32x2xf32>
    %c0_254 = arith.constant 0 : index
    %c0_255 = arith.constant 0 : index
    %335 = vector.load %arg5[%c0_254, %c0_255] : memref<32x32xf32, #tpu.memory_space<vmem>>, vector<32x32xf32>
    %c0_256 = arith.constant 0 : index
    %c0_257 = arith.constant 0 : index
    %336 = vector.load %arg6[%c0_256, %c0_257] : memref<32x1xf32, #tpu.memory_space<vmem>>, vector<32x1xf32>
    %cst_258 = arith.constant dense<0.000000e+00> : vector<32x2xf32>
    %337 = tpu.matmul %335, %334, %cst_258 {dimension_numbers = #tpu.dot_dimension_numbers<[1], [0], [0], [1], [0, 0, 1, 1], [], []>} : vector<32x32xf32>, vector<32x2xf32>, vector<32x2xf32> -> vector<32x2xf32>
    %338 = vector.broadcast %336 : vector<32x1xf32> to vector<32x2xf32>
    %339 = arith.addf %337, %338 : vector<32x2xf32>
    %cst_259 = arith.constant 0.00999999977 : f32
    %340 = vector.broadcast %cst_259 : f32 to vector<32x2xf32>
    %341 = arith.mulf %340, %339 : vector<32x2xf32>
    %342 = arith.maximumf %339, %341 : vector<32x2xf32>
    %c0_260 = arith.constant 0 : index
    %c0_261 = arith.constant 0 : index
    %343 = vector.load %arg7[%c0_260, %c0_261] : memref<1x32xf32, #tpu.memory_space<vmem>>, vector<1x32xf32>
    %c0_262 = arith.constant 0 : index
    %c0_263 = arith.constant 0 : index
    %344 = vector.load %arg8[%c0_262, %c0_263] : memref<1x1xf32, #tpu.memory_space<vmem>>, vector<1x1xf32>
    %cst_264 = arith.constant dense<0.000000e+00> : vector<1x2xf32>
    %345 = tpu.matmul %343, %342, %cst_264 {dimension_numbers = #tpu.dot_dimension_numbers<[1], [0], [0], [1], [0, 0, 1, 1], [], []>} : vector<1x32xf32>, vector<32x2xf32>, vector<1x2xf32> -> vector<1x2xf32>
    %346 = vector.broadcast %344 : vector<1x1xf32> to vector<1x2xf32>
    %347 = arith.addf %345, %346 : vector<1x2xf32>
    %cst_265 = arith.constant 0.00999999977 : f32
    %348 = vector.broadcast %cst_265 : f32 to vector<1x2xf32>
    %349 = arith.mulf %348, %347 : vector<1x2xf32>
    %350 = arith.maximumf %347, %349 : vector<1x2xf32>
    %c6_266 = arith.constant 6 : index
    %c0_267 = arith.constant 0 : index
    %c0_268 = arith.constant 0 : index
    %351 = vector.load %arg1[%c6_266, %c0_267, %c0_268] : memref<8x20x2xf32, #tpu.memory_space<vmem>>, vector<1x20x2xf32>
    %352 = vector.shape_cast %351 : vector<1x20x2xf32> to vector<20x2xf32>
    %c0_269 = arith.constant 0 : index
    %c0_270 = arith.constant 0 : index
    %353 = vector.load %arg3[%c0_269, %c0_270] : memref<32x20xf32, #tpu.memory_space<vmem>>, vector<32x20xf32>
    %c0_271 = arith.constant 0 : index
    %c0_272 = arith.constant 0 : index
    %354 = vector.load %arg4[%c0_271, %c0_272] : memref<32x1xf32, #tpu.memory_space<vmem>>, vector<32x1xf32>
    %cst_273 = arith.constant dense<0.000000e+00> : vector<32x2xf32>
    %355 = tpu.matmul %353, %352, %cst_273 {dimension_numbers = #tpu.dot_dimension_numbers<[1], [0], [0], [1], [0, 0, 1, 1], [], []>} : vector<32x20xf32>, vector<20x2xf32>, vector<32x2xf32> -> vector<32x2xf32>
    %356 = vector.broadcast %354 : vector<32x1xf32> to vector<32x2xf32>
    %357 = arith.addf %355, %356 : vector<32x2xf32>
    %cst_274 = arith.constant 0.00999999977 : f32
    %358 = vector.broadcast %cst_274 : f32 to vector<32x2xf32>
    %359 = arith.mulf %358, %357 : vector<32x2xf32>
    %360 = arith.maximumf %357, %359 : vector<32x2xf32>
    %c0_275 = arith.constant 0 : index
    %c0_276 = arith.constant 0 : index
    %361 = vector.load %arg5[%c0_275, %c0_276] : memref<32x32xf32, #tpu.memory_space<vmem>>, vector<32x32xf32>
    %c0_277 = arith.constant 0 : index
    %c0_278 = arith.constant 0 : index
    %362 = vector.load %arg6[%c0_277, %c0_278] : memref<32x1xf32, #tpu.memory_space<vmem>>, vector<32x1xf32>
    %cst_279 = arith.constant dense<0.000000e+00> : vector<32x2xf32>
    %363 = tpu.matmul %361, %360, %cst_279 {dimension_numbers = #tpu.dot_dimension_numbers<[1], [0], [0], [1], [0, 0, 1, 1], [], []>} : vector<32x32xf32>, vector<32x2xf32>, vector<32x2xf32> -> vector<32x2xf32>
    %364 = vector.broadcast %362 : vector<32x1xf32> to vector<32x2xf32>
    %365 = arith.addf %363, %364 : vector<32x2xf32>
    %cst_280 = arith.constant 0.00999999977 : f32
    %366 = vector.broadcast %cst_280 : f32 to vector<32x2xf32>
    %367 = arith.mulf %366, %365 : vector<32x2xf32>
    %368 = arith.maximumf %365, %367 : vector<32x2xf32>
    %c0_281 = arith.constant 0 : index
    %c0_282 = arith.constant 0 : index
    %369 = vector.load %arg7[%c0_281, %c0_282] : memref<1x32xf32, #tpu.memory_space<vmem>>, vector<1x32xf32>
    %c0_283 = arith.constant 0 : index
    %c0_284 = arith.constant 0 : index
    %370 = vector.load %arg8[%c0_283, %c0_284] : memref<1x1xf32, #tpu.memory_space<vmem>>, vector<1x1xf32>
    %cst_285 = arith.constant dense<0.000000e+00> : vector<1x2xf32>
    %371 = tpu.matmul %369, %368, %cst_285 {dimension_numbers = #tpu.dot_dimension_numbers<[1], [0], [0], [1], [0, 0, 1, 1], [], []>} : vector<1x32xf32>, vector<32x2xf32>, vector<1x2xf32> -> vector<1x2xf32>
    %372 = vector.broadcast %370 : vector<1x1xf32> to vector<1x2xf32>
    %373 = arith.addf %371, %372 : vector<1x2xf32>
    %cst_286 = arith.constant 0.00999999977 : f32
    %374 = vector.broadcast %cst_286 : f32 to vector<1x2xf32>
    %375 = arith.mulf %374, %373 : vector<1x2xf32>
    %376 = arith.maximumf %373, %375 : vector<1x2xf32>
    %377 = arith.subf %350, %376 : vector<1x2xf32>
    %378 = arith.addf %324, %377 : vector<1x2xf32>
    %c7 = arith.constant 7 : index
    %c0_287 = arith.constant 0 : index
    %c0_288 = arith.constant 0 : index
    %379 = vector.load %arg2[%c7, %c0_287, %c0_288] : memref<8x20x2xf32, #tpu.memory_space<vmem>>, vector<1x20x2xf32>
    %380 = vector.shape_cast %379 : vector<1x20x2xf32> to vector<20x2xf32>
    %c0_289 = arith.constant 0 : index
    %c0_290 = arith.constant 0 : index
    %381 = vector.load %arg3[%c0_289, %c0_290] : memref<32x20xf32, #tpu.memory_space<vmem>>, vector<32x20xf32>
    %c0_291 = arith.constant 0 : index
    %c0_292 = arith.constant 0 : index
    %382 = vector.load %arg4[%c0_291, %c0_292] : memref<32x1xf32, #tpu.memory_space<vmem>>, vector<32x1xf32>
    %cst_293 = arith.constant dense<0.000000e+00> : vector<32x2xf32>
    %383 = tpu.matmul %381, %380, %cst_293 {dimension_numbers = #tpu.dot_dimension_numbers<[1], [0], [0], [1], [0, 0, 1, 1], [], []>} : vector<32x20xf32>, vector<20x2xf32>, vector<32x2xf32> -> vector<32x2xf32>
    %384 = vector.broadcast %382 : vector<32x1xf32> to vector<32x2xf32>
    %385 = arith.addf %383, %384 : vector<32x2xf32>
    %cst_294 = arith.constant 0.00999999977 : f32
    %386 = vector.broadcast %cst_294 : f32 to vector<32x2xf32>
    %387 = arith.mulf %386, %385 : vector<32x2xf32>
    %388 = arith.maximumf %385, %387 : vector<32x2xf32>
    %c0_295 = arith.constant 0 : index
    %c0_296 = arith.constant 0 : index
    %389 = vector.load %arg5[%c0_295, %c0_296] : memref<32x32xf32, #tpu.memory_space<vmem>>, vector<32x32xf32>
    %c0_297 = arith.constant 0 : index
    %c0_298 = arith.constant 0 : index
    %390 = vector.load %arg6[%c0_297, %c0_298] : memref<32x1xf32, #tpu.memory_space<vmem>>, vector<32x1xf32>
    %cst_299 = arith.constant dense<0.000000e+00> : vector<32x2xf32>
    %391 = tpu.matmul %389, %388, %cst_299 {dimension_numbers = #tpu.dot_dimension_numbers<[1], [0], [0], [1], [0, 0, 1, 1], [], []>} : vector<32x32xf32>, vector<32x2xf32>, vector<32x2xf32> -> vector<32x2xf32>
    %392 = vector.broadcast %390 : vector<32x1xf32> to vector<32x2xf32>
    %393 = arith.addf %391, %392 : vector<32x2xf32>
    %cst_300 = arith.constant 0.00999999977 : f32
    %394 = vector.broadcast %cst_300 : f32 to vector<32x2xf32>
    %395 = arith.mulf %394, %393 : vector<32x2xf32>
    %396 = arith.maximumf %393, %395 : vector<32x2xf32>
    %c0_301 = arith.constant 0 : index
    %c0_302 = arith.constant 0 : index
    %397 = vector.load %arg7[%c0_301, %c0_302] : memref<1x32xf32, #tpu.memory_space<vmem>>, vector<1x32xf32>
    %c0_303 = arith.constant 0 : index
    %c0_304 = arith.constant 0 : index
    %398 = vector.load %arg8[%c0_303, %c0_304] : memref<1x1xf32, #tpu.memory_space<vmem>>, vector<1x1xf32>
    %cst_305 = arith.constant dense<0.000000e+00> : vector<1x2xf32>
    %399 = tpu.matmul %397, %396, %cst_305 {dimension_numbers = #tpu.dot_dimension_numbers<[1], [0], [0], [1], [0, 0, 1, 1], [], []>} : vector<1x32xf32>, vector<32x2xf32>, vector<1x2xf32> -> vector<1x2xf32>
    %400 = vector.broadcast %398 : vector<1x1xf32> to vector<1x2xf32>
    %401 = arith.addf %399, %400 : vector<1x2xf32>
    %cst_306 = arith.constant 0.00999999977 : f32
    %402 = vector.broadcast %cst_306 : f32 to vector<1x2xf32>
    %403 = arith.mulf %402, %401 : vector<1x2xf32>
    %404 = arith.maximumf %401, %403 : vector<1x2xf32>
    %c7_307 = arith.constant 7 : index
    %c0_308 = arith.constant 0 : index
    %c0_309 = arith.constant 0 : index
    %405 = vector.load %arg1[%c7_307, %c0_308, %c0_309] : memref<8x20x2xf32, #tpu.memory_space<vmem>>, vector<1x20x2xf32>
    %406 = vector.shape_cast %405 : vector<1x20x2xf32> to vector<20x2xf32>
    %c0_310 = arith.constant 0 : index
    %c0_311 = arith.constant 0 : index
    %407 = vector.load %arg3[%c0_310, %c0_311] : memref<32x20xf32, #tpu.memory_space<vmem>>, vector<32x20xf32>
    %c0_312 = arith.constant 0 : index
    %c0_313 = arith.constant 0 : index
    %408 = vector.load %arg4[%c0_312, %c0_313] : memref<32x1xf32, #tpu.memory_space<vmem>>, vector<32x1xf32>
    %cst_314 = arith.constant dense<0.000000e+00> : vector<32x2xf32>
    %409 = tpu.matmul %407, %406, %cst_314 {dimension_numbers = #tpu.dot_dimension_numbers<[1], [0], [0], [1], [0, 0, 1, 1], [], []>} : vector<32x20xf32>, vector<20x2xf32>, vector<32x2xf32> -> vector<32x2xf32>
    %410 = vector.broadcast %408 : vector<32x1xf32> to vector<32x2xf32>
    %411 = arith.addf %409, %410 : vector<32x2xf32>
    %cst_315 = arith.constant 0.00999999977 : f32
    %412 = vector.broadcast %cst_315 : f32 to vector<32x2xf32>
    %413 = arith.mulf %412, %411 : vector<32x2xf32>
    %414 = arith.maximumf %411, %413 : vector<32x2xf32>
    %c0_316 = arith.constant 0 : index
    %c0_317 = arith.constant 0 : index
    %415 = vector.load %arg5[%c0_316, %c0_317] : memref<32x32xf32, #tpu.memory_space<vmem>>, vector<32x32xf32>
    %c0_318 = arith.constant 0 : index
    %c0_319 = arith.constant 0 : index
    %416 = vector.load %arg6[%c0_318, %c0_319] : memref<32x1xf32, #tpu.memory_space<vmem>>, vector<32x1xf32>
    %cst_320 = arith.constant dense<0.000000e+00> : vector<32x2xf32>
    %417 = tpu.matmul %415, %414, %cst_320 {dimension_numbers = #tpu.dot_dimension_numbers<[1], [0], [0], [1], [0, 0, 1, 1], [], []>} : vector<32x32xf32>, vector<32x2xf32>, vector<32x2xf32> -> vector<32x2xf32>
    %418 = vector.broadcast %416 : vector<32x1xf32> to vector<32x2xf32>
    %419 = arith.addf %417, %418 : vector<32x2xf32>
    %cst_321 = arith.constant 0.00999999977 : f32
    %420 = vector.broadcast %cst_321 : f32 to vector<32x2xf32>
    %421 = arith.mulf %420, %419 : vector<32x2xf32>
    %422 = arith.maximumf %419, %421 : vector<32x2xf32>
    %c0_322 = arith.constant 0 : index
    %c0_323 = arith.constant 0 : index
    %423 = vector.load %arg7[%c0_322, %c0_323] : memref<1x32xf32, #tpu.memory_space<vmem>>, vector<1x32xf32>
    %c0_324 = arith.constant 0 : index
    %c0_325 = arith.constant 0 : index
    %424 = vector.load %arg8[%c0_324, %c0_325] : memref<1x1xf32, #tpu.memory_space<vmem>>, vector<1x1xf32>
    %cst_326 = arith.constant dense<0.000000e+00> : vector<1x2xf32>
    %425 = tpu.matmul %423, %422, %cst_326 {dimension_numbers = #tpu.dot_dimension_numbers<[1], [0], [0], [1], [0, 0, 1, 1], [], []>} : vector<1x32xf32>, vector<32x2xf32>, vector<1x2xf32> -> vector<1x2xf32>
    %426 = vector.broadcast %424 : vector<1x1xf32> to vector<1x2xf32>
    %427 = arith.addf %425, %426 : vector<1x2xf32>
    %cst_327 = arith.constant 0.00999999977 : f32
    %428 = vector.broadcast %cst_327 : f32 to vector<1x2xf32>
    %429 = arith.mulf %428, %427 : vector<1x2xf32>
    %430 = arith.maximumf %427, %429 : vector<1x2xf32>
    %431 = arith.subf %404, %430 : vector<1x2xf32>
    %432 = arith.addf %378, %431 : vector<1x2xf32>
    %c0_328 = arith.constant 0 : index
    %c0_329 = arith.constant 0 : index
    %433 = vector.load %arg9[%c0_328, %c0_329] : memref<1x1xf32, #tpu.memory_space<vmem>>, vector<1x1xf32>
    %434 = vector.broadcast %433 : vector<1x1xf32> to vector<1x2xf32>
    %435 = arith.mulf %432, %434 : vector<1x2xf32>
    %cst_330 = arith.constant 0.000000e+00 : f32
    %436 = vector.broadcast %cst_330 : f32 to vector<1x2xf32>
    %437 = arith.subf %436, %435 : vector<1x2xf32>
    %438 = math.exp %437 : vector<1x2xf32>
    %cst_331 = arith.constant 1.000000e+00 : f32
    %439 = vector.broadcast %cst_331 : f32 to vector<1x2xf32>
    %440 = arith.addf %439, %438 : vector<1x2xf32>
    %cst_332 = arith.constant 1.000000e+00 : f32
    %441 = vector.broadcast %cst_332 : f32 to vector<1x2xf32>
    %442 = arith.divf %441, %440 : vector<1x2xf32>
    %c0_333 = arith.constant 0 : index
    %c0_334 = arith.constant 0 : index
    %443 = vector.load %arg10[%c0_333, %c0_334] : memref<1x2xf32, #tpu.memory_space<vmem>>, vector<1x2xf32>
    tpu.vector_store %arg10[%c0_333, %c0_334], %442 {strides = array<i32>} : memref<1x2xf32, #tpu.memory_space<vmem>>, vector<1x2xf32>,
    return
  }
  func.func @transform_0(%arg0: i32) -> (i32, i32, i32) {
    %c0_i32 = arith.constant 0 : i32
    %c0_i32_0 = arith.constant 0 : i32
    %c0_i32_1 = arith.constant 0 : i32
    return %c0_i32, %c0_i32_0, %arg0 : i32, i32, i32
  }
  func.func @transform_1(%arg0: i32) -> (i32, i32, i32) {
    %c0_i32 = arith.constant 0 : i32
    %c0_i32_0 = arith.constant 0 : i32
    %c0_i32_1 = arith.constant 0 : i32
    return %c0_i32, %c0_i32_0, %arg0 : i32, i32, i32
  }
  func.func @transform_2(%arg0: i32) -> (i32, i32) {
    %c0_i32 = arith.constant 0 : i32
    %c0_i32_0 = arith.constant 0 : i32
    %c0_i32_1 = arith.constant 0 : i32
    return %c0_i32, %c0_i32_0 : i32, i32
  }
  func.func @transform_3(%arg0: i32) -> (i32, i32) {
    %c0_i32 = arith.constant 0 : i32
    %c0_i32_0 = arith.constant 0 : i32
    %c0_i32_1 = arith.constant 0 : i32
    return %c0_i32, %c0_i32_0 : i32, i32
  }
  func.func @transform_4(%arg0: i32) -> (i32, i32) {
    %c0_i32 = arith.constant 0 : i32
    %c0_i32_0 = arith.constant 0 : i32
    %c0_i32_1 = arith.constant 0 : i32
    return %c0_i32, %c0_i32_0 : i32, i32
  }
  func.func @transform_5(%arg0: i32) -> (i32, i32) {
    %c0_i32 = arith.constant 0 : i32
    %c0_i32_0 = arith.constant 0 : i32
    %c0_i32_1 = arith.constant 0 : i32
    return %c0_i32, %c0_i32_0 : i32, i32
  }
  func.func @transform_6(%arg0: i32) -> (i32, i32) {
    %c0_i32 = arith.constant 0 : i32
    %c0_i32_0 = arith.constant 0 : i32
    %c0_i32_1 = arith.constant 0 : i32
    return %c0_i32, %c0_i32_0 : i32, i32
  }
  func.func @transform_7(%arg0: i32) -> (i32, i32) {
    %c0_i32 = arith.constant 0 : i32
    %c0_i32_0 = arith.constant 0 : i32
    %c0_i32_1 = arith.constant 0 : i32
    return %c0_i32, %c0_i32_0 : i32, i32
  }
  func.func @transform_8(%arg0: i32) -> (i32, i32) {
    %c0_i32 = arith.constant 0 : i32
    %c0_i32_0 = arith.constant 0 : i32
    %c0_i32_1 = arith.constant 0 : i32
    return %c0_i32, %c0_i32_0 : i32, i32
  }
  func.func @transform_9(%arg0: i32) -> (i32, i32) {
    %c0_i32 = arith.constant 0 : i32
    %c0_i32_0 = arith.constant 0 : i32
    return %c0_i32, %arg0 : i32, i32
  }
}

</mosaic_0001>

<llo_original>
// kernel: tpu_custom_call.1
$region0: #{tpu_custom_call.1}
  #allocation0 [shape = 'u32[]', space=smem, size = 0x4, offset = 0x4, fixed_abs, tag = 'smem constant byte address 0x4 - core index']
  #allocation1 [shape = 'u32[144,128]{1,0:T(1,128)}', space=vmem, size = 0x12000, scoped, tag = 'internal scratch']
  #allocation2 [shape = 'f32[1,1]{1,0:T(1,128)S(1)}', space=vmem, size = 0x200, scoped, tag = 'scoped memory for tpu_custom_call.1']
  #allocation3 [shape = 'f32[1,1]{1,0:T(1,128)S(1)}', space=vmem, size = 0x200, scoped, tag = 'scoped memory for tpu_custom_call.1']
  %s0 = inlined_call_operand.vmem [shape: f32[8,20,2], index: 0, kind: input, shape index: {}]
  %s1 = inlined_call_operand.vmem [shape: f32[8,20,2], index: 1, kind: input, shape index: {}]
  %s2 = inlined_call_operand.vmem [shape: f32[32,20], index: 2, kind: input, shape index: {}]
  %s3 = inlined_call_operand.vmem [shape: f32[32,1], index: 3, kind: input, shape index: {}]
  %s4 = inlined_call_operand.vmem [shape: f32[32,32], index: 4, kind: input, shape index: {}]
  %s5 = inlined_call_operand.vmem [shape: f32[32,1], index: 5, kind: input, shape index: {}]
  %s6 = inlined_call_operand.vmem [shape: f32[1,32], index: 6, kind: input, shape index: {}]
  %s7 = inlined_call_operand.<no memory space> [shape: f32[1,1], index: 7, kind: input, shape index: {}]
  %s8 = inlined_call_operand.<no memory space> [shape: f32[1,1], index: 8, kind: input, shape index: {}]
  %s9 = inlined_call_operand.hbm [shape: f32[1,2], index: 9, kind: output, shape index: {}]
  %s10 = sld [smem:[#allocation0]]
  $region46: #{tpu_custom_call.1} parent=0
    _
  %s12 = ssub.s32 1, %s10
  %s13 = scalar_select 0, %s12, %s10
  %v14 = vstv %s7
  %15 = vst [vmem:[#allocation2] sm:$0x1] %v14
  %v16 = vstv %s8
  %17 = vst [vmem:[#allocation3] sm:$0x1] %v16
  $region1: #{tpu_custom_call.1} parent=0
    #allocation4 [shape = 'u8[512]{0}', space=vmem, size = 0x400, scoped, tag = 'output window, operand 0, single buffered']
    #allocation5 [shape = 's32[1]{0}', space=sflag, size = 0x4, scoped, tag = 'scoped memory for tpu_custom_call.1']
    %18 = vsyncpa [#allocation5], 0
    // Predicated region
    $region2: #{tpu_custom_call.1} parent=1 // pred_check
      _
    $region3: #{tpu_custom_call.1} parent=1 // pred_check_branch
      %20 = sbr.rel (0) target = $region5
    $region4: #{tpu_custom_call.1} parent=1 // pred_region
      _
    $region5: #{tpu_custom_call.1} parent=1 // pred_fallthru
      _
    // Predicated region
    $region6: #{tpu_custom_call.1} parent=1 // pred_check
      _
    $region7: #{tpu_custom_call.1} parent=1 // pred_check_branch
      %22 = sbr.rel (0) target = $region9
    $region8: #{tpu_custom_call.1} parent=1 // pred_region
      _
    $region9: #{tpu_custom_call.1} parent=1 // pred_fallthru
      _
    // Predicated region
    $region10: #{tpu_custom_call.1} parent=1 // pred_check
      _
    $region11: #{tpu_custom_call.1} parent=1 // pred_check_branch
      %24 = sbr.rel (0) target = $region13
    $region12: #{tpu_custom_call.1} parent=1 // pred_region
      _
    $region13: #{tpu_custom_call.1} parent=1 // pred_fallthru
      _
    // Predicated region
    $region14: #{tpu_custom_call.1} parent=1 // pred_check
      _
    $region15: #{tpu_custom_call.1} parent=1 // pred_check_branch
      %26 = sbr.rel (0) target = $region17
    $region16: #{tpu_custom_call.1} parent=1 // pred_region
      _
    $region17: #{tpu_custom_call.1} parent=1 // pred_fallthru
      _
    // Predicated region
    $region18: #{tpu_custom_call.1} parent=1 // pred_check
      _
    $region19: #{tpu_custom_call.1} parent=1 // pred_check_branch
      %28 = sbr.rel (0) target = $region21
    $region20: #{tpu_custom_call.1} parent=1 // pred_region
      _
    $region21: #{tpu_custom_call.1} parent=1 // pred_fallthru
      _
    // Predicated region
    $region22: #{tpu_custom_call.1} parent=1 // pred_check
      _
    $region23: #{tpu_custom_call.1} parent=1 // pred_check_branch
      %30 = sbr.rel (0) target = $region25
    $region24: #{tpu_custom_call.1} parent=1 // pred_region
      _
    $region25: #{tpu_custom_call.1} parent=1 // pred_fallthru
      _
    // Predicated region
    $region26: #{tpu_custom_call.1} parent=1 // pred_check
      _
    $region27: #{tpu_custom_call.1} parent=1 // pred_check_branch
      %32 = sbr.rel (0) target = $region29
    $region28: #{tpu_custom_call.1} parent=1 // pred_region
      _
    $region29: #{tpu_custom_call.1} parent=1 // pred_fallthru
      _
    // Predicated region
    $region30: #{tpu_custom_call.1} parent=1 // pred_check
      _
    $region31: #{tpu_custom_call.1} parent=1 // pred_check_branch
      %34 = sbr.rel (0) target = $region33
    $region32: #{tpu_custom_call.1} parent=1 // pred_region
      _
    $region33: #{tpu_custom_call.1} parent=1 // pred_fallthru
      _
    // Predicated region
    $region34: #{tpu_custom_call.1} parent=1 // pred_check
      _
    $region35: #{tpu_custom_call.1} parent=1 // pred_check_branch
      %36 = sbr.rel (0) target = $region37
    $region36: #{tpu_custom_call.1} parent=1 // pred_region
      _
    $region37: #{tpu_custom_call.1} parent=1 // pred_fallthru
      _
    %v37 = vld [vmem:[%s1] sm:$0xff]
    %v38 = vld [vmem:[%s1 + $0x8] sm:$0xff]
    %v39 = vld [vmem:[%s1 + $0x10] sm:$0xf]
    %v40 = vld [vmem:[%s2] sm:$0xff]
    %v41 = vld [vmem:[%s2 + $0x8] sm:$0xff]
    %v42 = vld [vmem:[%s2 + $0x10] sm:$0xff]
    %v43 = vld [vmem:[%s2 + $0x18] sm:$0xff]
    %v44 = vld [vmem:[%s3] sm:$0xff]
    %v45 = vld [vmem:[%s3 + $0x8] sm:$0xff]
    %v46 = vld [vmem:[%s3 + $0x10] sm:$0xff]
    %v47 = vld [vmem:[%s3 + $0x18] sm:$0xff]
    %49 = vset.pattern.permute.xlu0 0
    %50 = vperm.xlu0 %49, %v44
    %v51 = vpop.permute.xlu0 %50
    %54 = vset.pattern.permute.xlu0 0
    %55 = vperm.xlu0 %54, %v45
    %v56 = vpop.permute.xlu0 %55
    %59 = vset.pattern.permute.xlu0 0
    %60 = vperm.xlu0 %59, %v46
    %v61 = vpop.permute.xlu0 %60
    %64 = vset.pattern.permute.xlu0 0
    %65 = vperm.xlu0 %64, %v47
    %v66 = vpop.permute.xlu0 %65
    %vm68 = vcmask 162816
    %v70 = vsel %vm68, %v40, 0
    %v73 = vsel %vm68, %v41, 0
    %v76 = vsel %vm68, %v42, 0
    %v79 = vsel %vm68, %v43, 0
    %vm81 = vcmask 1043456
    %v83 = vsel %vm81, %v39, 0
    %85 = vmatprep.subr.mxu0 0.0
    %86 = vmatpush1.msra.mxu0 %v37
    %87 = vmatprep.subr.mxu0 0.0
    %88 = vmatpush1.msra.mxu0 %v38
    %89 = vmatprep.subr.mxu0 0.0
    %90 = vmatpush1.msra.mxu0 %v83
    %91 = vmatprep.subr.mxu0 0.0
    %92 = vmatpush1.msra.mxu0 0.0
    %93 = vmatprep.subr.mxu0 0.0
    %94 = vmatpush1.msra.mxu0 0.0
    %95 = vmatprep.subr.mxu0 0.0
    %96 = vmatpush1.msra.mxu0 0.0
    %97 = vmatprep.subr.mxu0 0.0
    %98 = vmatpush1.msra.mxu0 0.0
    %99 = vmatprep.subr.mxu0 0.0
    %100 = vmatpush1.msra.mxu0 0.0
    %101 = vmatprep.subr.mxu0 0.0
    %102 = vmatpush1.msra.mxu0 0.0
    %103 = vmatprep.subr.mxu0 0.0
    %104 = vmatpush1.msra.mxu0 0.0
    %105 = vmatprep.subr.mxu0 0.0
    %106 = vmatpush1.msra.mxu0 0.0
    %107 = vmatprep.subr.mxu0 0.0
    %108 = vmatpush1.msra.mxu0 0.0
    %109 = vmatprep.subr.mxu0 0.0
    %110 = vmatpush1.msra.mxu0 0.0
    %111 = vmatprep.subr.mxu0 0.0
    %112 = vmatpush1.msra.mxu0 0.0
    %113 = vmatprep.subr.mxu0 0.0
    %114 = vmatpush1.msra.mxu0 0.0
    %115 = vmatprep.subr.mxu0 0.0
    %116 = vmatpush1.msra.mxu0 0.0
    %117 = vmatprep.subr.mxu0 0.0
    %118 = vmatpush1.msra.mxu0 0.0
    %119 = vmatprep.subr.mxu0 0.0
    %120 = vmatpush1.msra.mxu0 0.0
    %121 = vmatprep.subr.mxu0 0.0
    %122 = vmatpush1.msra.mxu0 0.0
    %123 = vmatprep.subr.mxu0 0.0
    %124 = vmatpush1.msra.mxu0 0.0
    %125 = vmatprep.subr.mxu0 0.0
    %126 = vmatpush1.msra.mxu0 0.0
    %127 = vmatprep.subr.mxu0 0.0
    %128 = vmatpush1.msra.mxu0 0.0
    %129 = vmatprep.subr.mxu0 0.0
    %130 = vmatpush1.msra.mxu0 0.0
    %131 = vmatprep.subr.mxu0 0.0
    %132 = vmatpush1.msra.mxu0 0.0
    %133 = vmatprep.subr.mxu0 0.0
    %134 = vmatpush1.msra.mxu0 0.0
    %135 = vmatprep.subr.mxu0 0.0
    %136 = vmatpush1.msra.mxu0 0.0
    %137 = vmatprep.subr.mxu0 0.0
    %138 = vmatpush1.msra.mxu0 0.0
    %139 = vmatprep.subr.mxu0 0.0
    %140 = vmatpush1.msra.mxu0 0.0
    %141 = vmatprep.subr.mxu0 0.0
    %142 = vmatpush1.msra.mxu0 0.0
    %143 = vmatprep.subr.mxu0 0.0
    %144 = vmatpush1.msra.mxu0 0.0
    %145 = vmatprep.subr.mxu0 0.0
    %146 = vmatpush1.msra.mxu0 0.0
    %147 = vmatprep.subr.mxu0 0.0
    %148 = vmatpush1.msra.mxu0 0.0
    %149 = vmatprep.mubr.f32.mxu0 0.0
    %150 = vmatmul.mubr.f32.gmra.mrb[0].mxu0 %v70
    %v151 = vpop.f32.mrb[0].mxu0
    %v152 = vadd.f32 %v51, %v151
    %v153 = vpop.f32.mrb[0].mxu0
    %154 = vmatprep.mubr.f32.mxu0 0.0
    %155 = vmatmul.mubr.f32.gmra.mrb[0].mxu0 %v73
    %v156 = vpop.f32.mrb[0].mxu0
    %v157 = vadd.f32 %v56, %v156
    %v158 = vpop.f32.mrb[0].mxu0
    %159 = vmatprep.mubr.f32.mxu0 0.0
    %160 = vmatmul.mubr.f32.gmra.mrb[0].mxu0 %v76
    %v161 = vpop.f32.mrb[0].mxu0
    %v162 = vadd.f32 %v61, %v161
    %v163 = vpop.f32.mrb[0].mxu0
    %164 = vmatprep.mubr.f32.mxu0 0.0
    %165 = vmatmul.mubr.f32.gmra.mrb[0].mxu0 %v79
    %v166 = vpop.f32.mrb[0].mxu0
    %v167 = vadd.f32 %v66, %v166
    %v168 = vpop.f32.mrb[0].mxu0
    %169 = vdwg.mxu0
    %v170 = vmul.f32 %v152, 0.01
    %v171 = vmul.f32 %v157, 0.01
    %v172 = vmul.f32 %v162, 0.01
    %v173 = vmul.f32 %v167, 0.01
    %v174 = vmax.f32 %v152, %v170
    %v175 = vmax.f32 %v157, %v171
    %v176 = vmax.f32 %v162, %v172
    %v177 = vmax.f32 %v167, %v173
    %v178 = vld [vmem:[%s4] sm:$0xff]
    %v179 = vld [vmem:[%s4 + $0x8] sm:$0xff]
    %v180 = vld [vmem:[%s4 + $0x10] sm:$0xff]
    %v181 = vld [vmem:[%s4 + $0x18] sm:$0xff]
    %v182 = vld [vmem:[%s5] sm:$0xff]
    %v183 = vld [vmem:[%s5 + $0x8] sm:$0xff]
    %v184 = vld [vmem:[%s5 + $0x10] sm:$0xff]
    %v185 = vld [vmem:[%s5 + $0x18] sm:$0xff]
    %187 = vset.pattern.permute.xlu0 0
    %188 = vperm.xlu0 %187, %v182
    %v189 = vpop.permute.xlu0 %188
    %192 = vset.pattern.permute.xlu0 0
    %193 = vperm.xlu0 %192, %v183
    %v194 = vpop.permute.xlu0 %193
    %197 = vset.pattern.permute.xlu0 0
    %198 = vperm.xlu0 %197, %v184
    %v199 = vpop.permute.xlu0 %198
    %202 = vset.pattern.permute.xlu0 0
    %203 = vperm.xlu0 %202, %v185
    %v204 = vpop.permute.xlu0 %203
    %vm206 = vcmask 261120
    %v208 = vsel %vm206, %v178, 0
    %v211 = vsel %vm206, %v179, 0
    %v214 = vsel %vm206, %v180, 0
    %v217 = vsel %vm206, %v181, 0
    %219 = vmatprep.subr.mxu0 0.0
    %220 = vmatpush1.msra.mxu0 %v174
    %221 = vmatprep.subr.mxu0 0.0
    %222 = vmatpush1.msra.mxu0 %v175
    %223 = vmatprep.subr.mxu0 0.0
    %224 = vmatpush1.msra.mxu0 %v176
    %225 = vmatprep.subr.mxu0 0.0
    %226 = vmatpush1.msra.mxu0 %v177
    %227 = vmatprep.subr.mxu0 0.0
    %228 = vmatpush1.msra.mxu0 0.0
    %229 = vmatprep.subr.mxu0 0.0
    %230 = vmatpush1.msra.mxu0 0.0
    %231 = vmatprep.subr.mxu0 0.0
    %232 = vmatpush1.msra.mxu0 0.0
    %233 = vmatprep.subr.mxu0 0.0
    %234 = vmatpush1.msra.mxu0 0.0
    %235 = vmatprep.subr.mxu0 0.0
    %236 = vmatpush1.msra.mxu0 0.0
    %237 = vmatprep.subr.mxu0 0.0
    %238 = vmatpush1.msra.mxu0 0.0
    %239 = vmatprep.subr.mxu0 0.0
    %240 = vmatpush1.msra.mxu0 0.0
    %241 = vmatprep.subr.mxu0 0.0
    %242 = vmatpush1.msra.mxu0 0.0
    %243 = vmatprep.subr.mxu0 0.0
    %244 = vmatpush1.msra.mxu0 0.0
    %245 = vmatprep.subr.mxu0 0.0
    %246 = vmatpush1.msra.mxu0 0.0
    %247 = vmatprep.subr.mxu0 0.0
    %248 = vmatpush1.msra.mxu0 0.0
    %249 = vmatprep.subr.mxu0 0.0
    %250 = vmatpush1.msra.mxu0 0.0
    %251 = vmatprep.subr.mxu0 0.0
    %252 = vmatpush1.msra.mxu0 0.0
    %253 = vmatprep.subr.mxu0 0.0
    %254 = vmatpush1.msra.mxu0 0.0
    %255 = vmatprep.subr.mxu0 0.0
    %256 = vmatpush1.msra.mxu0 0.0
    %257 = vmatprep.subr.mxu0 0.0
    %258 = vmatpush1.msra.mxu0 0.0
    %259 = vmatprep.subr.mxu0 0.0
    %260 = vmatpush1.msra.mxu0 0.0
    %261 = vmatprep.subr.mxu0 0.0
    %262 = vmatpush1.msra.mxu0 0.0
    %263 = vmatprep.subr.mxu0 0.0
    %264 = vmatpush1.msra.mxu0 0.0
    %265 = vmatprep.subr.mxu0 0.0
    %266 = vmatpush1.msra.mxu0 0.0
    %267 = vmatprep.subr.mxu0 0.0
    %268 = vmatpush1.msra.mxu0 0.0
    %269 = vmatprep.subr.mxu0 0.0
    %270 = vmatpush1.msra.mxu0 0.0
    %271 = vmatprep.subr.mxu0 0.0
    %272 = vmatpush1.msra.mxu0 0.0
    %273 = vmatprep.subr.mxu0 0.0
    %274 = vmatpush1.msra.mxu0 0.0
    %275 = vmatprep.subr.mxu0 0.0
    %276 = vmatpush1.msra.mxu0 0.0
    %277 = vmatprep.subr.mxu0 0.0
    %278 = vmatpush1.msra.mxu0 0.0
    %279 = vmatprep.subr.mxu0 0.0
    %280 = vmatpush1.msra.mxu0 0.0
    %281 = vmatprep.subr.mxu0 0.0
    %282 = vmatpush1.msra.mxu0 0.0
    %283 = vmatprep.mubr.f32.mxu0 0.0
    %284 = vmatmul.mubr.f32.gmra.mrb[0].mxu0 %v208
    %v285 = vpop.f32.mrb[0].mxu0
    %v286 = vadd.f32 %v189, %v285
    %v287 = vpop.f32.mrb[0].mxu0
    %288 = vmatprep.mubr.f32.mxu0 0.0
    %289 = vmatmul.mubr.f32.gmra.mrb[0].mxu0 %v211
    %v290 = vpop.f32.mrb[0].mxu0
    %v291 = vadd.f32 %v194, %v290
    %v292 = vpop.f32.mrb[0].mxu0
    %293 = vmatprep.mubr.f32.mxu0 0.0
    %294 = vmatmul.mubr.f32.gmra.mrb[0].mxu0 %v214
    %v295 = vpop.f32.mrb[0].mxu0
    %v296 = vadd.f32 %v199, %v295
    %v297 = vpop.f32.mrb[0].mxu0
    %298 = vmatprep.mubr.f32.mxu0 0.0
    %299 = vmatmul.mubr.f32.gmra.mrb[0].mxu0 %v217
    %v300 = vpop.f32.mrb[0].mxu0
    %v301 = vadd.f32 %v204, %v300
    %v302 = vpop.f32.mrb[0].mxu0
    %303 = vdwg.mxu0
    %v304 = vmul.f32 %v286, 0.01
    %v305 = vmul.f32 %v291, 0.01
    %v306 = vmul.f32 %v296, 0.01
    %v307 = vmul.f32 %v301, 0.01
    %v308 = vmax.f32 %v286, %v304
    %v309 = vmax.f32 %v291, %v305
    %v310 = vmax.f32 %v296, %v306
    %v311 = vmax.f32 %v301, %v307
    %v312 = vld [vmem:[%s6] sm:$0x1]
    %v313 = vld [vmem:[#allocation2] sm:$0x1]
    %315 = vset.pattern.permute.xlu0 0
    %316 = vperm.xlu0 %315, %v313
    %v317 = vpop.permute.xlu0 %316
    %v319 = vlaneseq
    %v320 = vshrl.u32 %v319, 7
    %v321 = vsub.s32 0, %v320
    %v322 = vrot.slane %v317, %v321
    %v324 = vsel %vm206, %v312, 0
    %326 = vmatprep.subr.mxu0 0.0
    %327 = vmatpush1.msra.mxu0 %v308
    %328 = vmatprep.subr.mxu0 0.0
    %329 = vmatpush1.msra.mxu0 %v309
    %330 = vmatprep.subr.mxu0 0.0
    %331 = vmatpush1.msra.mxu0 %v310
    %332 = vmatprep.subr.mxu0 0.0
    %333 = vmatpush1.msra.mxu0 %v311
    %334 = vmatprep.subr.mxu0 0.0
    %335 = vmatpush1.msra.mxu0 0.0
    %336 = vmatprep.subr.mxu0 0.0
    %337 = vmatpush1.msra.mxu0 0.0
    %338 = vmatprep.subr.mxu0 0.0
    %339 = vmatpush1.msra.mxu0 0.0
    %340 = vmatprep.subr.mxu0 0.0
    %341 = vmatpush1.msra.mxu0 0.0
    %342 = vmatprep.subr.mxu0 0.0
    %343 = vmatpush1.msra.mxu0 0.0
    %344 = vmatprep.subr.mxu0 0.0
    %345 = vmatpush1.msra.mxu0 0.0
    %346 = vmatprep.subr.mxu0 0.0
    %347 = vmatpush1.msra.mxu0 0.0
    %348 = vmatprep.subr.mxu0 0.0
    %349 = vmatpush1.msra.mxu0 0.0
    %350 = vmatprep.subr.mxu0 0.0
    %351 = vmatpush1.msra.mxu0 0.0
    %352 = vmatprep.subr.mxu0 0.0
    %353 = vmatpush1.msra.mxu0 0.0
    %354 = vmatprep.subr.mxu0 0.0
    %355 = vmatpush1.msra.mxu0 0.0
    %356 = vmatprep.subr.mxu0 0.0
    %357 = vmatpush1.msra.mxu0 0.0
    %358 = vmatprep.subr.mxu0 0.0
    %359 = vmatpush1.msra.mxu0 0.0
    %360 = vmatprep.subr.mxu0 0.0
    %361 = vmatpush1.msra.mxu0 0.0
    %362 = vmatprep.subr.mxu0 0.0
    %363 = vmatpush1.msra.mxu0 0.0
    %364 = vmatprep.subr.mxu0 0.0
    %365 = vmatpush1.msra.mxu0 0.0
    %366 = vmatprep.subr.mxu0 0.0
    %367 = vmatpush1.msra.mxu0 0.0
    %368 = vmatprep.subr.mxu0 0.0
    %369 = vmatpush1.msra.mxu0 0.0
    %370 = vmatprep.subr.mxu0 0.0
    %371 = vmatpush1.msra.mxu0 0.0
    %372 = vmatprep.subr.mxu0 0.0
    %373 = vmatpush1.msra.mxu0 0.0
    %374 = vmatprep.subr.mxu0 0.0
    %375 = vmatpush1.msra.mxu0 0.0
    %376 = vmatprep.subr.mxu0 0.0
    %377 = vmatpush1.msra.mxu0 0.0
    %378 = vmatprep.subr.mxu0 0.0
    %379 = vmatpush1.msra.mxu0 0.0
    %380 = vmatprep.subr.mxu0 0.0
    %381 = vmatpush1.msra.mxu0 0.0
    %382 = vmatprep.subr.mxu0 0.0
    %383 = vmatpush1.msra.mxu0 0.0
    %384 = vmatprep.subr.mxu0 0.0
    %385 = vmatpush1.msra.mxu0 0.0
    %386 = vmatprep.subr.mxu0 0.0
    %387 = vmatpush1.msra.mxu0 0.0
    %388 = vmatprep.subr.mxu0 0.0
    %389 = vmatpush1.msra.mxu0 0.0
    %390 = vmatprep.mubr.f32.mxu0 0.0
    %391 = vmatmul.mubr.f32.gmra.mrb[0].mxu0 %v324
    %v392 = vpop.f32.mrb[0].mxu0
    %v393 = vadd.f32 %v322, %v392
    %v394 = vpop.f32.mrb[0].mxu0
    %395 = vdwg.mxu0
    %v396 = vmul.f32 %v393, 0.01
    %v397 = vmax.f32 %v393, %v396
    %v398 = vld [vmem:[%s0] sm:$0xff]
    %v399 = vld [vmem:[%s0 + $0x8] sm:$0xff]
    %v400 = vld [vmem:[%s0 + $0x10] sm:$0xf]
    %v402 = vsel %vm81, %v400, 0
    %404 = vmatprep.subr.mxu0 0.0
    %405 = vmatpush1.msra.mxu0 %v398
    %406 = vmatprep.subr.mxu0 0.0
    %407 = vmatpush1.msra.mxu0 %v399
    %408 = vmatprep.subr.mxu0 0.0
    %409 = vmatpush1.msra.mxu0 %v402
    %410 = vmatprep.subr.mxu0 0.0
    %411 = vmatpush1.msra.mxu0 0.0
    %412 = vmatprep.subr.mxu0 0.0
    %413 = vmatpush1.msra.mxu0 0.0
    %414 = vmatprep.subr.mxu0 0.0
    %415 = vmatpush1.msra.mxu0 0.0
    %416 = vmatprep.subr.mxu0 0.0
    %417 = vmatpush1.msra.mxu0 0.0
    %418 = vmatprep.subr.mxu0 0.0
    %419 = vmatpush1.msra.mxu0 0.0
    %420 = vmatprep.subr.mxu0 0.0
    %421 = vmatpush1.msra.mxu0 0.0
    %422 = vmatprep.subr.mxu0 0.0
    %423 = vmatpush1.msra.mxu0 0.0
    %424 = vmatprep.subr.mxu0 0.0
    %425 = vmatpush1.msra.mxu0 0.0
    %426 = vmatprep.subr.mxu0 0.0
    %427 = vmatpush1.msra.mxu0 0.0
    %428 = vmatprep.subr.mxu0 0.0
    %429 = vmatpush1.msra.mxu0 0.0
    %430 = vmatprep.subr.mxu0 0.0
    %431 = vmatpush1.msra.mxu0 0.0
    %432 = vmatprep.subr.mxu0 0.0
    %433 = vmatpush1.msra.mxu0 0.0
    %434 = vmatprep.subr.mxu0 0.0
    %435 = vmatpush1.msra.mxu0 0.0
    %436 = vmatprep.subr.mxu0 0.0
    %437 = vmatpush1.msra.mxu0 0.0
    %438 = vmatprep.subr.mxu0 0.0
    %439 = vmatpush1.msra.mxu0 0.0
    %440 = vmatprep.subr.mxu0 0.0
    %441 = vmatpush1.msra.mxu0 0.0
    %442 = vmatprep.subr.mxu0 0.0
    %443 = vmatpush1.msra.mxu0 0.0
    %444 = vmatprep.subr.mxu0 0.0
    %445 = vmatpush1.msra.mxu0 0.0
    %446 = vmatprep.subr.mxu0 0.0
    %447 = vmatpush1.msra.mxu0 0.0
    %448 = vmatprep.subr.mxu0 0.0
    %449 = vmatpush1.msra.mxu0 0.0
    %450 = vmatprep.subr.mxu0 0.0
    %451 = vmatpush1.msra.mxu0 0.0
    %452 = vmatprep.subr.mxu0 0.0
    %453 = vmatpush1.msra.mxu0 0.0
    %454 = vmatprep.subr.mxu0 0.0
    %455 = vmatpush1.msra.mxu0 0.0
    %456 = vmatprep.subr.mxu0 0.0
    %457 = vmatpush1.msra.mxu0 0.0
    %458 = vmatprep.subr.mxu0 0.0
    %459 = vmatpush1.msra.mxu0 0.0
    %460 = vmatprep.subr.mxu0 0.0
    %461 = vmatpush1.msra.mxu0 0.0
    %462 = vmatprep.subr.mxu0 0.0
    %463 = vmatpush1.msra.mxu0 0.0
    %464 = vmatprep.subr.mxu0 0.0
    %465 = vmatpush1.msra.mxu0 0.0
    %466 = vmatprep.subr.mxu0 0.0
    %467 = vmatpush1.msra.mxu0 0.0
    %468 = vmatprep.mubr.f32.mxu0 0.0
    %469 = vmatmul.mubr.f32.gmra.mrb[0].mxu0 %v70
    %v470 = vpop.f32.mrb[0].mxu0
    %v471 = vadd.f32 %v51, %v470
    %v472 = vpop.f32.mrb[0].mxu0
    %473 = vmatprep.mubr.f32.mxu0 0.0
    %474 = vmatmul.mubr.f32.gmra.mrb[0].mxu0 %v73
    %v475 = vpop.f32.mrb[0].mxu0
    %v476 = vadd.f32 %v56, %v475
    %v477 = vpop.f32.mrb[0].mxu0
    %478 = vmatprep.mubr.f32.mxu0 0.0
    %479 = vmatmul.mubr.f32.gmra.mrb[0].mxu0 %v76
    %v480 = vpop.f32.mrb[0].mxu0
    %v481 = vadd.f32 %v61, %v480
    %v482 = vpop.f32.mrb[0].mxu0
    %483 = vmatprep.mubr.f32.mxu0 0.0
    %484 = vmatmul.mubr.f32.gmra.mrb[0].mxu0 %v79
    %v485 = vpop.f32.mrb[0].mxu0
    %v486 = vadd.f32 %v66, %v485
    %v487 = vpop.f32.mrb[0].mxu0
    %488 = vdwg.mxu0
    %v489 = vmul.f32 %v471, 0.01
    %v490 = vmul.f32 %v476, 0.01
    %v491 = vmul.f32 %v481, 0.01
    %v492 = vmul.f32 %v486, 0.01
    %v493 = vmax.f32 %v471, %v489
    %v494 = vmax.f32 %v476, %v490
    %v495 = vmax.f32 %v481, %v491
    %v496 = vmax.f32 %v486, %v492
    %497 = vmatprep.subr.mxu0 0.0
    %498 = vmatpush1.msra.mxu0 %v493
    %499 = vmatprep.subr.mxu0 0.0
    %500 = vmatpush1.msra.mxu0 %v494
    %501 = vmatprep.subr.mxu0 0.0
    %502 = vmatpush1.msra.mxu0 %v495
    %503 = vmatprep.subr.mxu0 0.0
    %504 = vmatpush1.msra.mxu0 %v496
    %505 = vmatprep.subr.mxu0 0.0
    %506 = vmatpush1.msra.mxu0 0.0
    %507 = vmatprep.subr.mxu0 0.0
    %508 = vmatpush1.msra.mxu0 0.0
    %509 = vmatprep.subr.mxu0 0.0
    %510 = vmatpush1.msra.mxu0 0.0
    %511 = vmatprep.subr.mxu0 0.0
    %512 = vmatpush1.msra.mxu0 0.0
    %513 = vmatprep.subr.mxu0 0.0
    %514 = vmatpush1.msra.mxu0 0.0
    %515 = vmatprep.subr.mxu0 0.0
    %516 = vmatpush1.msra.mxu0 0.0
    %517 = vmatprep.subr.mxu0 0.0
    %518 = vmatpush1.msra.mxu0 0.0
    %519 = vmatprep.subr.mxu0 0.0
    %520 = vmatpush1.msra.mxu0 0.0
    %521 = vmatprep.subr.mxu0 0.0
    %522 = vmatpush1.msra.mxu0 0.0
    %523 = vmatprep.subr.mxu0 0.0
    %524 = vmatpush1.msra.mxu0 0.0
    %525 = vmatprep.subr.mxu0 0.0
    %526 = vmatpush1.msra.mxu0 0.0
    %527 = vmatprep.subr.mxu0 0.0
    %528 = vmatpush1.msra.mxu0 0.0
    %529 = vmatprep.subr.mxu0 0.0
    %530 = vmatpush1.msra.mxu0 0.0
    %531 = vmatprep.subr.mxu0 0.0
    %532 = vmatpush1.msra.mxu0 0.0
    %533 = vmatprep.subr.mxu0 0.0
    %534 = vmatpush1.msra.mxu0 0.0
    %535 = vmatprep.subr.mxu0 0.0
    %536 = vmatpush1.msra.mxu0 0.0
    %537 = vmatprep.subr.mxu0 0.0
    %538 = vmatpush1.msra.mxu0 0.0
    %539 = vmatprep.subr.mxu0 0.0
    %540 = vmatpush1.msra.mxu0 0.0
    %541 = vmatprep.subr.mxu0 0.0
    %542 = vmatpush1.msra.mxu0 0.0
    %543 = vmatprep.subr.mxu0 0.0
    %544 = vmatpush1.msra.mxu0 0.0
    %545 = vmatprep.subr.mxu0 0.0
    %546 = vmatpush1.msra.mxu0 0.0
    %547 = vmatprep.subr.mxu0 0.0
    %548 = vmatpush1.msra.mxu0 0.0
    %549 = vmatprep.subr.mxu0 0.0
    %550 = vmatpush1.msra.mxu0 0.0
    %551 = vmatprep.subr.mxu0 0.0
    %552 = vmatpush1.msra.mxu0 0.0
    %553 = vmatprep.subr.mxu0 0.0
    %554 = vmatpush1.msra.mxu0 0.0
    %555 = vmatprep.subr.mxu0 0.0
    %556 = vmatpush1.msra.mxu0 0.0
    %557 = vmatprep.subr.mxu0 0.0
    %558 = vmatpush1.msra.mxu0 0.0
    %559 = vmatprep.subr.mxu0 0.0
    %560 = vmatpush1.msra.mxu0 0.0
    %561 = vmatprep.mubr.f32.mxu0 0.0
    %562 = vmatmul.mubr.f32.gmra.mrb[0].mxu0 %v208
    %v563 = vpop.f32.mrb[0].mxu0
    %v564 = vadd.f32 %v189, %v563
    %v565 = vpop.f32.mrb[0].mxu0
    %566 = vmatprep.mubr.f32.mxu0 0.0
    %567 = vmatmul.mubr.f32.gmra.mrb[0].mxu0 %v211
    %v568 = vpop.f32.mrb[0].mxu0
    %v569 = vadd.f32 %v194, %v568
    %v570 = vpop.f32.mrb[0].mxu0
    %571 = vmatprep.mubr.f32.mxu0 0.0
    %572 = vmatmul.mubr.f32.gmra.mrb[0].mxu0 %v214
    %v573 = vpop.f32.mrb[0].mxu0
    %v574 = vadd.f32 %v199, %v573
    %v575 = vpop.f32.mrb[0].mxu0
    %576 = vmatprep.mubr.f32.mxu0 0.0
    %577 = vmatmul.mubr.f32.gmra.mrb[0].mxu0 %v217
    %v578 = vpop.f32.mrb[0].mxu0
    %v579 = vadd.f32 %v204, %v578
    %v580 = vpop.f32.mrb[0].mxu0
    %581 = vdwg.mxu0
    %v582 = vmul.f32 %v564, 0.01
    %v583 = vmul.f32 %v569, 0.01
    %v584 = vmul.f32 %v574, 0.01
    %v585 = vmul.f32 %v579, 0.01
    %v586 = vmax.f32 %v564, %v582
    %v587 = vmax.f32 %v569, %v583
    %v588 = vmax.f32 %v574, %v584
    %v589 = vmax.f32 %v579, %v585
    %590 = vmatprep.subr.mxu0 0.0
    %591 = vmatpush1.msra.mxu0 %v586
    %592 = vmatprep.subr.mxu0 0.0
    %593 = vmatpush1.msra.mxu0 %v587
    %594 = vmatprep.subr.mxu0 0.0
    %595 = vmatpush1.msra.mxu0 %v588
    %596 = vmatprep.subr.mxu0 0.0
    %597 = vmatpush1.msra.mxu0 %v589
    %598 = vmatprep.subr.mxu0 0.0
    %599 = vmatpush1.msra.mxu0 0.0
    %600 = vmatprep.subr.mxu0 0.0
    %601 = vmatpush1.msra.mxu0 0.0
    %602 = vmatprep.subr.mxu0 0.0
    %603 = vmatpush1.msra.mxu0 0.0
    %604 = vmatprep.subr.mxu0 0.0
    %605 = vmatpush1.msra.mxu0 0.0
    %606 = vmatprep.subr.mxu0 0.0
    %607 = vmatpush1.msra.mxu0 0.0
    %608 = vmatprep.subr.mxu0 0.0
    %609 = vmatpush1.msra.mxu0 0.0
    %610 = vmatprep.subr.mxu0 0.0
    %611 = vmatpush1.msra.mxu0 0.0
    %612 = vmatprep.subr.mxu0 0.0
    %613 = vmatpush1.msra.mxu0 0.0
    %614 = vmatprep.subr.mxu0 0.0
    %615 = vmatpush1.msra.mxu0 0.0
    %616 = vmatprep.subr.mxu0 0.0
    %617 = vmatpush1.msra.mxu0 0.0
    %618 = vmatprep.subr.mxu0 0.0
    %619 = vmatpush1.msra.mxu0 0.0
    %620 = vmatprep.subr.mxu0 0.0
    %621 = vmatpush1.msra.mxu0 0.0
    %622 = vmatprep.subr.mxu0 0.0
    %623 = vmatpush1.msra.mxu0 0.0
    %624 = vmatprep.subr.mxu0 0.0
    %625 = vmatpush1.msra.mxu0 0.0
    %626 = vmatprep.subr.mxu0 0.0
    %627 = vmatpush1.msra.mxu0 0.0
    %628 = vmatprep.subr.mxu0 0.0
    %629 = vmatpush1.msra.mxu0 0.0
    %630 = vmatprep.subr.mxu0 0.0
    %631 = vmatpush1.msra.mxu0 0.0
    %632 = vmatprep.subr.mxu0 0.0
    %633 = vmatpush1.msra.mxu0 0.0
    %634 = vmatprep.subr.mxu0 0.0
    %635 = vmatpush1.msra.mxu0 0.0
    %636 = vmatprep.subr.mxu0 0.0
    %637 = vmatpush1.msra.mxu0 0.0
    %638 = vmatprep.subr.mxu0 0.0
    %639 = vmatpush1.msra.mxu0 0.0
    %640 = vmatprep.subr.mxu0 0.0
    %641 = vmatpush1.msra.mxu0 0.0
    %642 = vmatprep.subr.mxu0 0.0
    %643 = vmatpush1.msra.mxu0 0.0
    %644 = vmatprep.subr.mxu0 0.0
    %645 = vmatpush1.msra.mxu0 0.0
    %646 = vmatprep.subr.mxu0 0.0
    %647 = vmatpush1.msra.mxu0 0.0
    %648 = vmatprep.subr.mxu0 0.0
    %649 = vmatpush1.msra.mxu0 0.0
    %650 = vmatprep.subr.mxu0 0.0
    %651 = vmatpush1.msra.mxu0 0.0
    %652 = vmatprep.subr.mxu0 0.0
    %653 = vmatpush1.msra.mxu0 0.0
    %654 = vmatprep.mubr.f32.mxu0 0.0
    %655 = vmatmul.mubr.f32.gmra.mrb[0].mxu0 %v324
    %v656 = vpop.f32.mrb[0].mxu0
    %v657 = vadd.f32 %v322, %v656
    %v658 = vpop.f32.mrb[0].mxu0
    %659 = vdwg.mxu0
    %v660 = vmul.f32 %v657, 0.01
    %v661 = vmax.f32 %v657, %v660
    %v662 = vsub.f32 %v397, %v661
    %v663 = vadd.f32 %v662, 0.0
    %s664 = scalar_lea.vmem %s1, 24
    %v665 = vld [vmem:[%s664] sm:$0xff]
    %v666 = vld [vmem:[%s664 + $0x8] sm:$0xff]
    %v667 = vld [vmem:[%s664 + $0x10] sm:$0xf]
    %v669 = vsel %vm81, %v667, 0
    %671 = vmatprep.subr.mxu0 0.0
    %672 = vmatpush1.msra.mxu0 %v665
    %673 = vmatprep.subr.mxu0 0.0
    %674 = vmatpush1.msra.mxu0 %v666
    %675 = vmatprep.subr.mxu0 0.0
    %676 = vmatpush1.msra.mxu0 %v669
    %677 = vmatprep.subr.mxu0 0.0
    %678 = vmatpush1.msra.mxu0 0.0
    %679 = vmatprep.subr.mxu0 0.0
    %680 = vmatpush1.msra.mxu0 0.0
    %681 = vmatprep.subr.mxu0 0.0
    %682 = vmatpush1.msra.mxu0 0.0
    %683 = vmatprep.subr.mxu0 0.0
    %684 = vmatpush1.msra.mxu0 0.0
    %685 = vmatprep.subr.mxu0 0.0
    %686 = vmatpush1.msra.mxu0 0.0
    %687 = vmatprep.subr.mxu0 0.0
    %688 = vmatpush1.msra.mxu0 0.0
    %689 = vmatprep.subr.mxu0 0.0
    %690 = vmatpush1.msra.mxu0 0.0
    %691 = vmatprep.subr.mxu0 0.0
    %692 = vmatpush1.msra.mxu0 0.0
    %693 = vmatprep.subr.mxu0 0.0
    %694 = vmatpush1.msra.mxu0 0.0
    %695 = vmatprep.subr.mxu0 0.0
    %696 = vmatpush1.msra.mxu0 0.0
    %697 = vmatprep.subr.mxu0 0.0
    %698 = vmatpush1.msra.mxu0 0.0
    %699 = vmatprep.subr.mxu0 0.0
    %700 = vmatpush1.msra.mxu0 0.0
    %701 = vmatprep.subr.mxu0 0.0
    %702 = vmatpush1.msra.mxu0 0.0
    %703 = vmatprep.subr.mxu0 0.0
    %704 = vmatpush1.msra.mxu0 0.0
    %705 = vmatprep.subr.mxu0 0.0
    %706 = vmatpush1.msra.mxu0 0.0
    %707 = vmatprep.subr.mxu0 0.0
    %708 = vmatpush1.msra.mxu0 0.0
    %709 = vmatprep.subr.mxu0 0.0
    %710 = vmatpush1.msra.mxu0 0.0
    %711 = vmatprep.subr.mxu0 0.0
    %712 = vmatpush1.msra.mxu0 0.0
    %713 = vmatprep.subr.mxu0 0.0
    %714 = vmatpush1.msra.mxu0 0.0
    %715 = vmatprep.subr.mxu0 0.0
    %716 = vmatpush1.msra.mxu0 0.0
    %717 = vmatprep.subr.mxu0 0.0
    %718 = vmatpush1.msra.mxu0 0.0
    %719 = vmatprep.subr.mxu0 0.0
    %720 = vmatpush1.msra.mxu0 0.0
    %721 = vmatprep.subr.mxu0 0.0
    %722 = vmatpush1.msra.mxu0 0.0
    %723 = vmatprep.subr.mxu0 0.0
    %724 = vmatpush1.msra.mxu0 0.0
    %725 = vmatprep.subr.mxu0 0.0
    %726 = vmatpush1.msra.mxu0 0.0
    %727 = vmatprep.subr.mxu0 0.0
    %728 = vmatpush1.msra.mxu0 0.0
    %729 = vmatprep.subr.mxu0 0.0
    %730 = vmatpush1.msra.mxu0 0.0
    %731 = vmatprep.subr.mxu0 0.0
    %732 = vmatpush1.msra.mxu0 0.0
    %733 = vmatprep.subr.mxu0 0.0
    %734 = vmatpush1.msra.mxu0 0.0
    %735 = vmatprep.mubr.f32.mxu0 0.0
    %736 = vmatmul.mubr.f32.gmra.mrb[0].mxu0 %v70
    %v737 = vpop.f32.mrb[0].mxu0
    %v738 = vadd.f32 %v51, %v737
    %v739 = vpop.f32.mrb[0].mxu0
    %740 = vmatprep.mubr.f32.mxu0 0.0
    %741 = vmatmul.mubr.f32.gmra.mrb[0].mxu0 %v73
    %v742 = vpop.f32.mrb[0].mxu0
    %v743 = vadd.f32 %v56, %v742
    %v744 = vpop.f32.mrb[0].mxu0
    %745 = vmatprep.mubr.f32.mxu0 0.0
    %746 = vmatmul.mubr.f32.gmra.mrb[0].mxu0 %v76
    %v747 = vpop.f32.mrb[0].mxu0
    %v748 = vadd.f32 %v61, %v747
    %v749 = vpop.f32.mrb[0].mxu0
    %750 = vmatprep.mubr.f32.mxu0 0.0
    %751 = vmatmul.mubr.f32.gmra.mrb[0].mxu0 %v79
    %v752 = vpop.f32.mrb[0].mxu0
    %v753 = vadd.f32 %v66, %v752
    %v754 = vpop.f32.mrb[0].mxu0
    %755 = vdwg.mxu0
    %v756 = vmul.f32 %v738, 0.01
    %v757 = vmul.f32 %v743, 0.01
    %v758 = vmul.f32 %v748, 0.01
    %v759 = vmul.f32 %v753, 0.01
    %v760 = vmax.f32 %v738, %v756
    %v761 = vmax.f32 %v743, %v757
    %v762 = vmax.f32 %v748, %v758
    %v763 = vmax.f32 %v753, %v759
    %764 = vmatprep.subr.mxu0 0.0
    %765 = vmatpush1.msra.mxu0 %v760
    %766 = vmatprep.subr.mxu0 0.0
    %767 = vmatpush1.msra.mxu0 %v761
    %768 = vmatprep.subr.mxu0 0.0
    %769 = vmatpush1.msra.mxu0 %v762
    %770 = vmatprep.subr.mxu0 0.0
    %771 = vmatpush1.msra.mxu0 %v763
    %772 = vmatprep.subr.mxu0 0.0
    %773 = vmatpush1.msra.mxu0 0.0
    %774 = vmatprep.subr.mxu0 0.0
    %775 = vmatpush1.msra.mxu0 0.0
    %776 = vmatprep.subr.mxu0 0.0
    %777 = vmatpush1.msra.mxu0 0.0
    %778 = vmatprep.subr.mxu0 0.0
    %779 = vmatpush1.msra.mxu0 0.0
    %780 = vmatprep.subr.mxu0 0.0
    %781 = vmatpush1.msra.mxu0 0.0
    %782 = vmatprep.subr.mxu0 0.0
    %783 = vmatpush1.msra.mxu0 0.0
    %784 = vmatprep.subr.mxu0 0.0
    %785 = vmatpush1.msra.mxu0 0.0
    %786 = vmatprep.subr.mxu0 0.0
    %787 = vmatpush1.msra.mxu0 0.0
    %788 = vmatprep.subr.mxu0 0.0
    %789 = vmatpush1.msra.mxu0 0.0
    %790 = vmatprep.subr.mxu0 0.0
    %791 = vmatpush1.msra.mxu0 0.0
    %792 = vmatprep.subr.mxu0 0.0
    %793 = vmatpush1.msra.mxu0 0.0
    %794 = vmatprep.subr.mxu0 0.0
    %795 = vmatpush1.msra.mxu0 0.0
    %796 = vmatprep.subr.mxu0 0.0
    %797 = vmatpush1.msra.mxu0 0.0
    %798 = vmatprep.subr.mxu0 0.0
    %799 = vmatpush1.msra.mxu0 0.0
    %800 = vmatprep.subr.mxu0 0.0
    %801 = vmatpush1.msra.mxu0 0.0
    %802 = vmatprep.subr.mxu0 0.0
    %803 = vmatpush1.msra.mxu0 0.0
    %804 = vmatprep.subr.mxu0 0.0
    %805 = vmatpush1.msra.mxu0 0.0
    %806 = vmatprep.subr.mxu0 0.0
    %807 = vmatpush1.msra.mxu0 0.0
    %808 = vmatprep.subr.mxu0 0.0
    %809 = vmatpush1.msra.mxu0 0.0
    %810 = vmatprep.subr.mxu0 0.0
    %811 = vmatpush1.msra.mxu0 0.0
    %812 = vmatprep.subr.mxu0 0.0
    %813 = vmatpush1.msra.mxu0 0.0
    %814 = vmatprep.subr.mxu0 0.0
    %815 = vmatpush1.msra.mxu0 0.0
    %816 = vmatprep.subr.mxu0 0.0
    %817 = vmatpush1.msra.mxu0 0.0
    %818 = vmatprep.subr.mxu0 0.0
    %819 = vmatpush1.msra.mxu0 0.0
    %820 = vmatprep.subr.mxu0 0.0
    %821 = vmatpush1.msra.mxu0 0.0
    %822 = vmatprep.subr.mxu0 0.0
    %823 = vmatpush1.msra.mxu0 0.0
    %824 = vmatprep.subr.mxu0 0.0
    %825 = vmatpush1.msra.mxu0 0.0
    %826 = vmatprep.subr.mxu0 0.0
    %827 = vmatpush1.msra.mxu0 0.0
    %828 = vmatprep.mubr.f32.mxu0 0.0
    %829 = vmatmul.mubr.f32.gmra.mrb[0].mxu0 %v208
    %v830 = vpop.f32.mrb[0].mxu0
    %v831 = vadd.f32 %v189, %v830
    %v832 = vpop.f32.mrb[0].mxu0
    %833 = vmatprep.mubr.f32.mxu0 0.0
    %834 = vmatmul.mubr.f32.gmra.mrb[0].mxu0 %v211
    %v835 = vpop.f32.mrb[0].mxu0
    %v836 = vadd.f32 %v194, %v835
    %v837 = vpop.f32.mrb[0].mxu0
    %838 = vmatprep.mubr.f32.mxu0 0.0
    %839 = vmatmul.mubr.f32.gmra.mrb[0].mxu0 %v214
    %v840 = vpop.f32.mrb[0].mxu0
    %v841 = vadd.f32 %v199, %v840
    %v842 = vpop.f32.mrb[0].mxu0
    %843 = vmatprep.mubr.f32.mxu0 0.0
    %844 = vmatmul.mubr.f32.gmra.mrb[0].mxu0 %v217
    %v845 = vpop.f32.mrb[0].mxu0
    %v846 = vadd.f32 %v204, %v845
    %v847 = vpop.f32.mrb[0].mxu0
    %848 = vdwg.mxu0
    %v849 = vmul.f32 %v831, 0.01
    %v850 = vmul.f32 %v836, 0.01
    %v851 = vmul.f32 %v841, 0.01
    %v852 = vmul.f32 %v846, 0.01
    %v853 = vmax.f32 %v831, %v849
    %v854 = vmax.f32 %v836, %v850
    %v855 = vmax.f32 %v841, %v851
    %v856 = vmax.f32 %v846, %v852
    %857 = vmatprep.subr.mxu0 0.0
    %858 = vmatpush1.msra.mxu0 %v853
    %859 = vmatprep.subr.mxu0 0.0
    %860 = vmatpush1.msra.mxu0 %v854
    %861 = vmatprep.subr.mxu0 0.0
    %862 = vmatpush1.msra.mxu0 %v855
    %863 = vmatprep.subr.mxu0 0.0
    %864 = vmatpush1.msra.mxu0 %v856
    %865 = vmatprep.subr.mxu0 0.0
    %866 = vmatpush1.msra.mxu0 0.0
    %867 = vmatprep.subr.mxu0 0.0
    %868 = vmatpush1.msra.mxu0 0.0
    %869 = vmatprep.subr.mxu0 0.0
    %870 = vmatpush1.msra.mxu0 0.0
    %871 = vmatprep.subr.mxu0 0.0
    %872 = vmatpush1.msra.mxu0 0.0
    %873 = vmatprep.subr.mxu0 0.0
    %874 = vmatpush1.msra.mxu0 0.0
    %875 = vmatprep.subr.mxu0 0.0
    %876 = vmatpush1.msra.mxu0 0.0
    %877 = vmatprep.subr.mxu0 0.0
    %878 = vmatpush1.msra.mxu0 0.0
    %879 = vmatprep.subr.mxu0 0.0
    %880 = vmatpush1.msra.mxu0 0.0
    %881 = vmatprep.subr.mxu0 0.0
    %882 = vmatpush1.msra.mxu0 0.0
    %883 = vmatprep.subr.mxu0 0.0
    %884 = vmatpush1.msra.mxu0 0.0
    %885 = vmatprep.subr.mxu0 0.0
    %886 = vmatpush1.msra.mxu0 0.0
    %887 = vmatprep.subr.mxu0 0.0
    %888 = vmatpush1.msra.mxu0 0.0
    %889 = vmatprep.subr.mxu0 0.0
    %890 = vmatpush1.msra.mxu0 0.0
    %891 = vmatprep.subr.mxu0 0.0
    %892 = vmatpush1.msra.mxu0 0.0
    %893 = vmatprep.subr.mxu0 0.0
    %894 = vmatpush1.msra.mxu0 0.0
    %895 = vmatprep.subr.mxu0 0.0
    %896 = vmatpush1.msra.mxu0 0.0
    %897 = vmatprep.subr.mxu0 0.0
    %898 = vmatpush1.msra.mxu0 0.0
    %899 = vmatprep.subr.mxu0 0.0
    %900 = vmatpush1.msra.mxu0 0.0
    %901 = vmatprep.subr.mxu0 0.0
    %902 = vmatpush1.msra.mxu0 0.0
    %903 = vmatprep.subr.mxu0 0.0
    %904 = vmatpush1.msra.mxu0 0.0
    %905 = vmatprep.subr.mxu0 0.0
    %906 = vmatpush1.msra.mxu0 0.0
    %907 = vmatprep.subr.mxu0 0.0
    %908 = vmatpush1.msra.mxu0 0.0
    %909 = vmatprep.subr.mxu0 0.0
    %910 = vmatpush1.msra.mxu0 0.0
    %911 = vmatprep.subr.mxu0 0.0
    %912 = vmatpush1.msra.mxu0 0.0
    %913 = vmatprep.subr.mxu0 0.0
    %914 = vmatpush1.msra.mxu0 0.0
    %915 = vmatprep.subr.mxu0 0.0
    %916 = vmatpush1.msra.mxu0 0.0
    %917 = vmatprep.subr.mxu0 0.0
    %918 = vmatpush1.msra.mxu0 0.0
    %919 = vmatprep.subr.mxu0 0.0
    %920 = vmatpush1.msra.mxu0 0.0
    %921 = vmatprep.mubr.f32.mxu0 0.0
    %922 = vmatmul.mubr.f32.gmra.mrb[0].mxu0 %v324
    %v923 = vpop.f32.mrb[0].mxu0
    %v924 = vadd.f32 %v322, %v923
    %v925 = vpop.f32.mrb[0].mxu0
    %926 = vdwg.mxu0
    %v927 = vmul.f32 %v924, 0.01
    %v928 = vmax.f32 %v924, %v927
    %s929 = scalar_lea.vmem %s0, 24
    %v930 = vld [vmem:[%s929] sm:$0xff]
    %v931 = vld [vmem:[%s929 + $0x8] sm:$0xff]
    %v932 = vld [vmem:[%s929 + $0x10] sm:$0xf]
    %v934 = vsel %vm81, %v932, 0
    %936 = vmatprep.subr.mxu0 0.0
    %937 = vmatpush1.msra.mxu0 %v930
    %938 = vmatprep.subr.mxu0 0.0
    %939 = vmatpush1.msra.mxu0 %v931
    %940 = vmatprep.subr.mxu0 0.0
    %941 = vmatpush1.msra.mxu0 %v934
    %942 = vmatprep.subr.mxu0 0.0
    %943 = vmatpush1.msra.mxu0 0.0
    %944 = vmatprep.subr.mxu0 0.0
    %945 = vmatpush1.msra.mxu0 0.0
    %946 = vmatprep.subr.mxu0 0.0
    %947 = vmatpush1.msra.mxu0 0.0
    %948 = vmatprep.subr.mxu0 0.0
    %949 = vmatpush1.msra.mxu0 0.0
    %950 = vmatprep.subr.mxu0 0.0
    %951 = vmatpush1.msra.mxu0 0.0
    %952 = vmatprep.subr.mxu0 0.0
    %953 = vmatpush1.msra.mxu0 0.0
    %954 = vmatprep.subr.mxu0 0.0
    %955 = vmatpush1.msra.mxu0 0.0
    %956 = vmatprep.subr.mxu0 0.0
    %957 = vmatpush1.msra.mxu0 0.0
    %958 = vmatprep.subr.mxu0 0.0
    %959 = vmatpush1.msra.mxu0 0.0
    %960 = vmatprep.subr.mxu0 0.0
    %961 = vmatpush1.msra.mxu0 0.0
    %962 = vmatprep.subr.mxu0 0.0
    %963 = vmatpush1.msra.mxu0 0.0
    %964 = vmatprep.subr.mxu0 0.0
    %965 = vmatpush1.msra.mxu0 0.0
    %966 = vmatprep.subr.mxu0 0.0
    %967 = vmatpush1.msra.mxu0 0.0
    %968 = vmatprep.subr.mxu0 0.0
    %969 = vmatpush1.msra.mxu0 0.0
    %970 = vmatprep.subr.mxu0 0.0
    %971 = vmatpush1.msra.mxu0 0.0
    %972 = vmatprep.subr.mxu0 0.0
    %973 = vmatpush1.msra.mxu0 0.0
    %974 = vmatprep.subr.mxu0 0.0
    %975 = vmatpush1.msra.mxu0 0.0
    %976 = vmatprep.subr.mxu0 0.0
    %977 = vmatpush1.msra.mxu0 0.0
    %978 = vmatprep.subr.mxu0 0.0
    %979 = vmatpush1.msra.mxu0 0.0
    %980 = vmatprep.subr.mxu0 0.0
    %981 = vmatpush1.msra.mxu0 0.0
    %982 = vmatprep.subr.mxu0 0.0
    %983 = vmatpush1.msra.mxu0 0.0
    %984 = vmatprep.subr.mxu0 0.0
    %985 = vmatpush1.msra.mxu0 0.0
    %986 = vmatprep.subr.mxu0 0.0
    %987 = vmatpush1.msra.mxu0 0.0
    %988 = vmatprep.subr.mxu0 0.0
    %989 = vmatpush1.msra.mxu0 0.0
    %990 = vmatprep.subr.mxu0 0.0
    %991 = vmatpush1.msra.mxu0 0.0
    %992 = vmatprep.subr.mxu0 0.0
    %993 = vmatpush1.msra.mxu0 0.0
    %994 = vmatprep.subr.mxu0 0.0
    %995 = vmatpush1.msra.mxu0 0.0
    %996 = vmatprep.subr.mxu0 0.0
    %997 = vmatpush1.msra.mxu0 0.0
    %998 = vmatprep.subr.mxu0 0.0
    %999 = vmatpush1.msra.mxu0 0.0
    %1000 = vmatprep.mubr.f32.mxu0 0.0
    %1001 = vmatmul.mubr.f32.gmra.mrb[0].mxu0 %v70
    %v1002 = vpop.f32.mrb[0].mxu0
    %v1003 = vadd.f32 %v51, %v1002
    %v1004 = vpop.f32.mrb[0].mxu0
    %1005 = vmatprep.mubr.f32.mxu0 0.0
    %1006 = vmatmul.mubr.f32.gmra.mrb[0].mxu0 %v73
    %v1007 = vpop.f32.mrb[0].mxu0
    %v1008 = vadd.f32 %v56, %v1007
    %v1009 = vpop.f32.mrb[0].mxu0
    %1010 = vmatprep.mubr.f32.mxu0 0.0
    %1011 = vmatmul.mubr.f32.gmra.mrb[0].mxu0 %v76
    %v1012 = vpop.f32.mrb[0].mxu0
    %v1013 = vadd.f32 %v61, %v1012
    %v1014 = vpop.f32.mrb[0].mxu0
    %1015 = vmatprep.mubr.f32.mxu0 0.0
    %1016 = vmatmul.mubr.f32.gmra.mrb[0].mxu0 %v79
    %v1017 = vpop.f32.mrb[0].mxu0
    %v1018 = vadd.f32 %v66, %v1017
    %v1019 = vpop.f32.mrb[0].mxu0
    %1020 = vdwg.mxu0
    %v1021 = vmul.f32 %v1003, 0.01
    %v1022 = vmul.f32 %v1008, 0.01
    %v1023 = vmul.f32 %v1013, 0.01
    %v1024 = vmul.f32 %v1018, 0.01
    %v1025 = vmax.f32 %v1003, %v1021
    %v1026 = vmax.f32 %v1008, %v1022
    %v1027 = vmax.f32 %v1013, %v1023
    %v1028 = vmax.f32 %v1018, %v1024
    %1029 = vmatprep.subr.mxu0 0.0
    %1030 = vmatpush1.msra.mxu0 %v1025
    %1031 = vmatprep.subr.mxu0 0.0
    %1032 = vmatpush1.msra.mxu0 %v1026
    %1033 = vmatprep.subr.mxu0 0.0
    %1034 = vmatpush1.msra.mxu0 %v1027
    %1035 = vmatprep.subr.mxu0 0.0
    %1036 = vmatpush1.msra.mxu0 %v1028
    %1037 = vmatprep.subr.mxu0 0.0
    %1038 = vmatpush1.msra.mxu0 0.0
    %1039 = vmatprep.subr.mxu0 0.0
    %1040 = vmatpush1.msra.mxu0 0.0
    %1041 = vmatprep.subr.mxu0 0.0
    %1042 = vmatpush1.msra.mxu0 0.0
    %1043 = vmatprep.subr.mxu0 0.0
    %1044 = vmatpush1.msra.mxu0 0.0
    %1045 = vmatprep.subr.mxu0 0.0
    %1046 = vmatpush1.msra.mxu0 0.0
    %1047 = vmatprep.subr.mxu0 0.0
    %1048 = vmatpush1.msra.mxu0 0.0
    %1049 = vmatprep.subr.mxu0 0.0
    %1050 = vmatpush1.msra.mxu0 0.0
    %1051 = vmatprep.subr.mxu0 0.0
    %1052 = vmatpush1.msra.mxu0 0.0
    %1053 = vmatprep.subr.mxu0 0.0
    %1054 = vmatpush1.msra.mxu0 0.0
    %1055 = vmatprep.subr.mxu0 0.0
    %1056 = vmatpush1.msra.mxu0 0.0
    %1057 = vmatprep.subr.mxu0 0.0
    %1058 = vmatpush1.msra.mxu0 0.0
    %1059 = vmatprep.subr.mxu0 0.0
    %1060 = vmatpush1.msra.mxu0 0.0
    %1061 = vmatprep.subr.mxu0 0.0
    %1062 = vmatpush1.msra.mxu0 0.0
    %1063 = vmatprep.subr.mxu0 0.0
    %1064 = vmatpush1.msra.mxu0 0.0
    %1065 = vmatprep.subr.mxu0 0.0
    %1066 = vmatpush1.msra.mxu0 0.0
    %1067 = vmatprep.subr.mxu0 0.0
    %1068 = vmatpush1.msra.mxu0 0.0
    %1069 = vmatprep.subr.mxu0 0.0
    %1070 = vmatpush1.msra.mxu0 0.0
    %1071 = vmatprep.subr.mxu0 0.0
    %1072 = vmatpush1.msra.mxu0 0.0
    %1073 = vmatprep.subr.mxu0 0.0
    %1074 = vmatpush1.msra.mxu0 0.0
    %1075 = vmatprep.subr.mxu0 0.0
    %1076 = vmatpush1.msra.mxu0 0.0
    %1077 = vmatprep.subr.mxu0 0.0
    %1078 = vmatpush1.msra.mxu0 0.0
    %1079 = vmatprep.subr.mxu0 0.0
    %1080 = vmatpush1.msra.mxu0 0.0
    %1081 = vmatprep.subr.mxu0 0.0
    %1082 = vmatpush1.msra.mxu0 0.0
    %1083 = vmatprep.subr.mxu0 0.0
    %1084 = vmatpush1.msra.mxu0 0.0
    %1085 = vmatprep.subr.mxu0 0.0
    %1086 = vmatpush1.msra.mxu0 0.0
    %1087 = vmatprep.subr.mxu0 0.0
    %1088 = vmatpush1.msra.mxu0 0.0
    %1089 = vmatprep.subr.mxu0 0.0
    %1090 = vmatpush1.msra.mxu0 0.0
    %1091 = vmatprep.subr.mxu0 0.0
    %1092 = vmatpush1.msra.mxu0 0.0
    %1093 = vmatprep.mubr.f32.mxu0 0.0
    %1094 = vmatmul.mubr.f32.gmra.mrb[0].mxu0 %v208
    %v1095 = vpop.f32.mrb[0].mxu0
    %v1096 = vadd.f32 %v189, %v1095
    %v1097 = vpop.f32.mrb[0].mxu0
    %1098 = vmatprep.mubr.f32.mxu0 0.0
    %1099 = vmatmul.mubr.f32.gmra.mrb[0].mxu0 %v211
    %v1100 = vpop.f32.mrb[0].mxu0
    %v1101 = vadd.f32 %v194, %v1100
    %v1102 = vpop.f32.mrb[0].mxu0
    %1103 = vmatprep.mubr.f32.mxu0 0.0
    %1104 = vmatmul.mubr.f32.gmra.mrb[0].mxu0 %v214
    %v1105 = vpop.f32.mrb[0].mxu0
    %v1106 = vadd.f32 %v199, %v1105
    %v1107 = vpop.f32.mrb[0].mxu0
    %1108 = vmatprep.mubr.f32.mxu0 0.0
    %1109 = vmatmul.mubr.f32.gmra.mrb[0].mxu0 %v217
    %v1110 = vpop.f32.mrb[0].mxu0
    %v1111 = vadd.f32 %v204, %v1110
    %v1112 = vpop.f32.mrb[0].mxu0
    %1113 = vdwg.mxu0
    %v1114 = vmul.f32 %v1096, 0.01
    %v1115 = vmul.f32 %v1101, 0.01
    %v1116 = vmul.f32 %v1106, 0.01
    %v1117 = vmul.f32 %v1111, 0.01
    %v1118 = vmax.f32 %v1096, %v1114
    %v1119 = vmax.f32 %v1101, %v1115
    %v1120 = vmax.f32 %v1106, %v1116
    %v1121 = vmax.f32 %v1111, %v1117
    %1122 = vmatprep.subr.mxu0 0.0
    %1123 = vmatpush1.msra.mxu0 %v1118
    %1124 = vmatprep.subr.mxu0 0.0
    %1125 = vmatpush1.msra.mxu0 %v1119
    %1126 = vmatprep.subr.mxu0 0.0
    %1127 = vmatpush1.msra.mxu0 %v1120
    %1128 = vmatprep.subr.mxu0 0.0
    %1129 = vmatpush1.msra.mxu0 %v1121
    %1130 = vmatprep.subr.mxu0 0.0
    %1131 = vmatpush1.msra.mxu0 0.0
    %1132 = vmatprep.subr.mxu0 0.0
    %1133 = vmatpush1.msra.mxu0 0.0
    %1134 = vmatprep.subr.mxu0 0.0
    %1135 = vmatpush1.msra.mxu0 0.0
    %1136 = vmatprep.subr.mxu0 0.0
    %1137 = vmatpush1.msra.mxu0 0.0
    %1138 = vmatprep.subr.mxu0 0.0
    %1139 = vmatpush1.msra.mxu0 0.0
    %1140 = vmatprep.subr.mxu0 0.0
    %1141 = vmatpush1.msra.mxu0 0.0
    %1142 = vmatprep.subr.mxu0 0.0
    %1143 = vmatpush1.msra.mxu0 0.0
    %1144 = vmatprep.subr.mxu0 0.0
    %1145 = vmatpush1.msra.mxu0 0.0
    %1146 = vmatprep.subr.mxu0 0.0
    %1147 = vmatpush1.msra.mxu0 0.0
    %1148 = vmatprep.subr.mxu0 0.0
    %1149 = vmatpush1.msra.mxu0 0.0
    %1150 = vmatprep.subr.mxu0 0.0
    %1151 = vmatpush1.msra.mxu0 0.0
    %1152 = vmatprep.subr.mxu0 0.0
    %1153 = vmatpush1.msra.mxu0 0.0
    %1154 = vmatprep.subr.mxu0 0.0
    %1155 = vmatpush1.msra.mxu0 0.0
    %1156 = vmatprep.subr.mxu0 0.0
    %1157 = vmatpush1.msra.mxu0 0.0
    %1158 = vmatprep.subr.mxu0 0.0
    %1159 = vmatpush1.msra.mxu0 0.0
    %1160 = vmatprep.subr.mxu0 0.0
    %1161 = vmatpush1.msra.mxu0 0.0
    %1162 = vmatprep.subr.mxu0 0.0
    %1163 = vmatpush1.msra.mxu0 0.0
    %1164 = vmatprep.subr.mxu0 0.0
    %1165 = vmatpush1.msra.mxu0 0.0
    %1166 = vmatprep.subr.mxu0 0.0
    %1167 = vmatpush1.msra.mxu0 0.0
    %1168 = vmatprep.subr.mxu0 0.0
    %1169 = vmatpush1.msra.mxu0 0.0
    %1170 = vmatprep.subr.mxu0 0.0
    %1171 = vmatpush1.msra.mxu0 0.0
    %1172 = vmatprep.subr.mxu0 0.0
    %1173 = vmatpush1.msra.mxu0 0.0
    %1174 = vmatprep.subr.mxu0 0.0
    %1175 = vmatpush1.msra.mxu0 0.0
    %1176 = vmatprep.subr.mxu0 0.0
    %1177 = vmatpush1.msra.mxu0 0.0
    %1178 = vmatprep.subr.mxu0 0.0
    %1179 = vmatpush1.msra.mxu0 0.0
    %1180 = vmatprep.subr.mxu0 0.0
    %1181 = vmatpush1.msra.mxu0 0.0
    %1182 = vmatprep.subr.mxu0 0.0
    %1183 = vmatpush1.msra.mxu0 0.0
    %1184 = vmatprep.subr.mxu0 0.0
    %1185 = vmatpush1.msra.mxu0 0.0
    %1186 = vmatprep.mubr.f32.mxu0 0.0
    %1187 = vmatmul.mubr.f32.gmra.mrb[0].mxu0 %v324
    %v1188 = vpop.f32.mrb[0].mxu0
    %v1189 = vadd.f32 %v322, %v1188
    %v1190 = vpop.f32.mrb[0].mxu0
    %1191 = vdwg.mxu0
    %v1192 = vmul.f32 %v1189, 0.01
    %v1193 = vmax.f32 %v1189, %v1192
    %v1194 = vsub.f32 %v928, %v1193
    %v1195 = vadd.f32 %v663, %v1194
    %s1196 = scalar_lea.vmem %s1, 48
    %v1197 = vld [vmem:[%s1196] sm:$0xff]
    %v1198 = vld [vmem:[%s1196 + $0x8] sm:$0xff]
    %v1199 = vld [vmem:[%s1196 + $0x10] sm:$0xf]
    %v1201 = vsel %vm81, %v1199, 0
    %1203 = vmatprep.subr.mxu0 0.0
    %1204 = vmatpush1.msra.mxu0 %v1197
    %1205 = vmatprep.subr.mxu0 0.0
    %1206 = vmatpush1.msra.mxu0 %v1198
    %1207 = vmatprep.subr.mxu0 0.0
    %1208 = vmatpush1.msra.mxu0 %v1201
    %1209 = vmatprep.subr.mxu0 0.0
    %1210 = vmatpush1.msra.mxu0 0.0
    %1211 = vmatprep.subr.mxu0 0.0
    %1212 = vmatpush1.msra.mxu0 0.0
    %1213 = vmatprep.subr.mxu0 0.0
    %1214 = vmatpush1.msra.mxu0 0.0
    %1215 = vmatprep.subr.mxu0 0.0
    %1216 = vmatpush1.msra.mxu0 0.0
    %1217 = vmatprep.subr.mxu0 0.0
    %1218 = vmatpush1.msra.mxu0 0.0
    %1219 = vmatprep.subr.mxu0 0.0
    %1220 = vmatpush1.msra.mxu0 0.0
    %1221 = vmatprep.subr.mxu0 0.0
    %1222 = vmatpush1.msra.mxu0 0.0
    %1223 = vmatprep.subr.mxu0 0.0
    %1224 = vmatpush1.msra.mxu0 0.0
    %1225 = vmatprep.subr.mxu0 0.0
    %1226 = vmatpush1.msra.mxu0 0.0
    %1227 = vmatprep.subr.mxu0 0.0
    %1228 = vmatpush1.msra.mxu0 0.0
    %1229 = vmatprep.subr.mxu0 0.0
    %1230 = vmatpush1.msra.mxu0 0.0
    %1231 = vmatprep.subr.mxu0 0.0
    %1232 = vmatpush1.msra.mxu0 0.0
    %1233 = vmatprep.subr.mxu0 0.0
    %1234 = vmatpush1.msra.mxu0 0.0
    %1235 = vmatprep.subr.mxu0 0.0
    %1236 = vmatpush1.msra.mxu0 0.0
    %1237 = vmatprep.subr.mxu0 0.0
    %1238 = vmatpush1.msra.mxu0 0.0
    %1239 = vmatprep.subr.mxu0 0.0
    %1240 = vmatpush1.msra.mxu0 0.0
    %1241 = vmatprep.subr.mxu0 0.0
    %1242 = vmatpush1.msra.mxu0 0.0
    %1243 = vmatprep.subr.mxu0 0.0
    %1244 = vmatpush1.msra.mxu0 0.0
    %1245 = vmatprep.subr.mxu0 0.0
    %1246 = vmatpush1.msra.mxu0 0.0
    %1247 = vmatprep.subr.mxu0 0.0
    %1248 = vmatpush1.msra.mxu0 0.0
    %1249 = vmatprep.subr.mxu0 0.0
    %1250 = vmatpush1.msra.mxu0 0.0
    %1251 = vmatprep.subr.mxu0 0.0
    %1252 = vmatpush1.msra.mxu0 0.0
    %1253 = vmatprep.subr.mxu0 0.0
    %1254 = vmatpush1.msra.mxu0 0.0
    %1255 = vmatprep.subr.mxu0 0.0
    %1256 = vmatpush1.msra.mxu0 0.0
    %1257 = vmatprep.subr.mxu0 0.0
    %1258 = vmatpush1.msra.mxu0 0.0
    %1259 = vmatprep.subr.mxu0 0.0
    %1260 = vmatpush1.msra.mxu0 0.0
    %1261 = vmatprep.subr.mxu0 0.0
    %1262 = vmatpush1.msra.mxu0 0.0
    %1263 = vmatprep.subr.mxu0 0.0
    %1264 = vmatpush1.msra.mxu0 0.0
    %1265 = vmatprep.subr.mxu0 0.0
    %1266 = vmatpush1.msra.mxu0 0.0
    %1267 = vmatprep.mubr.f32.mxu0 0.0
    %1268 = vmatmul.mubr.f32.gmra.mrb[0].mxu0 %v70
    %v1269 = vpop.f32.mrb[0].mxu0
    %v1270 = vadd.f32 %v51, %v1269
    %v1271 = vpop.f32.mrb[0].mxu0
    %1272 = vmatprep.mubr.f32.mxu0 0.0
    %1273 = vmatmul.mubr.f32.gmra.mrb[0].mxu0 %v73
    %v1274 = vpop.f32.mrb[0].mxu0
    %v1275 = vadd.f32 %v56, %v1274
    %v1276 = vpop.f32.mrb[0].mxu0
    %1277 = vmatprep.mubr.f32.mxu0 0.0
    %1278 = vmatmul.mubr.f32.gmra.mrb[0].mxu0 %v76
    %v1279 = vpop.f32.mrb[0].mxu0
    %v1280 = vadd.f32 %v61, %v1279
    %v1281 = vpop.f32.mrb[0].mxu0
    %1282 = vmatprep.mubr.f32.mxu0 0.0
    %1283 = vmatmul.mubr.f32.gmra.mrb[0].mxu0 %v79
    %v1284 = vpop.f32.mrb[0].mxu0
    %v1285 = vadd.f32 %v66, %v1284
    %v1286 = vpop.f32.mrb[0].mxu0
    %1287 = vdwg.mxu0
    %v1288 = vmul.f32 %v1270, 0.01
    %v1289 = vmul.f32 %v1275, 0.01
    %v1290 = vmul.f32 %v1280, 0.01
    %v1291 = vmul.f32 %v1285, 0.01
    %v1292 = vmax.f32 %v1270, %v1288
    %v1293 = vmax.f32 %v1275, %v1289
    %v1294 = vmax.f32 %v1280, %v1290
    %v1295 = vmax.f32 %v1285, %v1291
    %1296 = vmatprep.subr.mxu0 0.0
    %1297 = vmatpush1.msra.mxu0 %v1292
    %1298 = vmatprep.subr.mxu0 0.0
    %1299 = vmatpush1.msra.mxu0 %v1293
    %1300 = vmatprep.subr.mxu0 0.0
    %1301 = vmatpush1.msra.mxu0 %v1294
    %1302 = vmatprep.subr.mxu0 0.0
    %1303 = vmatpush1.msra.mxu0 %v1295
    %1304 = vmatprep.subr.mxu0 0.0
    %1305 = vmatpush1.msra.mxu0 0.0
    %1306 = vmatprep.subr.mxu0 0.0
    %1307 = vmatpush1.msra.mxu0 0.0
    %1308 = vmatprep.subr.mxu0 0.0
    %1309 = vmatpush1.msra.mxu0 0.0
    %1310 = vmatprep.subr.mxu0 0.0
    %1311 = vmatpush1.msra.mxu0 0.0
    %1312 = vmatprep.subr.mxu0 0.0
    %1313 = vmatpush1.msra.mxu0 0.0
    %1314 = vmatprep.subr.mxu0 0.0
    %1315 = vmatpush1.msra.mxu0 0.0
    %1316 = vmatprep.subr.mxu0 0.0
    %1317 = vmatpush1.msra.mxu0 0.0
    %1318 = vmatprep.subr.mxu0 0.0
    %1319 = vmatpush1.msra.mxu0 0.0
    %1320 = vmatprep.subr.mxu0 0.0
    %1321 = vmatpush1.msra.mxu0 0.0
    %1322 = vmatprep.subr.mxu0 0.0
    %1323 = vmatpush1.msra.mxu0 0.0
    %1324 = vmatprep.subr.mxu0 0.0
    %1325 = vmatpush1.msra.mxu0 0.0
    %1326 = vmatprep.subr.mxu0 0.0
    %1327 = vmatpush1.msra.mxu0 0.0
    %1328 = vmatprep.subr.mxu0 0.0
    %1329 = vmatpush1.msra.mxu0 0.0
    %1330 = vmatprep.subr.mxu0 0.0
    %1331 = vmatpush1.msra.mxu0 0.0
    %1332 = vmatprep.subr.mxu0 0.0
    %1333 = vmatpush1.msra.mxu0 0.0
    %1334 = vmatprep.subr.mxu0 0.0
    %1335 = vmatpush1.msra.mxu0 0.0
    %1336 = vmatprep.subr.mxu0 0.0
    %1337 = vmatpush1.msra.mxu0 0.0
    %1338 = vmatprep.subr.mxu0 0.0
    %1339 = vmatpush1.msra.mxu0 0.0
    %1340 = vmatprep.subr.mxu0 0.0
    %1341 = vmatpush1.msra.mxu0 0.0
    %1342 = vmatprep.subr.mxu0 0.0
    %1343 = vmatpush1.msra.mxu0 0.0
    %1344 = vmatprep.subr.mxu0 0.0
    %1345 = vmatpush1.msra.mxu0 0.0
    %1346 = vmatprep.subr.mxu0 0.0
    %1347 = vmatpush1.msra.mxu0 0.0
    %1348 = vmatprep.subr.mxu0 0.0
    %1349 = vmatpush1.msra.mxu0 0.0
    %1350 = vmatprep.subr.mxu0 0.0
    %1351 = vmatpush1.msra.mxu0 0.0
    %1352 = vmatprep.subr.mxu0 0.0
    %1353 = vmatpush1.msra.mxu0 0.0
    %1354 = vmatprep.subr.mxu0 0.0
    %1355 = vmatpush1.msra.mxu0 0.0
    %1356 = vmatprep.subr.mxu0 0.0
    %1357 = vmatpush1.msra.mxu0 0.0
    %1358 = vmatprep.subr.mxu0 0.0
    %1359 = vmatpush1.msra.mxu0 0.0
    %1360 = vmatprep.mubr.f32.mxu0 0.0
    %1361 = vmatmul.mubr.f32.gmra.mrb[0].mxu0 %v208
    %v1362 = vpop.f32.mrb[0].mxu0
    %v1363 = vadd.f32 %v189, %v1362
    %v1364 = vpop.f32.mrb[0].mxu0
    %1365 = vmatprep.mubr.f32.mxu0 0.0
    %1366 = vmatmul.mubr.f32.gmra.mrb[0].mxu0 %v211
    %v1367 = vpop.f32.mrb[0].mxu0
    %v1368 = vadd.f32 %v194, %v1367
    %v1369 = vpop.f32.mrb[0].mxu0
    %1370 = vmatprep.mubr.f32.mxu0 0.0
    %1371 = vmatmul.mubr.f32.gmra.mrb[0].mxu0 %v214
    %v1372 = vpop.f32.mrb[0].mxu0
    %v1373 = vadd.f32 %v199, %v1372
    %v1374 = vpop.f32.mrb[0].mxu0
    %1375 = vmatprep.mubr.f32.mxu0 0.0
    %1376 = vmatmul.mubr.f32.gmra.mrb[0].mxu0 %v217
    %v1377 = vpop.f32.mrb[0].mxu0
    %v1378 = vadd.f32 %v204, %v1377
    %v1379 = vpop.f32.mrb[0].mxu0
    %1380 = vdwg.mxu0
    %v1381 = vmul.f32 %v1363, 0.01
    %v1382 = vmul.f32 %v1368, 0.01
    %v1383 = vmul.f32 %v1373, 0.01
    %v1384 = vmul.f32 %v1378, 0.01
    %v1385 = vmax.f32 %v1363, %v1381
    %v1386 = vmax.f32 %v1368, %v1382
    %v1387 = vmax.f32 %v1373, %v1383
    %v1388 = vmax.f32 %v1378, %v1384
    %1389 = vmatprep.subr.mxu0 0.0
    %1390 = vmatpush1.msra.mxu0 %v1385
    %1391 = vmatprep.subr.mxu0 0.0
    %1392 = vmatpush1.msra.mxu0 %v1386
    %1393 = vmatprep.subr.mxu0 0.0
    %1394 = vmatpush1.msra.mxu0 %v1387
    %1395 = vmatprep.subr.mxu0 0.0
    %1396 = vmatpush1.msra.mxu0 %v1388
    %1397 = vmatprep.subr.mxu0 0.0
    %1398 = vmatpush1.msra.mxu0 0.0
    %1399 = vmatprep.subr.mxu0 0.0
    %1400 = vmatpush1.msra.mxu0 0.0
    %1401 = vmatprep.subr.mxu0 0.0
    %1402 = vmatpush1.msra.mxu0 0.0
    %1403 = vmatprep.subr.mxu0 0.0
    %1404 = vmatpush1.msra.mxu0 0.0
    %1405 = vmatprep.subr.mxu0 0.0
    %1406 = vmatpush1.msra.mxu0 0.0
    %1407 = vmatprep.subr.mxu0 0.0
    %1408 = vmatpush1.msra.mxu0 0.0
    %1409 = vmatprep.subr.mxu0 0.0
    %1410 = vmatpush1.msra.mxu0 0.0
    %1411 = vmatprep.subr.mxu0 0.0
    %1412 = vmatpush1.msra.mxu0 0.0
    %1413 = vmatprep.subr.mxu0 0.0
    %1414 = vmatpush1.msra.mxu0 0.0
    %1415 = vmatprep.subr.mxu0 0.0
    %1416 = vmatpush1.msra.mxu0 0.0
    %1417 = vmatprep.subr.mxu0 0.0
    %1418 = vmatpush1.msra.mxu0 0.0
    %1419 = vmatprep.subr.mxu0 0.0
    %1420 = vmatpush1.msra.mxu0 0.0
    %1421 = vmatprep.subr.mxu0 0.0
    %1422 = vmatpush1.msra.mxu0 0.0
    %1423 = vmatprep.subr.mxu0 0.0
    %1424 = vmatpush1.msra.mxu0 0.0
    %1425 = vmatprep.subr.mxu0 0.0
    %1426 = vmatpush1.msra.mxu0 0.0
    %1427 = vmatprep.subr.mxu0 0.0
    %1428 = vmatpush1.msra.mxu0 0.0
    %1429 = vmatprep.subr.mxu0 0.0
    %1430 = vmatpush1.msra.mxu0 0.0
    %1431 = vmatprep.subr.mxu0 0.0
    %1432 = vmatpush1.msra.mxu0 0.0
    %1433 = vmatprep.subr.mxu0 0.0
    %1434 = vmatpush1.msra.mxu0 0.0
    %1435 = vmatprep.subr.mxu0 0.0
    %1436 = vmatpush1.msra.mxu0 0.0
    %1437 = vmatprep.subr.mxu0 0.0
    %1438 = vmatpush1.msra.mxu0 0.0
    %1439 = vmatprep.subr.mxu0 0.0
    %1440 = vmatpush1.msra.mxu0 0.0
    %1441 = vmatprep.subr.mxu0 0.0
    %1442 = vmatpush1.msra.mxu0 0.0
    %1443 = vmatprep.subr.mxu0 0.0
    %1444 = vmatpush1.msra.mxu0 0.0
    %1445 = vmatprep.subr.mxu0 0.0
    %1446 = vmatpush1.msra.mxu0 0.0
    %1447 = vmatprep.subr.mxu0 0.0
    %1448 = vmatpush1.msra.mxu0 0.0
    %1449 = vmatprep.subr.mxu0 0.0
    %1450 = vmatpush1.msra.mxu0 0.0
    %1451 = vmatprep.subr.mxu0 0.0
    %1452 = vmatpush1.msra.mxu0 0.0
    %1453 = vmatprep.mubr.f32.mxu0 0.0
    %1454 = vmatmul.mubr.f32.gmra.mrb[0].mxu0 %v324
    %v1455 = vpop.f32.mrb[0].mxu0
    %v1456 = vadd.f32 %v322, %v1455
    %v1457 = vpop.f32.mrb[0].mxu0
    %1458 = vdwg.mxu0
    %v1459 = vmul.f32 %v1456, 0.01
    %v1460 = vmax.f32 %v1456, %v1459
    %s1461 = scalar_lea.vmem %s0, 48
    %v1462 = vld [vmem:[%s1461] sm:$0xff]
    %v1463 = vld [vmem:[%s1461 + $0x8] sm:$0xff]
    %v1464 = vld [vmem:[%s1461 + $0x10] sm:$0xf]
    %v1466 = vsel %vm81, %v1464, 0
    %1468 = vmatprep.subr.mxu0 0.0
    %1469 = vmatpush1.msra.mxu0 %v1462
    %1470 = vmatprep.subr.mxu0 0.0
    %1471 = vmatpush1.msra.mxu0 %v1463
    %1472 = vmatprep.subr.mxu0 0.0
    %1473 = vmatpush1.msra.mxu0 %v1466
    %1474 = vmatprep.subr.mxu0 0.0
    %1475 = vmatpush1.msra.mxu0 0.0
    %1476 = vmatprep.subr.mxu0 0.0
    %1477 = vmatpush1.msra.mxu0 0.0
    %1478 = vmatprep.subr.mxu0 0.0
    %1479 = vmatpush1.msra.mxu0 0.0
    %1480 = vmatprep.subr.mxu0 0.0
    %1481 = vmatpush1.msra.mxu0 0.0
    %1482 = vmatprep.subr.mxu0 0.0
    %1483 = vmatpush1.msra.mxu0 0.0
    %1484 = vmatprep.subr.mxu0 0.0
    %1485 = vmatpush1.msra.mxu0 0.0
    %1486 = vmatprep.subr.mxu0 0.0
    %1487 = vmatpush1.msra.mxu0 0.0
    %1488 = vmatprep.subr.mxu0 0.0
    %1489 = vmatpush1.msra.mxu0 0.0
    %1490 = vmatprep.subr.mxu0 0.0
    %1491 = vmatpush1.msra.mxu0 0.0
    %1492 = vmatprep.subr.mxu0 0.0
    %1493 = vmatpush1.msra.mxu0 0.0
    %1494 = vmatprep.subr.mxu0 0.0
    %1495 = vmatpush1.msra.mxu0 0.0
    %1496 = vmatprep.subr.mxu0 0.0
    %1497 = vmatpush1.msra.mxu0 0.0
    %1498 = vmatprep.subr.mxu0 0.0
    %1499 = vmatpush1.msra.mxu0 0.0
    %1500 = vmatprep.subr.mxu0 0.0
    %1501 = vmatpush1.msra.mxu0 0.0
    %1502 = vmatprep.subr.mxu0 0.0
    %1503 = vmatpush1.msra.mxu0 0.0
    %1504 = vmatprep.subr.mxu0 0.0
    %1505 = vmatpush1.msra.mxu0 0.0
    %1506 = vmatprep.subr.mxu0 0.0
    %1507 = vmatpush1.msra.mxu0 0.0
    %1508 = vmatprep.subr.mxu0 0.0
    %1509 = vmatpush1.msra.mxu0 0.0
    %1510 = vmatprep.subr.mxu0 0.0
    %1511 = vmatpush1.msra.mxu0 0.0
    %1512 = vmatprep.subr.mxu0 0.0
    %1513 = vmatpush1.msra.mxu0 0.0
    %1514 = vmatprep.subr.mxu0 0.0
    %1515 = vmatpush1.msra.mxu0 0.0
    %1516 = vmatprep.subr.mxu0 0.0
    %1517 = vmatpush1.msra.mxu0 0.0
    %1518 = vmatprep.subr.mxu0 0.0
    %1519 = vmatpush1.msra.mxu0 0.0
    %1520 = vmatprep.subr.mxu0 0.0
    %1521 = vmatpush1.msra.mxu0 0.0
    %1522 = vmatprep.subr.mxu0 0.0
    %1523 = vmatpush1.msra.mxu0 0.0
    %1524 = vmatprep.subr.mxu0 0.0
    %1525 = vmatpush1.msra.mxu0 0.0
    %1526 = vmatprep.subr.mxu0 0.0
    %1527 = vmatpush1.msra.mxu0 0.0
    %1528 = vmatprep.subr.mxu0 0.0
    %1529 = vmatpush1.msra.mxu0 0.0
    %1530 = vmatprep.subr.mxu0 0.0
    %1531 = vmatpush1.msra.mxu0 0.0
    %1532 = vmatprep.mubr.f32.mxu0 0.0
    %1533 = vmatmul.mubr.f32.gmra.mrb[0].mxu0 %v70
    %v1534 = vpop.f32.mrb[0].mxu0
    %v1535 = vadd.f32 %v51, %v1534
    %v1536 = vpop.f32.mrb[0].mxu0
    %1537 = vmatprep.mubr.f32.mxu0 0.0
    %1538 = vmatmul.mubr.f32.gmra.mrb[0].mxu0 %v73
    %v1539 = vpop.f32.mrb[0].mxu0
    %v1540 = vadd.f32 %v56, %v1539
    %v1541 = vpop.f32.mrb[0].mxu0
    %1542 = vmatprep.mubr.f32.mxu0 0.0
    %1543 = vmatmul.mubr.f32.gmra.mrb[0].mxu0 %v76
    %v1544 = vpop.f32.mrb[0].mxu0
    %v1545 = vadd.f32 %v61, %v1544
    %v1546 = vpop.f32.mrb[0].mxu0
    %1547 = vmatprep.mubr.f32.mxu0 0.0
    %1548 = vmatmul.mubr.f32.gmra.mrb[0].mxu0 %v79
    %v1549 = vpop.f32.mrb[0].mxu0
    %v1550 = vadd.f32 %v66, %v1549
    %v1551 = vpop.f32.mrb[0].mxu0
    %1552 = vdwg.mxu0
    %v1553 = vmul.f32 %v1535, 0.01
    %v1554 = vmul.f32 %v1540, 0.01
    %v1555 = vmul.f32 %v1545, 0.01
    %v1556 = vmul.f32 %v1550, 0.01
    %v1557 = vmax.f32 %v1535, %v1553
    %v1558 = vmax.f32 %v1540, %v1554
    %v1559 = vmax.f32 %v1545, %v1555
    %v1560 = vmax.f32 %v1550, %v1556
    %1561 = vmatprep.subr.mxu0 0.0
    %1562 = vmatpush1.msra.mxu0 %v1557
    %1563 = vmatprep.subr.mxu0 0.0
    %1564 = vmatpush1.msra.mxu0 %v1558
    %1565 = vmatprep.subr.mxu0 0.0
    %1566 = vmatpush1.msra.mxu0 %v1559
    %1567 = vmatprep.subr.mxu0 0.0
    %1568 = vmatpush1.msra.mxu0 %v1560
    %1569 = vmatprep.subr.mxu0 0.0
    %1570 = vmatpush1.msra.mxu0 0.0
    %1571 = vmatprep.subr.mxu0 0.0
    %1572 = vmatpush1.msra.mxu0 0.0
    %1573 = vmatprep.subr.mxu0 0.0
    %1574 = vmatpush1.msra.mxu0 0.0
    %1575 = vmatprep.subr.mxu0 0.0
    %1576 = vmatpush1.msra.mxu0 0.0
    %1577 = vmatprep.subr.mxu0 0.0
    %1578 = vmatpush1.msra.mxu0 0.0
    %1579 = vmatprep.subr.mxu0 0.0
    %1580 = vmatpush1.msra.mxu0 0.0
    %1581 = vmatprep.subr.mxu0 0.0
    %1582 = vmatpush1.msra.mxu0 0.0
    %1583 = vmatprep.subr.mxu0 0.0
    %1584 = vmatpush1.msra.mxu0 0.0
    %1585 = vmatprep.subr.mxu0 0.0
    %1586 = vmatpush1.msra.mxu0 0.0
    %1587 = vmatprep.subr.mxu0 0.0
    %1588 = vmatpush1.msra.mxu0 0.0
    %1589 = vmatprep.subr.mxu0 0.0
    %1590 = vmatpush1.msra.mxu0 0.0
    %1591 = vmatprep.subr.mxu0 0.0
    %1592 = vmatpush1.msra.mxu0 0.0
    %1593 = vmatprep.subr.mxu0 0.0
    %1594 = vmatpush1.msra.mxu0 0.0
    %1595 = vmatprep.subr.mxu0 0.0
    %1596 = vmatpush1.msra.mxu0 0.0
    %1597 = vmatprep.subr.mxu0 0.0
    %1598 = vmatpush1.msra.mxu0 0.0
    %1599 = vmatprep.subr.mxu0 0.0
    %1600 = vmatpush1.msra.mxu0 0.0
    %1601 = vmatprep.subr.mxu0 0.0
    %1602 = vmatpush1.msra.mxu0 0.0
    %1603 = vmatprep.subr.mxu0 0.0
    %1604 = vmatpush1.msra.mxu0 0.0
    %1605 = vmatprep.subr.mxu0 0.0
    %1606 = vmatpush1.msra.mxu0 0.0
    %1607 = vmatprep.subr.mxu0 0.0
    %1608 = vmatpush1.msra.mxu0 0.0
    %1609 = vmatprep.subr.mxu0 0.0
    %1610 = vmatpush1.msra.mxu0 0.0
    %1611 = vmatprep.subr.mxu0 0.0
    %1612 = vmatpush1.msra.mxu0 0.0
    %1613 = vmatprep.subr.mxu0 0.0
    %1614 = vmatpush1.msra.mxu0 0.0
    %1615 = vmatprep.subr.mxu0 0.0
    %1616 = vmatpush1.msra.mxu0 0.0
    %1617 = vmatprep.subr.mxu0 0.0
    %1618 = vmatpush1.msra.mxu0 0.0
    %1619 = vmatprep.subr.mxu0 0.0
    %1620 = vmatpush1.msra.mxu0 0.0
    %1621 = vmatprep.subr.mxu0 0.0
    %1622 = vmatpush1.msra.mxu0 0.0
    %1623 = vmatprep.subr.mxu0 0.0
    %1624 = vmatpush1.msra.mxu0 0.0
    %1625 = vmatprep.mubr.f32.mxu0 0.0
    %1626 = vmatmul.mubr.f32.gmra.mrb[0].mxu0 %v208
    %v1627 = vpop.f32.mrb[0].mxu0
    %v1628 = vadd.f32 %v189, %v1627
    %v1629 = vpop.f32.mrb[0].mxu0
    %1630 = vmatprep.mubr.f32.mxu0 0.0
    %1631 = vmatmul.mubr.f32.gmra.mrb[0].mxu0 %v211
    %v1632 = vpop.f32.mrb[0].mxu0
    %v1633 = vadd.f32 %v194, %v1632
    %v1634 = vpop.f32.mrb[0].mxu0
    %1635 = vmatprep.mubr.f32.mxu0 0.0
    %1636 = vmatmul.mubr.f32.gmra.mrb[0].mxu0 %v214
    %v1637 = vpop.f32.mrb[0].mxu0
    %v1638 = vadd.f32 %v199, %v1637
    %v1639 = vpop.f32.mrb[0].mxu0
    %1640 = vmatprep.mubr.f32.mxu0 0.0
    %1641 = vmatmul.mubr.f32.gmra.mrb[0].mxu0 %v217
    %v1642 = vpop.f32.mrb[0].mxu0
    %v1643 = vadd.f32 %v204, %v1642
    %v1644 = vpop.f32.mrb[0].mxu0
    %1645 = vdwg.mxu0
    %v1646 = vmul.f32 %v1628, 0.01
    %v1647 = vmul.f32 %v1633, 0.01
    %v1648 = vmul.f32 %v1638, 0.01
    %v1649 = vmul.f32 %v1643, 0.01
    %v1650 = vmax.f32 %v1628, %v1646
    %v1651 = vmax.f32 %v1633, %v1647
    %v1652 = vmax.f32 %v1638, %v1648
    %v1653 = vmax.f32 %v1643, %v1649
    %1654 = vmatprep.subr.mxu0 0.0
    %1655 = vmatpush1.msra.mxu0 %v1650
    %1656 = vmatprep.subr.mxu0 0.0
    %1657 = vmatpush1.msra.mxu0 %v1651
    %1658 = vmatprep.subr.mxu0 0.0
    %1659 = vmatpush1.msra.mxu0 %v1652
    %1660 = vmatprep.subr.mxu0 0.0
    %1661 = vmatpush1.msra.mxu0 %v1653
    %1662 = vmatprep.subr.mxu0 0.0
    %1663 = vmatpush1.msra.mxu0 0.0
    %1664 = vmatprep.subr.mxu0 0.0
    %1665 = vmatpush1.msra.mxu0 0.0
    %1666 = vmatprep.subr.mxu0 0.0
    %1667 = vmatpush1.msra.mxu0 0.0
    %1668 = vmatprep.subr.mxu0 0.0
    %1669 = vmatpush1.msra.mxu0 0.0
    %1670 = vmatprep.subr.mxu0 0.0
    %1671 = vmatpush1.msra.mxu0 0.0
    %1672 = vmatprep.subr.mxu0 0.0
    %1673 = vmatpush1.msra.mxu0 0.0
    %1674 = vmatprep.subr.mxu0 0.0
    %1675 = vmatpush1.msra.mxu0 0.0
    %1676 = vmatprep.subr.mxu0 0.0
    %1677 = vmatpush1.msra.mxu0 0.0
    %1678 = vmatprep.subr.mxu0 0.0
    %1679 = vmatpush1.msra.mxu0 0.0
    %1680 = vmatprep.subr.mxu0 0.0
    %1681 = vmatpush1.msra.mxu0 0.0
    %1682 = vmatprep.subr.mxu0 0.0
    %1683 = vmatpush1.msra.mxu0 0.0
    %1684 = vmatprep.subr.mxu0 0.0
    %1685 = vmatpush1.msra.mxu0 0.0
    %1686 = vmatprep.subr.mxu0 0.0
    %1687 = vmatpush1.msra.mxu0 0.0
    %1688 = vmatprep.subr.mxu0 0.0
    %1689 = vmatpush1.msra.mxu0 0.0
    %1690 = vmatprep.subr.mxu0 0.0
    %1691 = vmatpush1.msra.mxu0 0.0
    %1692 = vmatprep.subr.mxu0 0.0
    %1693 = vmatpush1.msra.mxu0 0.0
    %1694 = vmatprep.subr.mxu0 0.0
    %1695 = vmatpush1.msra.mxu0 0.0
    %1696 = vmatprep.subr.mxu0 0.0
    %1697 = vmatpush1.msra.mxu0 0.0
    %1698 = vmatprep.subr.mxu0 0.0
    %1699 = vmatpush1.msra.mxu0 0.0
    %1700 = vmatprep.subr.mxu0 0.0
    %1701 = vmatpush1.msra.mxu0 0.0
    %1702 = vmatprep.subr.mxu0 0.0
    %1703 = vmatpush1.msra.mxu0 0.0
    %1704 = vmatprep.subr.mxu0 0.0
    %1705 = vmatpush1.msra.mxu0 0.0
    %1706 = vmatprep.subr.mxu0 0.0
    %1707 = vmatpush1.msra.mxu0 0.0
    %1708 = vmatprep.subr.mxu0 0.0
    %1709 = vmatpush1.msra.mxu0 0.0
    %1710 = vmatprep.subr.mxu0 0.0
    %1711 = vmatpush1.msra.mxu0 0.0
    %1712 = vmatprep.subr.mxu0 0.0
    %1713 = vmatpush1.msra.mxu0 0.0
    %1714 = vmatprep.subr.mxu0 0.0
    %1715 = vmatpush1.msra.mxu0 0.0
    %1716 = vmatprep.subr.mxu0 0.0
    %1717 = vmatpush1.msra.mxu0 0.0
    %1718 = vmatprep.mubr.f32.mxu0 0.0
    %1719 = vmatmul.mubr.f32.gmra.mrb[0].mxu0 %v324
    %v1720 = vpop.f32.mrb[0].mxu0
    %v1721 = vadd.f32 %v322, %v1720
    %v1722 = vpop.f32.mrb[0].mxu0
    %1723 = vdwg.mxu0
    %v1724 = vmul.f32 %v1721, 0.01
    %v1725 = vmax.f32 %v1721, %v1724
    %v1726 = vsub.f32 %v1460, %v1725
    %v1727 = vadd.f32 %v1195, %v1726
    %s1728 = scalar_lea.vmem %s1, 72
    %v1729 = vld [vmem:[%s1728] sm:$0xff]
    %v1730 = vld [vmem:[%s1728 + $0x8] sm:$0xff]
    %v1731 = vld [vmem:[%s1728 + $0x10] sm:$0xf]
    %v1733 = vsel %vm81, %v1731, 0
    %1735 = vmatprep.subr.mxu0 0.0
    %1736 = vmatpush1.msra.mxu0 %v1729
    %1737 = vmatprep.subr.mxu0 0.0
    %1738 = vmatpush1.msra.mxu0 %v1730
    %1739 = vmatprep.subr.mxu0 0.0
    %1740 = vmatpush1.msra.mxu0 %v1733
    %1741 = vmatprep.subr.mxu0 0.0
    %1742 = vmatpush1.msra.mxu0 0.0
    %1743 = vmatprep.subr.mxu0 0.0
    %1744 = vmatpush1.msra.mxu0 0.0
    %1745 = vmatprep.subr.mxu0 0.0
    %1746 = vmatpush1.msra.mxu0 0.0
    %1747 = vmatprep.subr.mxu0 0.0
    %1748 = vmatpush1.msra.mxu0 0.0
    %1749 = vmatprep.subr.mxu0 0.0
    %1750 = vmatpush1.msra.mxu0 0.0
    %1751 = vmatprep.subr.mxu0 0.0
    %1752 = vmatpush1.msra.mxu0 0.0
    %1753 = vmatprep.subr.mxu0 0.0
    %1754 = vmatpush1.msra.mxu0 0.0
    %1755 = vmatprep.subr.mxu0 0.0
    %1756 = vmatpush1.msra.mxu0 0.0
    %1757 = vmatprep.subr.mxu0 0.0
    %1758 = vmatpush1.msra.mxu0 0.0
    %1759 = vmatprep.subr.mxu0 0.0
    %1760 = vmatpush1.msra.mxu0 0.0
    %1761 = vmatprep.subr.mxu0 0.0
    %1762 = vmatpush1.msra.mxu0 0.0
    %1763 = vmatprep.subr.mxu0 0.0
    %1764 = vmatpush1.msra.mxu0 0.0
    %1765 = vmatprep.subr.mxu0 0.0
    %1766 = vmatpush1.msra.mxu0 0.0
    %1767 = vmatprep.subr.mxu0 0.0
    %1768 = vmatpush1.msra.mxu0 0.0
    %1769 = vmatprep.subr.mxu0 0.0
    %1770 = vmatpush1.msra.mxu0 0.0
    %1771 = vmatprep.subr.mxu0 0.0
    %1772 = vmatpush1.msra.mxu0 0.0
    %1773 = vmatprep.subr.mxu0 0.0
    %1774 = vmatpush1.msra.mxu0 0.0
    %1775 = vmatprep.subr.mxu0 0.0
    %1776 = vmatpush1.msra.mxu0 0.0
    %1777 = vmatprep.subr.mxu0 0.0
    %1778 = vmatpush1.msra.mxu0 0.0
    %1779 = vmatprep.subr.mxu0 0.0
    %1780 = vmatpush1.msra.mxu0 0.0
    %1781 = vmatprep.subr.mxu0 0.0
    %1782 = vmatpush1.msra.mxu0 0.0
    %1783 = vmatprep.subr.mxu0 0.0
    %1784 = vmatpush1.msra.mxu0 0.0
    %1785 = vmatprep.subr.mxu0 0.0
    %1786 = vmatpush1.msra.mxu0 0.0
    %1787 = vmatprep.subr.mxu0 0.0
    %1788 = vmatpush1.msra.mxu0 0.0
    %1789 = vmatprep.subr.mxu0 0.0
    %1790 = vmatpush1.msra.mxu0 0.0
    %1791 = vmatprep.subr.mxu0 0.0
    %1792 = vmatpush1.msra.mxu0 0.0
    %1793 = vmatprep.subr.mxu0 0.0
    %1794 = vmatpush1.msra.mxu0 0.0
    %1795 = vmatprep.subr.mxu0 0.0
    %1796 = vmatpush1.msra.mxu0 0.0
    %1797 = vmatprep.subr.mxu0 0.0
    %1798 = vmatpush1.msra.mxu0 0.0
    %1799 = vmatprep.mubr.f32.mxu0 0.0
    %1800 = vmatmul.mubr.f32.gmra.mrb[0].mxu0 %v70
    %v1801 = vpop.f32.mrb[0].mxu0
    %v1802 = vadd.f32 %v51, %v1801
    %v1803 = vpop.f32.mrb[0].mxu0
    %1804 = vmatprep.mubr.f32.mxu0 0.0
    %1805 = vmatmul.mubr.f32.gmra.mrb[0].mxu0 %v73
    %v1806 = vpop.f32.mrb[0].mxu0
    %v1807 = vadd.f32 %v56, %v1806
    %v1808 = vpop.f32.mrb[0].mxu0
    %1809 = vmatprep.mubr.f32.mxu0 0.0
    %1810 = vmatmul.mubr.f32.gmra.mrb[0].mxu0 %v76
    %v1811 = vpop.f32.mrb[0].mxu0
    %v1812 = vadd.f32 %v61, %v1811
    %v1813 = vpop.f32.mrb[0].mxu0
    %1814 = vmatprep.mubr.f32.mxu0 0.0
    %1815 = vmatmul.mubr.f32.gmra.mrb[0].mxu0 %v79
    %v1816 = vpop.f32.mrb[0].mxu0
    %v1817 = vadd.f32 %v66, %v1816
    %v1818 = vpop.f32.mrb[0].mxu0
    %1819 = vdwg.mxu0
    %v1820 = vmul.f32 %v1802, 0.01
    %v1821 = vmul.f32 %v1807, 0.01
    %v1822 = vmul.f32 %v1812, 0.01
    %v1823 = vmul.f32 %v1817, 0.01
    %v1824 = vmax.f32 %v1802, %v1820
    %v1825 = vmax.f32 %v1807, %v1821
    %v1826 = vmax.f32 %v1812, %v1822
    %v1827 = vmax.f32 %v1817, %v1823
    %1828 = vmatprep.subr.mxu0 0.0
    %1829 = vmatpush1.msra.mxu0 %v1824
    %1830 = vmatprep.subr.mxu0 0.0
    %1831 = vmatpush1.msra.mxu0 %v1825
    %1832 = vmatprep.subr.mxu0 0.0
    %1833 = vmatpush1.msra.mxu0 %v1826
    %1834 = vmatprep.subr.mxu0 0.0
    %1835 = vmatpush1.msra.mxu0 %v1827
    %1836 = vmatprep.subr.mxu0 0.0
    %1837 = vmatpush1.msra.mxu0 0.0
    %1838 = vmatprep.subr.mxu0 0.0
    %1839 = vmatpush1.msra.mxu0 0.0
    %1840 = vmatprep.subr.mxu0 0.0
    %1841 = vmatpush1.msra.mxu0 0.0
    %1842 = vmatprep.subr.mxu0 0.0
    %1843 = vmatpush1.msra.mxu0 0.0
    %1844 = vmatprep.subr.mxu0 0.0
    %1845 = vmatpush1.msra.mxu0 0.0
    %1846 = vmatprep.subr.mxu0 0.0
    %1847 = vmatpush1.msra.mxu0 0.0
    %1848 = vmatprep.subr.mxu0 0.0
    %1849 = vmatpush1.msra.mxu0 0.0
    %1850 = vmatprep.subr.mxu0 0.0
    %1851 = vmatpush1.msra.mxu0 0.0
    %1852 = vmatprep.subr.mxu0 0.0
    %1853 = vmatpush1.msra.mxu0 0.0
    %1854 = vmatprep.subr.mxu0 0.0
    %1855 = vmatpush1.msra.mxu0 0.0
    %1856 = vmatprep.subr.mxu0 0.0
    %1857 = vmatpush1.msra.mxu0 0.0
    %1858 = vmatprep.subr.mxu0 0.0
    %1859 = vmatpush1.msra.mxu0 0.0
    %1860 = vmatprep.subr.mxu0 0.0
    %1861 = vmatpush1.msra.mxu0 0.0
    %1862 = vmatprep.subr.mxu0 0.0
    %1863 = vmatpush1.msra.mxu0 0.0
    %1864 = vmatprep.subr.mxu0 0.0
    %1865 = vmatpush1.msra.mxu0 0.0
    %1866 = vmatprep.subr.mxu0 0.0
    %1867 = vmatpush1.msra.mxu0 0.0
    %1868 = vmatprep.subr.mxu0 0.0
    %1869 = vmatpush1.msra.mxu0 0.0
    %1870 = vmatprep.subr.mxu0 0.0
    %1871 = vmatpush1.msra.mxu0 0.0
    %1872 = vmatprep.subr.mxu0 0.0
    %1873 = vmatpush1.msra.mxu0 0.0
    %1874 = vmatprep.subr.mxu0 0.0
    %1875 = vmatpush1.msra.mxu0 0.0
    %1876 = vmatprep.subr.mxu0 0.0
    %1877 = vmatpush1.msra.mxu0 0.0
    %1878 = vmatprep.subr.mxu0 0.0
    %1879 = vmatpush1.msra.mxu0 0.0
    %1880 = vmatprep.subr.mxu0 0.0
    %1881 = vmatpush1.msra.mxu0 0.0
    %1882 = vmatprep.subr.mxu0 0.0
    %1883 = vmatpush1.msra.mxu0 0.0
    %1884 = vmatprep.subr.mxu0 0.0
    %1885 = vmatpush1.msra.mxu0 0.0
    %1886 = vmatprep.subr.mxu0 0.0
    %1887 = vmatpush1.msra.mxu0 0.0
    %1888 = vmatprep.subr.mxu0 0.0
    %1889 = vmatpush1.msra.mxu0 0.0
    %1890 = vmatprep.subr.mxu0 0.0
    %1891 = vmatpush1.msra.mxu0 0.0
    %1892 = vmatprep.mubr.f32.mxu0 0.0
    %1893 = vmatmul.mubr.f32.gmra.mrb[0].mxu0 %v208
    %v1894 = vpop.f32.mrb[0].mxu0
    %v1895 = vadd.f32 %v189, %v1894
    %v1896 = vpop.f32.mrb[0].mxu0
    %1897 = vmatprep.mubr.f32.mxu0 0.0
    %1898 = vmatmul.mubr.f32.gmra.mrb[0].mxu0 %v211
    %v1899 = vpop.f32.mrb[0].mxu0
    %v1900 = vadd.f32 %v194, %v1899
    %v1901 = vpop.f32.mrb[0].mxu0
    %1902 = vmatprep.mubr.f32.mxu0 0.0
    %1903 = vmatmul.mubr.f32.gmra.mrb[0].mxu0 %v214
    %v1904 = vpop.f32.mrb[0].mxu0
    %v1905 = vadd.f32 %v199, %v1904
    %v1906 = vpop.f32.mrb[0].mxu0
    %1907 = vmatprep.mubr.f32.mxu0 0.0
    %1908 = vmatmul.mubr.f32.gmra.mrb[0].mxu0 %v217
    %v1909 = vpop.f32.mrb[0].mxu0
    %v1910 = vadd.f32 %v204, %v1909
    %v1911 = vpop.f32.mrb[0].mxu0
    %1912 = vdwg.mxu0
    %v1913 = vmul.f32 %v1895, 0.01
    %v1914 = vmul.f32 %v1900, 0.01
    %v1915 = vmul.f32 %v1905, 0.01
    %v1916 = vmul.f32 %v1910, 0.01
    %v1917 = vmax.f32 %v1895, %v1913
    %v1918 = vmax.f32 %v1900, %v1914
    %v1919 = vmax.f32 %v1905, %v1915
    %v1920 = vmax.f32 %v1910, %v1916
    %1921 = vmatprep.subr.mxu0 0.0
    %1922 = vmatpush1.msra.mxu0 %v1917
    %1923 = vmatprep.subr.mxu0 0.0
    %1924 = vmatpush1.msra.mxu0 %v1918
    %1925 = vmatprep.subr.mxu0 0.0
    %1926 = vmatpush1.msra.mxu0 %v1919
    %1927 = vmatprep.subr.mxu0 0.0
    %1928 = vmatpush1.msra.mxu0 %v1920
    %1929 = vmatprep.subr.mxu0 0.0
    %1930 = vmatpush1.msra.mxu0 0.0
    %1931 = vmatprep.subr.mxu0 0.0
    %1932 = vmatpush1.msra.mxu0 0.0
    %1933 = vmatprep.subr.mxu0 0.0
    %1934 = vmatpush1.msra.mxu0 0.0
    %1935 = vmatprep.subr.mxu0 0.0
    %1936 = vmatpush1.msra.mxu0 0.0
    %1937 = vmatprep.subr.mxu0 0.0
    %1938 = vmatpush1.msra.mxu0 0.0
    %1939 = vmatprep.subr.mxu0 0.0
    %1940 = vmatpush1.msra.mxu0 0.0
    %1941 = vmatprep.subr.mxu0 0.0
    %1942 = vmatpush1.msra.mxu0 0.0
    %1943 = vmatprep.subr.mxu0 0.0
    %1944 = vmatpush1.msra.mxu0 0.0
    %1945 = vmatprep.subr.mxu0 0.0
    %1946 = vmatpush1.msra.mxu0 0.0
    %1947 = vmatprep.subr.mxu0 0.0
    %1948 = vmatpush1.msra.mxu0 0.0
    %1949 = vmatprep.subr.mxu0 0.0
    %1950 = vmatpush1.msra.mxu0 0.0
    %1951 = vmatprep.subr.mxu0 0.0
    %1952 = vmatpush1.msra.mxu0 0.0
    %1953 = vmatprep.subr.mxu0 0.0
    %1954 = vmatpush1.msra.mxu0 0.0
    %1955 = vmatprep.subr.mxu0 0.0
    %1956 = vmatpush1.msra.mxu0 0.0
    %1957 = vmatprep.subr.mxu0 0.0
    %1958 = vmatpush1.msra.mxu0 0.0
    %1959 = vmatprep.subr.mxu0 0.0
    %1960 = vmatpush1.msra.mxu0 0.0
    %1961 = vmatprep.subr.mxu0 0.0
    %1962 = vmatpush1.msra.mxu0 0.0
    %1963 = vmatprep.subr.mxu0 0.0
    %1964 = vmatpush1.msra.mxu0 0.0
    %1965 = vmatprep.subr.mxu0 0.0
    %1966 = vmatpush1.msra.mxu0 0.0
    %1967 = vmatprep.subr.mxu0 0.0
    %1968 = vmatpush1.msra.mxu0 0.0
    %1969 = vmatprep.subr.mxu0 0.0
    %1970 = vmatpush1.msra.mxu0 0.0
    %1971 = vmatprep.subr.mxu0 0.0
    %1972 = vmatpush1.msra.mxu0 0.0
    %1973 = vmatprep.subr.mxu0 0.0
    %1974 = vmatpush1.msra.mxu0 0.0
    %1975 = vmatprep.subr.mxu0 0.0
    %1976 = vmatpush1.msra.mxu0 0.0
    %1977 = vmatprep.subr.mxu0 0.0
    %1978 = vmatpush1.msra.mxu0 0.0
    %1979 = vmatprep.subr.mxu0 0.0
    %1980 = vmatpush1.msra.mxu0 0.0
    %1981 = vmatprep.subr.mxu0 0.0
    %1982 = vmatpush1.msra.mxu0 0.0
    %1983 = vmatprep.subr.mxu0 0.0
    %1984 = vmatpush1.msra.mxu0 0.0
    %1985 = vmatprep.mubr.f32.mxu0 0.0
    %1986 = vmatmul.mubr.f32.gmra.mrb[0].mxu0 %v324
    %v1987 = vpop.f32.mrb[0].mxu0
    %v1988 = vadd.f32 %v322, %v1987
    %v1989 = vpop.f32.mrb[0].mxu0
    %1990 = vdwg.mxu0
    %v1991 = vmul.f32 %v1988, 0.01
    %v1992 = vmax.f32 %v1988, %v1991
    %s1993 = scalar_lea.vmem %s0, 72
    %v1994 = vld [vmem:[%s1993] sm:$0xff]
    %v1995 = vld [vmem:[%s1993 + $0x8] sm:$0xff]
    %v1996 = vld [vmem:[%s1993 + $0x10] sm:$0xf]
    %v1998 = vsel %vm81, %v1996, 0
    %2000 = vmatprep.subr.mxu0 0.0
    %2001 = vmatpush1.msra.mxu0 %v1994
    %2002 = vmatprep.subr.mxu0 0.0
    %2003 = vmatpush1.msra.mxu0 %v1995
    %2004 = vmatprep.subr.mxu0 0.0
    %2005 = vmatpush1.msra.mxu0 %v1998
    %2006 = vmatprep.subr.mxu0 0.0
    %2007 = vmatpush1.msra.mxu0 0.0
    %2008 = vmatprep.subr.mxu0 0.0
    %2009 = vmatpush1.msra.mxu0 0.0
    %2010 = vmatprep.subr.mxu0 0.0
    %2011 = vmatpush1.msra.mxu0 0.0
    %2012 = vmatprep.subr.mxu0 0.0
    %2013 = vmatpush1.msra.mxu0 0.0
    %2014 = vmatprep.subr.mxu0 0.0
    %2015 = vmatpush1.msra.mxu0 0.0
    %2016 = vmatprep.subr.mxu0 0.0
    %2017 = vmatpush1.msra.mxu0 0.0
    %2018 = vmatprep.subr.mxu0 0.0
    %2019 = vmatpush1.msra.mxu0 0.0
    %2020 = vmatprep.subr.mxu0 0.0
    %2021 = vmatpush1.msra.mxu0 0.0
    %2022 = vmatprep.subr.mxu0 0.0
    %2023 = vmatpush1.msra.mxu0 0.0
    %2024 = vmatprep.subr.mxu0 0.0
    %2025 = vmatpush1.msra.mxu0 0.0
    %2026 = vmatprep.subr.mxu0 0.0
    %2027 = vmatpush1.msra.mxu0 0.0
    %2028 = vmatprep.subr.mxu0 0.0
    %2029 = vmatpush1.msra.mxu0 0.0
    %2030 = vmatprep.subr.mxu0 0.0
    %2031 = vmatpush1.msra.mxu0 0.0
    %2032 = vmatprep.subr.mxu0 0.0
    %2033 = vmatpush1.msra.mxu0 0.0
    %2034 = vmatprep.subr.mxu0 0.0
    %2035 = vmatpush1.msra.mxu0 0.0
    %2036 = vmatprep.subr.mxu0 0.0
    %2037 = vmatpush1.msra.mxu0 0.0
    %2038 = vmatprep.subr.mxu0 0.0
    %2039 = vmatpush1.msra.mxu0 0.0
    %2040 = vmatprep.subr.mxu0 0.0
    %2041 = vmatpush1.msra.mxu0 0.0
    %2042 = vmatprep.subr.mxu0 0.0
    %2043 = vmatpush1.msra.mxu0 0.0
    %2044 = vmatprep.subr.mxu0 0.0
    %2045 = vmatpush1.msra.mxu0 0.0
    %2046 = vmatprep.subr.mxu0 0.0
    %2047 = vmatpush1.msra.mxu0 0.0
    %2048 = vmatprep.subr.mxu0 0.0
    %2049 = vmatpush1.msra.mxu0 0.0
    %2050 = vmatprep.subr.mxu0 0.0
    %2051 = vmatpush1.msra.mxu0 0.0
    %2052 = vmatprep.subr.mxu0 0.0
    %2053 = vmatpush1.msra.mxu0 0.0
    %2054 = vmatprep.subr.mxu0 0.0
    %2055 = vmatpush1.msra.mxu0 0.0
    %2056 = vmatprep.subr.mxu0 0.0
    %2057 = vmatpush1.msra.mxu0 0.0
    %2058 = vmatprep.subr.mxu0 0.0
    %2059 = vmatpush1.msra.mxu0 0.0
    %2060 = vmatprep.subr.mxu0 0.0
    %2061 = vmatpush1.msra.mxu0 0.0
    %2062 = vmatprep.subr.mxu0 0.0
    %2063 = vmatpush1.msra.mxu0 0.0
    %2064 = vmatprep.mubr.f32.mxu0 0.0
    %2065 = vmatmul.mubr.f32.gmra.mrb[0].mxu0 %v70
    %v2066 = vpop.f32.mrb[0].mxu0
    %v2067 = vadd.f32 %v51, %v2066
    %v2068 = vpop.f32.mrb[0].mxu0
    %2069 = vmatprep.mubr.f32.mxu0 0.0
    %2070 = vmatmul.mubr.f32.gmra.mrb[0].mxu0 %v73
    %v2071 = vpop.f32.mrb[0].mxu0
    %v2072 = vadd.f32 %v56, %v2071
    %v2073 = vpop.f32.mrb[0].mxu0
    %2074 = vmatprep.mubr.f32.mxu0 0.0
    %2075 = vmatmul.mubr.f32.gmra.mrb[0].mxu0 %v76
    %v2076 = vpop.f32.mrb[0].mxu0
    %v2077 = vadd.f32 %v61, %v2076
    %v2078 = vpop.f32.mrb[0].mxu0
    %2079 = vmatprep.mubr.f32.mxu0 0.0
    %2080 = vmatmul.mubr.f32.gmra.mrb[0].mxu0 %v79
    %v2081 = vpop.f32.mrb[0].mxu0
    %v2082 = vadd.f32 %v66, %v2081
    %v2083 = vpop.f32.mrb[0].mxu0
    %2084 = vdwg.mxu0
    %v2085 = vmul.f32 %v2067, 0.01
    %v2086 = vmul.f32 %v2072, 0.01
    %v2087 = vmul.f32 %v2077, 0.01
    %v2088 = vmul.f32 %v2082, 0.01
    %v2089 = vmax.f32 %v2067, %v2085
    %v2090 = vmax.f32 %v2072, %v2086
    %v2091 = vmax.f32 %v2077, %v2087
    %v2092 = vmax.f32 %v2082, %v2088
    %2093 = vmatprep.subr.mxu0 0.0
    %2094 = vmatpush1.msra.mxu0 %v2089
    %2095 = vmatprep.subr.mxu0 0.0
    %2096 = vmatpush1.msra.mxu0 %v2090
    %2097 = vmatprep.subr.mxu0 0.0
    %2098 = vmatpush1.msra.mxu0 %v2091
    %2099 = vmatprep.subr.mxu0 0.0
    %2100 = vmatpush1.msra.mxu0 %v2092
    %2101 = vmatprep.subr.mxu0 0.0
    %2102 = vmatpush1.msra.mxu0 0.0
    %2103 = vmatprep.subr.mxu0 0.0
    %2104 = vmatpush1.msra.mxu0 0.0
    %2105 = vmatprep.subr.mxu0 0.0
    %2106 = vmatpush1.msra.mxu0 0.0
    %2107 = vmatprep.subr.mxu0 0.0
    %2108 = vmatpush1.msra.mxu0 0.0
    %2109 = vmatprep.subr.mxu0 0.0
    %2110 = vmatpush1.msra.mxu0 0.0
    %2111 = vmatprep.subr.mxu0 0.0
    %2112 = vmatpush1.msra.mxu0 0.0
    %2113 = vmatprep.subr.mxu0 0.0
    %2114 = vmatpush1.msra.mxu0 0.0
    %2115 = vmatprep.subr.mxu0 0.0
    %2116 = vmatpush1.msra.mxu0 0.0
    %2117 = vmatprep.subr.mxu0 0.0
    %2118 = vmatpush1.msra.mxu0 0.0
    %2119 = vmatprep.subr.mxu0 0.0
    %2120 = vmatpush1.msra.mxu0 0.0
    %2121 = vmatprep.subr.mxu0 0.0
    %2122 = vmatpush1.msra.mxu0 0.0
    %2123 = vmatprep.subr.mxu0 0.0
    %2124 = vmatpush1.msra.mxu0 0.0
    %2125 = vmatprep.subr.mxu0 0.0
    %2126 = vmatpush1.msra.mxu0 0.0
    %2127 = vmatprep.subr.mxu0 0.0
    %2128 = vmatpush1.msra.mxu0 0.0
    %2129 = vmatprep.subr.mxu0 0.0
    %2130 = vmatpush1.msra.mxu0 0.0
    %2131 = vmatprep.subr.mxu0 0.0
    %2132 = vmatpush1.msra.mxu0 0.0
    %2133 = vmatprep.subr.mxu0 0.0
    %2134 = vmatpush1.msra.mxu0 0.0
    %2135 = vmatprep.subr.mxu0 0.0
    %2136 = vmatpush1.msra.mxu0 0.0
    %2137 = vmatprep.subr.mxu0 0.0
    %2138 = vmatpush1.msra.mxu0 0.0
    %2139 = vmatprep.subr.mxu0 0.0
    %2140 = vmatpush1.msra.mxu0 0.0
    %2141 = vmatprep.subr.mxu0 0.0
    %2142 = vmatpush1.msra.mxu0 0.0
    %2143 = vmatprep.subr.mxu0 0.0
    %2144 = vmatpush1.msra.mxu0 0.0
    %2145 = vmatprep.subr.mxu0 0.0
    %2146 = vmatpush1.msra.mxu0 0.0
    %2147 = vmatprep.subr.mxu0 0.0
    %2148 = vmatpush1.msra.mxu0 0.0
    %2149 = vmatprep.subr.mxu0 0.0
    %2150 = vmatpush1.msra.mxu0 0.0
    %2151 = vmatprep.subr.mxu0 0.0
    %2152 = vmatpush1.msra.mxu0 0.0
    %2153 = vmatprep.subr.mxu0 0.0
    %2154 = vmatpush1.msra.mxu0 0.0
    %2155 = vmatprep.subr.mxu0 0.0
    %2156 = vmatpush1.msra.mxu0 0.0
    %2157 = vmatprep.mubr.f32.mxu0 0.0
    %2158 = vmatmul.mubr.f32.gmra.mrb[0].mxu0 %v208
    %v2159 = vpop.f32.mrb[0].mxu0
    %v2160 = vadd.f32 %v189, %v2159
    %v2161 = vpop.f32.mrb[0].mxu0
    %2162 = vmatprep.mubr.f32.mxu0 0.0
    %2163 = vmatmul.mubr.f32.gmra.mrb[0].mxu0 %v211
    %v2164 = vpop.f32.mrb[0].mxu0
    %v2165 = vadd.f32 %v194, %v2164
    %v2166 = vpop.f32.mrb[0].mxu0
    %2167 = vmatprep.mubr.f32.mxu0 0.0
    %2168 = vmatmul.mubr.f32.gmra.mrb[0].mxu0 %v214
    %v2169 = vpop.f32.mrb[0].mxu0
    %v2170 = vadd.f32 %v199, %v2169
    %v2171 = vpop.f32.mrb[0].mxu0
    %2172 = vmatprep.mubr.f32.mxu0 0.0
    %2173 = vmatmul.mubr.f32.gmra.mrb[0].mxu0 %v217
    %v2174 = vpop.f32.mrb[0].mxu0
    %v2175 = vadd.f32 %v204, %v2174
    %v2176 = vpop.f32.mrb[0].mxu0
    %2177 = vdwg.mxu0
    %v2178 = vmul.f32 %v2160, 0.01
    %v2179 = vmul.f32 %v2165, 0.01
    %v2180 = vmul.f32 %v2170, 0.01
    %v2181 = vmul.f32 %v2175, 0.01
    %v2182 = vmax.f32 %v2160, %v2178
    %v2183 = vmax.f32 %v2165, %v2179
    %v2184 = vmax.f32 %v2170, %v2180
    %v2185 = vmax.f32 %v2175, %v2181
    %2186 = vmatprep.subr.mxu0 0.0
    %2187 = vmatpush1.msra.mxu0 %v2182
    %2188 = vmatprep.subr.mxu0 0.0
    %2189 = vmatpush1.msra.mxu0 %v2183
    %2190 = vmatprep.subr.mxu0 0.0
    %2191 = vmatpush1.msra.mxu0 %v2184
    %2192 = vmatprep.subr.mxu0 0.0
    %2193 = vmatpush1.msra.mxu0 %v2185
    %2194 = vmatprep.subr.mxu0 0.0
    %2195 = vmatpush1.msra.mxu0 0.0
    %2196 = vmatprep.subr.mxu0 0.0
    %2197 = vmatpush1.msra.mxu0 0.0
    %2198 = vmatprep.subr.mxu0 0.0
    %2199 = vmatpush1.msra.mxu0 0.0
    %2200 = vmatprep.subr.mxu0 0.0
    %2201 = vmatpush1.msra.mxu0 0.0
    %2202 = vmatprep.subr.mxu0 0.0
    %2203 = vmatpush1.msra.mxu0 0.0
    %2204 = vmatprep.subr.mxu0 0.0
    %2205 = vmatpush1.msra.mxu0 0.0
    %2206 = vmatprep.subr.mxu0 0.0
    %2207 = vmatpush1.msra.mxu0 0.0
    %2208 = vmatprep.subr.mxu0 0.0
    %2209 = vmatpush1.msra.mxu0 0.0
    %2210 = vmatprep.subr.mxu0 0.0
    %2211 = vmatpush1.msra.mxu0 0.0
    %2212 = vmatprep.subr.mxu0 0.0
    %2213 = vmatpush1.msra.mxu0 0.0
    %2214 = vmatprep.subr.mxu0 0.0
    %2215 = vmatpush1.msra.mxu0 0.0
    %2216 = vmatprep.subr.mxu0 0.0
    %2217 = vmatpush1.msra.mxu0 0.0
    %2218 = vmatprep.subr.mxu0 0.0
    %2219 = vmatpush1.msra.mxu0 0.0
    %2220 = vmatprep.subr.mxu0 0.0
    %2221 = vmatpush1.msra.mxu0 0.0
    %2222 = vmatprep.subr.mxu0 0.0
    %2223 = vmatpush1.msra.mxu0 0.0
    %2224 = vmatprep.subr.mxu0 0.0
    %2225 = vmatpush1.msra.mxu0 0.0
    %2226 = vmatprep.subr.mxu0 0.0
    %2227 = vmatpush1.msra.mxu0 0.0
    %2228 = vmatprep.subr.mxu0 0.0
    %2229 = vmatpush1.msra.mxu0 0.0
    %2230 = vmatprep.subr.mxu0 0.0
    %2231 = vmatpush1.msra.mxu0 0.0
    %2232 = vmatprep.subr.mxu0 0.0
    %2233 = vmatpush1.msra.mxu0 0.0
    %2234 = vmatprep.subr.mxu0 0.0
    %2235 = vmatpush1.msra.mxu0 0.0
    %2236 = vmatprep.subr.mxu0 0.0
    %2237 = vmatpush1.msra.mxu0 0.0
    %2238 = vmatprep.subr.mxu0 0.0
    %2239 = vmatpush1.msra.mxu0 0.0
    %2240 = vmatprep.subr.mxu0 0.0
    %2241 = vmatpush1.msra.mxu0 0.0
    %2242 = vmatprep.subr.mxu0 0.0
    %2243 = vmatpush1.msra.mxu0 0.0
    %2244 = vmatprep.subr.mxu0 0.0
    %2245 = vmatpush1.msra.mxu0 0.0
    %2246 = vmatprep.subr.mxu0 0.0
    %2247 = vmatpush1.msra.mxu0 0.0
    %2248 = vmatprep.subr.mxu0 0.0
    %2249 = vmatpush1.msra.mxu0 0.0
    %2250 = vmatprep.mubr.f32.mxu0 0.0
    %2251 = vmatmul.mubr.f32.gmra.mrb[0].mxu0 %v324
    %v2252 = vpop.f32.mrb[0].mxu0
    %v2253 = vadd.f32 %v322, %v2252
    %v2254 = vpop.f32.mrb[0].mxu0
    %2255 = vdwg.mxu0
    %v2256 = vmul.f32 %v2253, 0.01
    %v2257 = vmax.f32 %v2253, %v2256
    %v2258 = vsub.f32 %v1992, %v2257
    %v2259 = vadd.f32 %v1727, %v2258
    %s2260 = scalar_lea.vmem %s1, 96
    %v2261 = vld [vmem:[%s2260] sm:$0xff]
    %v2262 = vld [vmem:[%s2260 + $0x8] sm:$0xff]
    %v2263 = vld [vmem:[%s2260 + $0x10] sm:$0xf]
    %v2265 = vsel %vm81, %v2263, 0
    %2267 = vmatprep.subr.mxu0 0.0
    %2268 = vmatpush1.msra.mxu0 %v2261
    %2269 = vmatprep.subr.mxu0 0.0
    %2270 = vmatpush1.msra.mxu0 %v2262
    %2271 = vmatprep.subr.mxu0 0.0
    %2272 = vmatpush1.msra.mxu0 %v2265
    %2273 = vmatprep.subr.mxu0 0.0
    %2274 = vmatpush1.msra.mxu0 0.0
    %2275 = vmatprep.subr.mxu0 0.0
    %2276 = vmatpush1.msra.mxu0 0.0
    %2277 = vmatprep.subr.mxu0 0.0
    %2278 = vmatpush1.msra.mxu0 0.0
    %2279 = vmatprep.subr.mxu0 0.0
    %2280 = vmatpush1.msra.mxu0 0.0
    %2281 = vmatprep.subr.mxu0 0.0
    %2282 = vmatpush1.msra.mxu0 0.0
    %2283 = vmatprep.subr.mxu0 0.0
    %2284 = vmatpush1.msra.mxu0 0.0
    %2285 = vmatprep.subr.mxu0 0.0
    %2286 = vmatpush1.msra.mxu0 0.0
    %2287 = vmatprep.subr.mxu0 0.0
    %2288 = vmatpush1.msra.mxu0 0.0
    %2289 = vmatprep.subr.mxu0 0.0
    %2290 = vmatpush1.msra.mxu0 0.0
    %2291 = vmatprep.subr.mxu0 0.0
    %2292 = vmatpush1.msra.mxu0 0.0
    %2293 = vmatprep.subr.mxu0 0.0
    %2294 = vmatpush1.msra.mxu0 0.0
    %2295 = vmatprep.subr.mxu0 0.0
    %2296 = vmatpush1.msra.mxu0 0.0
    %2297 = vmatprep.subr.mxu0 0.0
    %2298 = vmatpush1.msra.mxu0 0.0
    %2299 = vmatprep.subr.mxu0 0.0
    %2300 = vmatpush1.msra.mxu0 0.0
    %2301 = vmatprep.subr.mxu0 0.0
    %2302 = vmatpush1.msra.mxu0 0.0
    %2303 = vmatprep.subr.mxu0 0.0
    %2304 = vmatpush1.msra.mxu0 0.0
    %2305 = vmatprep.subr.mxu0 0.0
    %2306 = vmatpush1.msra.mxu0 0.0
    %2307 = vmatprep.subr.mxu0 0.0
    %2308 = vmatpush1.msra.mxu0 0.0
    %2309 = vmatprep.subr.mxu0 0.0
    %2310 = vmatpush1.msra.mxu0 0.0
    %2311 = vmatprep.subr.mxu0 0.0
    %2312 = vmatpush1.msra.mxu0 0.0
    %2313 = vmatprep.subr.mxu0 0.0
    %2314 = vmatpush1.msra.mxu0 0.0
    %2315 = vmatprep.subr.mxu0 0.0
    %2316 = vmatpush1.msra.mxu0 0.0
    %2317 = vmatprep.subr.mxu0 0.0
    %2318 = vmatpush1.msra.mxu0 0.0
    %2319 = vmatprep.subr.mxu0 0.0
    %2320 = vmatpush1.msra.mxu0 0.0
    %2321 = vmatprep.subr.mxu0 0.0
    %2322 = vmatpush1.msra.mxu0 0.0
    %2323 = vmatprep.subr.mxu0 0.0
    %2324 = vmatpush1.msra.mxu0 0.0
    %2325 = vmatprep.subr.mxu0 0.0
    %2326 = vmatpush1.msra.mxu0 0.0
    %2327 = vmatprep.subr.mxu0 0.0
    %2328 = vmatpush1.msra.mxu0 0.0
    %2329 = vmatprep.subr.mxu0 0.0
    %2330 = vmatpush1.msra.mxu0 0.0
    %2331 = vmatprep.mubr.f32.mxu0 0.0
    %2332 = vmatmul.mubr.f32.gmra.mrb[0].mxu0 %v70
    %v2333 = vpop.f32.mrb[0].mxu0
    %v2334 = vadd.f32 %v51, %v2333
    %v2335 = vpop.f32.mrb[0].mxu0
    %2336 = vmatprep.mubr.f32.mxu0 0.0
    %2337 = vmatmul.mubr.f32.gmra.mrb[0].mxu0 %v73
    %v2338 = vpop.f32.mrb[0].mxu0
    %v2339 = vadd.f32 %v56, %v2338
    %v2340 = vpop.f32.mrb[0].mxu0
    %2341 = vmatprep.mubr.f32.mxu0 0.0
    %2342 = vmatmul.mubr.f32.gmra.mrb[0].mxu0 %v76
    %v2343 = vpop.f32.mrb[0].mxu0
    %v2344 = vadd.f32 %v61, %v2343
    %v2345 = vpop.f32.mrb[0].mxu0
    %2346 = vmatprep.mubr.f32.mxu0 0.0
    %2347 = vmatmul.mubr.f32.gmra.mrb[0].mxu0 %v79
    %v2348 = vpop.f32.mrb[0].mxu0
    %v2349 = vadd.f32 %v66, %v2348
    %v2350 = vpop.f32.mrb[0].mxu0
    %2351 = vdwg.mxu0
    %v2352 = vmul.f32 %v2334, 0.01
    %v2353 = vmul.f32 %v2339, 0.01
    %v2354 = vmul.f32 %v2344, 0.01
    %v2355 = vmul.f32 %v2349, 0.01
    %v2356 = vmax.f32 %v2334, %v2352
    %v2357 = vmax.f32 %v2339, %v2353
    %v2358 = vmax.f32 %v2344, %v2354
    %v2359 = vmax.f32 %v2349, %v2355
    %2360 = vmatprep.subr.mxu0 0.0
    %2361 = vmatpush1.msra.mxu0 %v2356
    %2362 = vmatprep.subr.mxu0 0.0
    %2363 = vmatpush1.msra.mxu0 %v2357
    %2364 = vmatprep.subr.mxu0 0.0
    %2365 = vmatpush1.msra.mxu0 %v2358
    %2366 = vmatprep.subr.mxu0 0.0
    %2367 = vmatpush1.msra.mxu0 %v2359
    %2368 = vmatprep.subr.mxu0 0.0
    %2369 = vmatpush1.msra.mxu0 0.0
    %2370 = vmatprep.subr.mxu0 0.0
    %2371 = vmatpush1.msra.mxu0 0.0
    %2372 = vmatprep.subr.mxu0 0.0
    %2373 = vmatpush1.msra.mxu0 0.0
    %2374 = vmatprep.subr.mxu0 0.0
    %2375 = vmatpush1.msra.mxu0 0.0
    %2376 = vmatprep.subr.mxu0 0.0
    %2377 = vmatpush1.msra.mxu0 0.0
    %2378 = vmatprep.subr.mxu0 0.0
    %2379 = vmatpush1.msra.mxu0 0.0
    %2380 = vmatprep.subr.mxu0 0.0
    %2381 = vmatpush1.msra.mxu0 0.0
    %2382 = vmatprep.subr.mxu0 0.0
    %2383 = vmatpush1.msra.mxu0 0.0
    %2384 = vmatprep.subr.mxu0 0.0
    %2385 = vmatpush1.msra.mxu0 0.0
    %2386 = vmatprep.subr.mxu0 0.0
    %2387 = vmatpush1.msra.mxu0 0.0
    %2388 = vmatprep.subr.mxu0 0.0
    %2389 = vmatpush1.msra.mxu0 0.0
    %2390 = vmatprep.subr.mxu0 0.0
    %2391 = vmatpush1.msra.mxu0 0.0
    %2392 = vmatprep.subr.mxu0 0.0
    %2393 = vmatpush1.msra.mxu0 0.0
    %2394 = vmatprep.subr.mxu0 0.0
    %2395 = vmatpush1.msra.mxu0 0.0
    %2396 = vmatprep.subr.mxu0 0.0
    %2397 = vmatpush1.msra.mxu0 0.0
    %2398 = vmatprep.subr.mxu0 0.0
    %2399 = vmatpush1.msra.mxu0 0.0
    %2400 = vmatprep.subr.mxu0 0.0
    %2401 = vmatpush1.msra.mxu0 0.0
    %2402 = vmatprep.subr.mxu0 0.0
    %2403 = vmatpush1.msra.mxu0 0.0
    %2404 = vmatprep.subr.mxu0 0.0
    %2405 = vmatpush1.msra.mxu0 0.0
    %2406 = vmatprep.subr.mxu0 0.0
    %2407 = vmatpush1.msra.mxu0 0.0
    %2408 = vmatprep.subr.mxu0 0.0
    %2409 = vmatpush1.msra.mxu0 0.0
    %2410 = vmatprep.subr.mxu0 0.0
    %2411 = vmatpush1.msra.mxu0 0.0
    %2412 = vmatprep.subr.mxu0 0.0
    %2413 = vmatpush1.msra.mxu0 0.0
    %2414 = vmatprep.subr.mxu0 0.0
    %2415 = vmatpush1.msra.mxu0 0.0
    %2416 = vmatprep.subr.mxu0 0.0
    %2417 = vmatpush1.msra.mxu0 0.0
    %2418 = vmatprep.subr.mxu0 0.0
    %2419 = vmatpush1.msra.mxu0 0.0
    %2420 = vmatprep.subr.mxu0 0.0
    %2421 = vmatpush1.msra.mxu0 0.0
    %2422 = vmatprep.subr.mxu0 0.0
    %2423 = vmatpush1.msra.mxu0 0.0
    %2424 = vmatprep.mubr.f32.mxu0 0.0
    %2425 = vmatmul.mubr.f32.gmra.mrb[0].mxu0 %v208
    %v2426 = vpop.f32.mrb[0].mxu0
    %v2427 = vadd.f32 %v189, %v2426
    %v2428 = vpop.f32.mrb[0].mxu0
    %2429 = vmatprep.mubr.f32.mxu0 0.0
    %2430 = vmatmul.mubr.f32.gmra.mrb[0].mxu0 %v211
    %v2431 = vpop.f32.mrb[0].mxu0
    %v2432 = vadd.f32 %v194, %v2431
    %v2433 = vpop.f32.mrb[0].mxu0
    %2434 = vmatprep.mubr.f32.mxu0 0.0
    %2435 = vmatmul.mubr.f32.gmra.mrb[0].mxu0 %v214
    %v2436 = vpop.f32.mrb[0].mxu0
    %v2437 = vadd.f32 %v199, %v2436
    %v2438 = vpop.f32.mrb[0].mxu0
    %2439 = vmatprep.mubr.f32.mxu0 0.0
    %2440 = vmatmul.mubr.f32.gmra.mrb[0].mxu0 %v217
    %v2441 = vpop.f32.mrb[0].mxu0
    %v2442 = vadd.f32 %v204, %v2441
    %v2443 = vpop.f32.mrb[0].mxu0
    %2444 = vdwg.mxu0
    %v2445 = vmul.f32 %v2427, 0.01
    %v2446 = vmul.f32 %v2432, 0.01
    %v2447 = vmul.f32 %v2437, 0.01
    %v2448 = vmul.f32 %v2442, 0.01
    %v2449 = vmax.f32 %v2427, %v2445
    %v2450 = vmax.f32 %v2432, %v2446
    %v2451 = vmax.f32 %v2437, %v2447
    %v2452 = vmax.f32 %v2442, %v2448
    %2453 = vmatprep.subr.mxu0 0.0
    %2454 = vmatpush1.msra.mxu0 %v2449
    %2455 = vmatprep.subr.mxu0 0.0
    %2456 = vmatpush1.msra.mxu0 %v2450
    %2457 = vmatprep.subr.mxu0 0.0
    %2458 = vmatpush1.msra.mxu0 %v2451
    %2459 = vmatprep.subr.mxu0 0.0
    %2460 = vmatpush1.msra.mxu0 %v2452
    %2461 = vmatprep.subr.mxu0 0.0
    %2462 = vmatpush1.msra.mxu0 0.0
    %2463 = vmatprep.subr.mxu0 0.0
    %2464 = vmatpush1.msra.mxu0 0.0
    %2465 = vmatprep.subr.mxu0 0.0
    %2466 = vmatpush1.msra.mxu0 0.0
    %2467 = vmatprep.subr.mxu0 0.0
    %2468 = vmatpush1.msra.mxu0 0.0
    %2469 = vmatprep.subr.mxu0 0.0
    %2470 = vmatpush1.msra.mxu0 0.0
    %2471 = vmatprep.subr.mxu0 0.0
    %2472 = vmatpush1.msra.mxu0 0.0
    %2473 = vmatprep.subr.mxu0 0.0
    %2474 = vmatpush1.msra.mxu0 0.0
    %2475 = vmatprep.subr.mxu0 0.0
    %2476 = vmatpush1.msra.mxu0 0.0
    %2477 = vmatprep.subr.mxu0 0.0
    %2478 = vmatpush1.msra.mxu0 0.0
    %2479 = vmatprep.subr.mxu0 0.0
    %2480 = vmatpush1.msra.mxu0 0.0
    %2481 = vmatprep.subr.mxu0 0.0
    %2482 = vmatpush1.msra.mxu0 0.0
    %2483 = vmatprep.subr.mxu0 0.0
    %2484 = vmatpush1.msra.mxu0 0.0
    %2485 = vmatprep.subr.mxu0 0.0
    %2486 = vmatpush1.msra.mxu0 0.0
    %2487 = vmatprep.subr.mxu0 0.0
    %2488 = vmatpush1.msra.mxu0 0.0
    %2489 = vmatprep.subr.mxu0 0.0
    %2490 = vmatpush1.msra.mxu0 0.0
    %2491 = vmatprep.subr.mxu0 0.0
    %2492 = vmatpush1.msra.mxu0 0.0
    %2493 = vmatprep.subr.mxu0 0.0
    %2494 = vmatpush1.msra.mxu0 0.0
    %2495 = vmatprep.subr.mxu0 0.0
    %2496 = vmatpush1.msra.mxu0 0.0
    %2497 = vmatprep.subr.mxu0 0.0
    %2498 = vmatpush1.msra.mxu0 0.0
    %2499 = vmatprep.subr.mxu0 0.0
    %2500 = vmatpush1.msra.mxu0 0.0
    %2501 = vmatprep.subr.mxu0 0.0
    %2502 = vmatpush1.msra.mxu0 0.0
    %2503 = vmatprep.subr.mxu0 0.0
    %2504 = vmatpush1.msra.mxu0 0.0
    %2505 = vmatprep.subr.mxu0 0.0
    %2506 = vmatpush1.msra.mxu0 0.0
    %2507 = vmatprep.subr.mxu0 0.0
    %2508 = vmatpush1.msra.mxu0 0.0
    %2509 = vmatprep.subr.mxu0 0.0
    %2510 = vmatpush1.msra.mxu0 0.0
    %2511 = vmatprep.subr.mxu0 0.0
    %2512 = vmatpush1.msra.mxu0 0.0
    %2513 = vmatprep.subr.mxu0 0.0
    %2514 = vmatpush1.msra.mxu0 0.0
    %2515 = vmatprep.subr.mxu0 0.0
    %2516 = vmatpush1.msra.mxu0 0.0
    %2517 = vmatprep.mubr.f32.mxu0 0.0
    %2518 = vmatmul.mubr.f32.gmra.mrb[0].mxu0 %v324
    %v2519 = vpop.f32.mrb[0].mxu0
    %v2520 = vadd.f32 %v322, %v2519
    %v2521 = vpop.f32.mrb[0].mxu0
    %2522 = vdwg.mxu0
    %v2523 = vmul.f32 %v2520, 0.01
    %v2524 = vmax.f32 %v2520, %v2523
    %s2525 = scalar_lea.vmem %s0, 96
    %v2526 = vld [vmem:[%s2525] sm:$0xff]
    %v2527 = vld [vmem:[%s2525 + $0x8] sm:$0xff]
    %v2528 = vld [vmem:[%s2525 + $0x10] sm:$0xf]
    %v2530 = vsel %vm81, %v2528, 0
    %2532 = vmatprep.subr.mxu0 0.0
    %2533 = vmatpush1.msra.mxu0 %v2526
    %2534 = vmatprep.subr.mxu0 0.0
    %2535 = vmatpush1.msra.mxu0 %v2527
    %2536 = vmatprep.subr.mxu0 0.0
    %2537 = vmatpush1.msra.mxu0 %v2530
    %2538 = vmatprep.subr.mxu0 0.0
    %2539 = vmatpush1.msra.mxu0 0.0
    %2540 = vmatprep.subr.mxu0 0.0
    %2541 = vmatpush1.msra.mxu0 0.0
    %2542 = vmatprep.subr.mxu0 0.0
    %2543 = vmatpush1.msra.mxu0 0.0
    %2544 = vmatprep.subr.mxu0 0.0
    %2545 = vmatpush1.msra.mxu0 0.0
    %2546 = vmatprep.subr.mxu0 0.0
    %2547 = vmatpush1.msra.mxu0 0.0
    %2548 = vmatprep.subr.mxu0 0.0
    %2549 = vmatpush1.msra.mxu0 0.0
    %2550 = vmatprep.subr.mxu0 0.0
    %2551 = vmatpush1.msra.mxu0 0.0
    %2552 = vmatprep.subr.mxu0 0.0
    %2553 = vmatpush1.msra.mxu0 0.0
    %2554 = vmatprep.subr.mxu0 0.0
    %2555 = vmatpush1.msra.mxu0 0.0
    %2556 = vmatprep.subr.mxu0 0.0
    %2557 = vmatpush1.msra.mxu0 0.0
    %2558 = vmatprep.subr.mxu0 0.0
    %2559 = vmatpush1.msra.mxu0 0.0
    %2560 = vmatprep.subr.mxu0 0.0
    %2561 = vmatpush1.msra.mxu0 0.0
    %2562 = vmatprep.subr.mxu0 0.0
    %2563 = vmatpush1.msra.mxu0 0.0
    %2564 = vmatprep.subr.mxu0 0.0
    %2565 = vmatpush1.msra.mxu0 0.0
    %2566 = vmatprep.subr.mxu0 0.0
    %2567 = vmatpush1.msra.mxu0 0.0
    %2568 = vmatprep.subr.mxu0 0.0
    %2569 = vmatpush1.msra.mxu0 0.0
    %2570 = vmatprep.subr.mxu0 0.0
    %2571 = vmatpush1.msra.mxu0 0.0
    %2572 = vmatprep.subr.mxu0 0.0
    %2573 = vmatpush1.msra.mxu0 0.0
    %2574 = vmatprep.subr.mxu0 0.0
    %2575 = vmatpush1.msra.mxu0 0.0
    %2576 = vmatprep.subr.mxu0 0.0
    %2577 = vmatpush1.msra.mxu0 0.0
    %2578 = vmatprep.subr.mxu0 0.0
    %2579 = vmatpush1.msra.mxu0 0.0
    %2580 = vmatprep.subr.mxu0 0.0
    %2581 = vmatpush1.msra.mxu0 0.0
    %2582 = vmatprep.subr.mxu0 0.0
    %2583 = vmatpush1.msra.mxu0 0.0
    %2584 = vmatprep.subr.mxu0 0.0
    %2585 = vmatpush1.msra.mxu0 0.0
    %2586 = vmatprep.subr.mxu0 0.0
    %2587 = vmatpush1.msra.mxu0 0.0
    %2588 = vmatprep.subr.mxu0 0.0
    %2589 = vmatpush1.msra.mxu0 0.0
    %2590 = vmatprep.subr.mxu0 0.0
    %2591 = vmatpush1.msra.mxu0 0.0
    %2592 = vmatprep.subr.mxu0 0.0
    %2593 = vmatpush1.msra.mxu0 0.0
    %2594 = vmatprep.subr.mxu0 0.0
    %2595 = vmatpush1.msra.mxu0 0.0
    %2596 = vmatprep.mubr.f32.mxu0 0.0
    %2597 = vmatmul.mubr.f32.gmra.mrb[0].mxu0 %v70
    %v2598 = vpop.f32.mrb[0].mxu0
    %v2599 = vadd.f32 %v51, %v2598
    %v2600 = vpop.f32.mrb[0].mxu0
    %2601 = vmatprep.mubr.f32.mxu0 0.0
    %2602 = vmatmul.mubr.f32.gmra.mrb[0].mxu0 %v73
    %v2603 = vpop.f32.mrb[0].mxu0
    %v2604 = vadd.f32 %v56, %v2603
    %v2605 = vpop.f32.mrb[0].mxu0
    %2606 = vmatprep.mubr.f32.mxu0 0.0
    %2607 = vmatmul.mubr.f32.gmra.mrb[0].mxu0 %v76
    %v2608 = vpop.f32.mrb[0].mxu0
    %v2609 = vadd.f32 %v61, %v2608
    %v2610 = vpop.f32.mrb[0].mxu0
    %2611 = vmatprep.mubr.f32.mxu0 0.0
    %2612 = vmatmul.mubr.f32.gmra.mrb[0].mxu0 %v79
    %v2613 = vpop.f32.mrb[0].mxu0
    %v2614 = vadd.f32 %v66, %v2613
    %v2615 = vpop.f32.mrb[0].mxu0
    %2616 = vdwg.mxu0
    %v2617 = vmul.f32 %v2599, 0.01
    %v2618 = vmul.f32 %v2604, 0.01
    %v2619 = vmul.f32 %v2609, 0.01
    %v2620 = vmul.f32 %v2614, 0.01
    %v2621 = vmax.f32 %v2599, %v2617
    %v2622 = vmax.f32 %v2604, %v2618
    %v2623 = vmax.f32 %v2609, %v2619
    %v2624 = vmax.f32 %v2614, %v2620
    %2625 = vmatprep.subr.mxu0 0.0
    %2626 = vmatpush1.msra.mxu0 %v2621
    %2627 = vmatprep.subr.mxu0 0.0
    %2628 = vmatpush1.msra.mxu0 %v2622
    %2629 = vmatprep.subr.mxu0 0.0
    %2630 = vmatpush1.msra.mxu0 %v2623
    %2631 = vmatprep.subr.mxu0 0.0
    %2632 = vmatpush1.msra.mxu0 %v2624
    %2633 = vmatprep.subr.mxu0 0.0
    %2634 = vmatpush1.msra.mxu0 0.0
    %2635 = vmatprep.subr.mxu0 0.0
    %2636 = vmatpush1.msra.mxu0 0.0
    %2637 = vmatprep.subr.mxu0 0.0
    %2638 = vmatpush1.msra.mxu0 0.0
    %2639 = vmatprep.subr.mxu0 0.0
    %2640 = vmatpush1.msra.mxu0 0.0
    %2641 = vmatprep.subr.mxu0 0.0
    %2642 = vmatpush1.msra.mxu0 0.0
    %2643 = vmatprep.subr.mxu0 0.0
    %2644 = vmatpush1.msra.mxu0 0.0
    %2645 = vmatprep.subr.mxu0 0.0
    %2646 = vmatpush1.msra.mxu0 0.0
    %2647 = vmatprep.subr.mxu0 0.0
    %2648 = vmatpush1.msra.mxu0 0.0
    %2649 = vmatprep.subr.mxu0 0.0
    %2650 = vmatpush1.msra.mxu0 0.0
    %2651 = vmatprep.subr.mxu0 0.0
    %2652 = vmatpush1.msra.mxu0 0.0
    %2653 = vmatprep.subr.mxu0 0.0
    %2654 = vmatpush1.msra.mxu0 0.0
    %2655 = vmatprep.subr.mxu0 0.0
    %2656 = vmatpush1.msra.mxu0 0.0
    %2657 = vmatprep.subr.mxu0 0.0
    %2658 = vmatpush1.msra.mxu0 0.0
    %2659 = vmatprep.subr.mxu0 0.0
    %2660 = vmatpush1.msra.mxu0 0.0
    %2661 = vmatprep.subr.mxu0 0.0
    %2662 = vmatpush1.msra.mxu0 0.0
    %2663 = vmatprep.subr.mxu0 0.0
    %2664 = vmatpush1.msra.mxu0 0.0
    %2665 = vmatprep.subr.mxu0 0.0
    %2666 = vmatpush1.msra.mxu0 0.0
    %2667 = vmatprep.subr.mxu0 0.0
    %2668 = vmatpush1.msra.mxu0 0.0
    %2669 = vmatprep.subr.mxu0 0.0
    %2670 = vmatpush1.msra.mxu0 0.0
    %2671 = vmatprep.subr.mxu0 0.0
    %2672 = vmatpush1.msra.mxu0 0.0
    %2673 = vmatprep.subr.mxu0 0.0
    %2674 = vmatpush1.msra.mxu0 0.0
    %2675 = vmatprep.subr.mxu0 0.0
    %2676 = vmatpush1.msra.mxu0 0.0
    %2677 = vmatprep.subr.mxu0 0.0
    %2678 = vmatpush1.msra.mxu0 0.0
    %2679 = vmatprep.subr.mxu0 0.0
    %2680 = vmatpush1.msra.mxu0 0.0
    %2681 = vmatprep.subr.mxu0 0.0
    %2682 = vmatpush1.msra.mxu0 0.0
    %2683 = vmatprep.subr.mxu0 0.0
    %2684 = vmatpush1.msra.mxu0 0.0
    %2685 = vmatprep.subr.mxu0 0.0
    %2686 = vmatpush1.msra.mxu0 0.0
    %2687 = vmatprep.subr.mxu0 0.0
    %2688 = vmatpush1.msra.mxu0 0.0
    %2689 = vmatprep.mubr.f32.mxu0 0.0
    %2690 = vmatmul.mubr.f32.gmra.mrb[0].mxu0 %v208
    %v2691 = vpop.f32.mrb[0].mxu0
    %v2692 = vadd.f32 %v189, %v2691
    %v2693 = vpop.f32.mrb[0].mxu0
    %2694 = vmatprep.mubr.f32.mxu0 0.0
    %2695 = vmatmul.mubr.f32.gmra.mrb[0].mxu0 %v211
    %v2696 = vpop.f32.mrb[0].mxu0
    %v2697 = vadd.f32 %v194, %v2696
    %v2698 = vpop.f32.mrb[0].mxu0
    %2699 = vmatprep.mubr.f32.mxu0 0.0
    %2700 = vmatmul.mubr.f32.gmra.mrb[0].mxu0 %v214
    %v2701 = vpop.f32.mrb[0].mxu0
    %v2702 = vadd.f32 %v199, %v2701
    %v2703 = vpop.f32.mrb[0].mxu0
    %2704 = vmatprep.mubr.f32.mxu0 0.0
    %2705 = vmatmul.mubr.f32.gmra.mrb[0].mxu0 %v217
    %v2706 = vpop.f32.mrb[0].mxu0
    %v2707 = vadd.f32 %v204, %v2706
    %v2708 = vpop.f32.mrb[0].mxu0
    %2709 = vdwg.mxu0
    %v2710 = vmul.f32 %v2692, 0.01
    %v2711 = vmul.f32 %v2697, 0.01
    %v2712 = vmul.f32 %v2702, 0.01
    %v2713 = vmul.f32 %v2707, 0.01
    %v2714 = vmax.f32 %v2692, %v2710
    %v2715 = vmax.f32 %v2697, %v2711
    %v2716 = vmax.f32 %v2702, %v2712
    %v2717 = vmax.f32 %v2707, %v2713
    %2718 = vmatprep.subr.mxu0 0.0
    %2719 = vmatpush1.msra.mxu0 %v2714
    %2720 = vmatprep.subr.mxu0 0.0
    %2721 = vmatpush1.msra.mxu0 %v2715
    %2722 = vmatprep.subr.mxu0 0.0
    %2723 = vmatpush1.msra.mxu0 %v2716
    %2724 = vmatprep.subr.mxu0 0.0
    %2725 = vmatpush1.msra.mxu0 %v2717
    %2726 = vmatprep.subr.mxu0 0.0
    %2727 = vmatpush1.msra.mxu0 0.0
    %2728 = vmatprep.subr.mxu0 0.0
    %2729 = vmatpush1.msra.mxu0 0.0
    %2730 = vmatprep.subr.mxu0 0.0
    %2731 = vmatpush1.msra.mxu0 0.0
    %2732 = vmatprep.subr.mxu0 0.0
    %2733 = vmatpush1.msra.mxu0 0.0
    %2734 = vmatprep.subr.mxu0 0.0
    %2735 = vmatpush1.msra.mxu0 0.0
    %2736 = vmatprep.subr.mxu0 0.0
    %2737 = vmatpush1.msra.mxu0 0.0
    %2738 = vmatprep.subr.mxu0 0.0
    %2739 = vmatpush1.msra.mxu0 0.0
    %2740 = vmatprep.subr.mxu0 0.0
    %2741 = vmatpush1.msra.mxu0 0.0
    %2742 = vmatprep.subr.mxu0 0.0
    %2743 = vmatpush1.msra.mxu0 0.0
    %2744 = vmatprep.subr.mxu0 0.0
    %2745 = vmatpush1.msra.mxu0 0.0
    %2746 = vmatprep.subr.mxu0 0.0
    %2747 = vmatpush1.msra.mxu0 0.0
    %2748 = vmatprep.subr.mxu0 0.0
    %2749 = vmatpush1.msra.mxu0 0.0
    %2750 = vmatprep.subr.mxu0 0.0
    %2751 = vmatpush1.msra.mxu0 0.0
    %2752 = vmatprep.subr.mxu0 0.0
    %2753 = vmatpush1.msra.mxu0 0.0
    %2754 = vmatprep.subr.mxu0 0.0
    %2755 = vmatpush1.msra.mxu0 0.0
    %2756 = vmatprep.subr.mxu0 0.0
    %2757 = vmatpush1.msra.mxu0 0.0
    %2758 = vmatprep.subr.mxu0 0.0
    %2759 = vmatpush1.msra.mxu0 0.0
    %2760 = vmatprep.subr.mxu0 0.0
    %2761 = vmatpush1.msra.mxu0 0.0
    %2762 = vmatprep.subr.mxu0 0.0
    %2763 = vmatpush1.msra.mxu0 0.0
    %2764 = vmatprep.subr.mxu0 0.0
    %2765 = vmatpush1.msra.mxu0 0.0
    %2766 = vmatprep.subr.mxu0 0.0
    %2767 = vmatpush1.msra.mxu0 0.0
    %2768 = vmatprep.subr.mxu0 0.0
    %2769 = vmatpush1.msra.mxu0 0.0
    %2770 = vmatprep.subr.mxu0 0.0
    %2771 = vmatpush1.msra.mxu0 0.0
    %2772 = vmatprep.subr.mxu0 0.0
    %2773 = vmatpush1.msra.mxu0 0.0
    %2774 = vmatprep.subr.mxu0 0.0
    %2775 = vmatpush1.msra.mxu0 0.0
    %2776 = vmatprep.subr.mxu0 0.0
    %2777 = vmatpush1.msra.mxu0 0.0
    %2778 = vmatprep.subr.mxu0 0.0
    %2779 = vmatpush1.msra.mxu0 0.0
    %2780 = vmatprep.subr.mxu0 0.0
    %2781 = vmatpush1.msra.mxu0 0.0
    %2782 = vmatprep.mubr.f32.mxu0 0.0
    %2783 = vmatmul.mubr.f32.gmra.mrb[0].mxu0 %v324
    %v2784 = vpop.f32.mrb[0].mxu0
    %v2785 = vadd.f32 %v322, %v2784
    %v2786 = vpop.f32.mrb[0].mxu0
    %2787 = vdwg.mxu0
    %v2788 = vmul.f32 %v2785, 0.01
    %v2789 = vmax.f32 %v2785, %v2788
    %v2790 = vsub.f32 %v2524, %v2789
    %v2791 = vadd.f32 %v2259, %v2790
    %s2792 = scalar_lea.vmem %s1, 120
    %v2793 = vld [vmem:[%s2792] sm:$0xff]
    %v2794 = vld [vmem:[%s2792 + $0x8] sm:$0xff]
    %v2795 = vld [vmem:[%s2792 + $0x10] sm:$0xf]
    %v2797 = vsel %vm81, %v2795, 0
    %2799 = vmatprep.subr.mxu0 0.0
    %2800 = vmatpush1.msra.mxu0 %v2793
    %2801 = vmatprep.subr.mxu0 0.0
    %2802 = vmatpush1.msra.mxu0 %v2794
    %2803 = vmatprep.subr.mxu0 0.0
    %2804 = vmatpush1.msra.mxu0 %v2797
    %2805 = vmatprep.subr.mxu0 0.0
    %2806 = vmatpush1.msra.mxu0 0.0
    %2807 = vmatprep.subr.mxu0 0.0
    %2808 = vmatpush1.msra.mxu0 0.0
    %2809 = vmatprep.subr.mxu0 0.0
    %2810 = vmatpush1.msra.mxu0 0.0
    %2811 = vmatprep.subr.mxu0 0.0
    %2812 = vmatpush1.msra.mxu0 0.0
    %2813 = vmatprep.subr.mxu0 0.0
    %2814 = vmatpush1.msra.mxu0 0.0
    %2815 = vmatprep.subr.mxu0 0.0
    %2816 = vmatpush1.msra.mxu0 0.0
    %2817 = vmatprep.subr.mxu0 0.0
    %2818 = vmatpush1.msra.mxu0 0.0
    %2819 = vmatprep.subr.mxu0 0.0
    %2820 = vmatpush1.msra.mxu0 0.0
    %2821 = vmatprep.subr.mxu0 0.0
    %2822 = vmatpush1.msra.mxu0 0.0
    %2823 = vmatprep.subr.mxu0 0.0
    %2824 = vmatpush1.msra.mxu0 0.0
    %2825 = vmatprep.subr.mxu0 0.0
    %2826 = vmatpush1.msra.mxu0 0.0
    %2827 = vmatprep.subr.mxu0 0.0
    %2828 = vmatpush1.msra.mxu0 0.0
    %2829 = vmatprep.subr.mxu0 0.0
    %2830 = vmatpush1.msra.mxu0 0.0
    %2831 = vmatprep.subr.mxu0 0.0
    %2832 = vmatpush1.msra.mxu0 0.0
    %2833 = vmatprep.subr.mxu0 0.0
    %2834 = vmatpush1.msra.mxu0 0.0
    %2835 = vmatprep.subr.mxu0 0.0
    %2836 = vmatpush1.msra.mxu0 0.0
    %2837 = vmatprep.subr.mxu0 0.0
    %2838 = vmatpush1.msra.mxu0 0.0
    %2839 = vmatprep.subr.mxu0 0.0
    %2840 = vmatpush1.msra.mxu0 0.0
    %2841 = vmatprep.subr.mxu0 0.0
    %2842 = vmatpush1.msra.mxu0 0.0
    %2843 = vmatprep.subr.mxu0 0.0
    %2844 = vmatpush1.msra.mxu0 0.0
    %2845 = vmatprep.subr.mxu0 0.0
    %2846 = vmatpush1.msra.mxu0 0.0
    %2847 = vmatprep.subr.mxu0 0.0
    %2848 = vmatpush1.msra.mxu0 0.0
    %2849 = vmatprep.subr.mxu0 0.0
    %2850 = vmatpush1.msra.mxu0 0.0
    %2851 = vmatprep.subr.mxu0 0.0
    %2852 = vmatpush1.msra.mxu0 0.0
    %2853 = vmatprep.subr.mxu0 0.0
    %2854 = vmatpush1.msra.mxu0 0.0
    %2855 = vmatprep.subr.mxu0 0.0
    %2856 = vmatpush1.msra.mxu0 0.0
    %2857 = vmatprep.subr.mxu0 0.0
    %2858 = vmatpush1.msra.mxu0 0.0
    %2859 = vmatprep.subr.mxu0 0.0
    %2860 = vmatpush1.msra.mxu0 0.0
    %2861 = vmatprep.subr.mxu0 0.0
    %2862 = vmatpush1.msra.mxu0 0.0
    %2863 = vmatprep.mubr.f32.mxu0 0.0
    %2864 = vmatmul.mubr.f32.gmra.mrb[0].mxu0 %v70
    %v2865 = vpop.f32.mrb[0].mxu0
    %v2866 = vadd.f32 %v51, %v2865
    %v2867 = vpop.f32.mrb[0].mxu0
    %2868 = vmatprep.mubr.f32.mxu0 0.0
    %2869 = vmatmul.mubr.f32.gmra.mrb[0].mxu0 %v73
    %v2870 = vpop.f32.mrb[0].mxu0
    %v2871 = vadd.f32 %v56, %v2870
    %v2872 = vpop.f32.mrb[0].mxu0
    %2873 = vmatprep.mubr.f32.mxu0 0.0
    %2874 = vmatmul.mubr.f32.gmra.mrb[0].mxu0 %v76
    %v2875 = vpop.f32.mrb[0].mxu0
    %v2876 = vadd.f32 %v61, %v2875
    %v2877 = vpop.f32.mrb[0].mxu0
    %2878 = vmatprep.mubr.f32.mxu0 0.0
    %2879 = vmatmul.mubr.f32.gmra.mrb[0].mxu0 %v79
    %v2880 = vpop.f32.mrb[0].mxu0
    %v2881 = vadd.f32 %v66, %v2880
    %v2882 = vpop.f32.mrb[0].mxu0
    %2883 = vdwg.mxu0
    %v2884 = vmul.f32 %v2866, 0.01
    %v2885 = vmul.f32 %v2871, 0.01
    %v2886 = vmul.f32 %v2876, 0.01
    %v2887 = vmul.f32 %v2881, 0.01
    %v2888 = vmax.f32 %v2866, %v2884
    %v2889 = vmax.f32 %v2871, %v2885
    %v2890 = vmax.f32 %v2876, %v2886
    %v2891 = vmax.f32 %v2881, %v2887
    %2892 = vmatprep.subr.mxu0 0.0
    %2893 = vmatpush1.msra.mxu0 %v2888
    %2894 = vmatprep.subr.mxu0 0.0
    %2895 = vmatpush1.msra.mxu0 %v2889
    %2896 = vmatprep.subr.mxu0 0.0
    %2897 = vmatpush1.msra.mxu0 %v2890
    %2898 = vmatprep.subr.mxu0 0.0
    %2899 = vmatpush1.msra.mxu0 %v2891
    %2900 = vmatprep.subr.mxu0 0.0
    %2901 = vmatpush1.msra.mxu0 0.0
    %2902 = vmatprep.subr.mxu0 0.0
    %2903 = vmatpush1.msra.mxu0 0.0
    %2904 = vmatprep.subr.mxu0 0.0
    %2905 = vmatpush1.msra.mxu0 0.0
    %2906 = vmatprep.subr.mxu0 0.0
    %2907 = vmatpush1.msra.mxu0 0.0
    %2908 = vmatprep.subr.mxu0 0.0
    %2909 = vmatpush1.msra.mxu0 0.0
    %2910 = vmatprep.subr.mxu0 0.0
    %2911 = vmatpush1.msra.mxu0 0.0
    %2912 = vmatprep.subr.mxu0 0.0
    %2913 = vmatpush1.msra.mxu0 0.0
    %2914 = vmatprep.subr.mxu0 0.0
    %2915 = vmatpush1.msra.mxu0 0.0
    %2916 = vmatprep.subr.mxu0 0.0
    %2917 = vmatpush1.msra.mxu0 0.0
    %2918 = vmatprep.subr.mxu0 0.0
    %2919 = vmatpush1.msra.mxu0 0.0
    %2920 = vmatprep.subr.mxu0 0.0
    %2921 = vmatpush1.msra.mxu0 0.0
    %2922 = vmatprep.subr.mxu0 0.0
    %2923 = vmatpush1.msra.mxu0 0.0
    %2924 = vmatprep.subr.mxu0 0.0
    %2925 = vmatpush1.msra.mxu0 0.0
    %2926 = vmatprep.subr.mxu0 0.0
    %2927 = vmatpush1.msra.mxu0 0.0
    %2928 = vmatprep.subr.mxu0 0.0
    %2929 = vmatpush1.msra.mxu0 0.0
    %2930 = vmatprep.subr.mxu0 0.0
    %2931 = vmatpush1.msra.mxu0 0.0
    %2932 = vmatprep.subr.mxu0 0.0
    %2933 = vmatpush1.msra.mxu0 0.0
    %2934 = vmatprep.subr.mxu0 0.0
    %2935 = vmatpush1.msra.mxu0 0.0
    %2936 = vmatprep.subr.mxu0 0.0
    %2937 = vmatpush1.msra.mxu0 0.0
    %2938 = vmatprep.subr.mxu0 0.0
    %2939 = vmatpush1.msra.mxu0 0.0
    %2940 = vmatprep.subr.mxu0 0.0
    %2941 = vmatpush1.msra.mxu0 0.0
    %2942 = vmatprep.subr.mxu0 0.0
    %2943 = vmatpush1.msra.mxu0 0.0
    %2944 = vmatprep.subr.mxu0 0.0
    %2945 = vmatpush1.msra.mxu0 0.0
    %2946 = vmatprep.subr.mxu0 0.0
    %2947 = vmatpush1.msra.mxu0 0.0
    %2948 = vmatprep.subr.mxu0 0.0
    %2949 = vmatpush1.msra.mxu0 0.0
    %2950 = vmatprep.subr.mxu0 0.0
    %2951 = vmatpush1.msra.mxu0 0.0
    %2952 = vmatprep.subr.mxu0 0.0
    %2953 = vmatpush1.msra.mxu0 0.0
    %2954 = vmatprep.subr.mxu0 0.0
    %2955 = vmatpush1.msra.mxu0 0.0
    %2956 = vmatprep.mubr.f32.mxu0 0.0
    %2957 = vmatmul.mubr.f32.gmra.mrb[0].mxu0 %v208
    %v2958 = vpop.f32.mrb[0].mxu0
    %v2959 = vadd.f32 %v189, %v2958
    %v2960 = vpop.f32.mrb[0].mxu0
    %2961 = vmatprep.mubr.f32.mxu0 0.0
    %2962 = vmatmul.mubr.f32.gmra.mrb[0].mxu0 %v211
    %v2963 = vpop.f32.mrb[0].mxu0
    %v2964 = vadd.f32 %v194, %v2963
    %v2965 = vpop.f32.mrb[0].mxu0
    %2966 = vmatprep.mubr.f32.mxu0 0.0
    %2967 = vmatmul.mubr.f32.gmra.mrb[0].mxu0 %v214
    %v2968 = vpop.f32.mrb[0].mxu0
    %v2969 = vadd.f32 %v199, %v2968
    %v2970 = vpop.f32.mrb[0].mxu0
    %2971 = vmatprep.mubr.f32.mxu0 0.0
    %2972 = vmatmul.mubr.f32.gmra.mrb[0].mxu0 %v217
    %v2973 = vpop.f32.mrb[0].mxu0
    %v2974 = vadd.f32 %v204, %v2973
    %v2975 = vpop.f32.mrb[0].mxu0
    %2976 = vdwg.mxu0
    %v2977 = vmul.f32 %v2959, 0.01
    %v2978 = vmul.f32 %v2964, 0.01
    %v2979 = vmul.f32 %v2969, 0.01
    %v2980 = vmul.f32 %v2974, 0.01
    %v2981 = vmax.f32 %v2959, %v2977
    %v2982 = vmax.f32 %v2964, %v2978
    %v2983 = vmax.f32 %v2969, %v2979
    %v2984 = vmax.f32 %v2974, %v2980
    %2985 = vmatprep.subr.mxu0 0.0
    %2986 = vmatpush1.msra.mxu0 %v2981
    %2987 = vmatprep.subr.mxu0 0.0
    %2988 = vmatpush1.msra.mxu0 %v2982
    %2989 = vmatprep.subr.mxu0 0.0
    %2990 = vmatpush1.msra.mxu0 %v2983
    %2991 = vmatprep.subr.mxu0 0.0
    %2992 = vmatpush1.msra.mxu0 %v2984
    %2993 = vmatprep.subr.mxu0 0.0
    %2994 = vmatpush1.msra.mxu0 0.0
    %2995 = vmatprep.subr.mxu0 0.0
    %2996 = vmatpush1.msra.mxu0 0.0
    %2997 = vmatprep.subr.mxu0 0.0
    %2998 = vmatpush1.msra.mxu0 0.0
    %2999 = vmatprep.subr.mxu0 0.0
    %3000 = vmatpush1.msra.mxu0 0.0
    %3001 = vmatprep.subr.mxu0 0.0
    %3002 = vmatpush1.msra.mxu0 0.0
    %3003 = vmatprep.subr.mxu0 0.0
    %3004 = vmatpush1.msra.mxu0 0.0
    %3005 = vmatprep.subr.mxu0 0.0
    %3006 = vmatpush1.msra.mxu0 0.0
    %3007 = vmatprep.subr.mxu0 0.0
    %3008 = vmatpush1.msra.mxu0 0.0
    %3009 = vmatprep.subr.mxu0 0.0
    %3010 = vmatpush1.msra.mxu0 0.0
    %3011 = vmatprep.subr.mxu0 0.0
    %3012 = vmatpush1.msra.mxu0 0.0
    %3013 = vmatprep.subr.mxu0 0.0
    %3014 = vmatpush1.msra.mxu0 0.0
    %3015 = vmatprep.subr.mxu0 0.0
    %3016 = vmatpush1.msra.mxu0 0.0
    %3017 = vmatprep.subr.mxu0 0.0
    %3018 = vmatpush1.msra.mxu0 0.0
    %3019 = vmatprep.subr.mxu0 0.0
    %3020 = vmatpush1.msra.mxu0 0.0
    %3021 = vmatprep.subr.mxu0 0.0
    %3022 = vmatpush1.msra.mxu0 0.0
    %3023 = vmatprep.subr.mxu0 0.0
    %3024 = vmatpush1.msra.mxu0 0.0
    %3025 = vmatprep.subr.mxu0 0.0
    %3026 = vmatpush1.msra.mxu0 0.0
    %3027 = vmatprep.subr.mxu0 0.0
    %3028 = vmatpush1.msra.mxu0 0.0
    %3029 = vmatprep.subr.mxu0 0.0
    %3030 = vmatpush1.msra.mxu0 0.0
    %3031 = vmatprep.subr.mxu0 0.0
    %3032 = vmatpush1.msra.mxu0 0.0
    %3033 = vmatprep.subr.mxu0 0.0
    %3034 = vmatpush1.msra.mxu0 0.0
    %3035 = vmatprep.subr.mxu0 0.0
    %3036 = vmatpush1.msra.mxu0 0.0
    %3037 = vmatprep.subr.mxu0 0.0
    %3038 = vmatpush1.msra.mxu0 0.0
    %3039 = vmatprep.subr.mxu0 0.0
    %3040 = vmatpush1.msra.mxu0 0.0
    %3041 = vmatprep.subr.mxu0 0.0
    %3042 = vmatpush1.msra.mxu0 0.0
    %3043 = vmatprep.subr.mxu0 0.0
    %3044 = vmatpush1.msra.mxu0 0.0
    %3045 = vmatprep.subr.mxu0 0.0
    %3046 = vmatpush1.msra.mxu0 0.0
    %3047 = vmatprep.subr.mxu0 0.0
    %3048 = vmatpush1.msra.mxu0 0.0
    %3049 = vmatprep.mubr.f32.mxu0 0.0
    %3050 = vmatmul.mubr.f32.gmra.mrb[0].mxu0 %v324
    %v3051 = vpop.f32.mrb[0].mxu0
    %v3052 = vadd.f32 %v322, %v3051
    %v3053 = vpop.f32.mrb[0].mxu0
    %3054 = vdwg.mxu0
    %v3055 = vmul.f32 %v3052, 0.01
    %v3056 = vmax.f32 %v3052, %v3055
    %s3057 = scalar_lea.vmem %s0, 120
    %v3058 = vld [vmem:[%s3057] sm:$0xff]
    %v3059 = vld [vmem:[%s3057 + $0x8] sm:$0xff]
    %v3060 = vld [vmem:[%s3057 + $0x10] sm:$0xf]
    %v3062 = vsel %vm81, %v3060, 0
    %3064 = vmatprep.subr.mxu0 0.0
    %3065 = vmatpush1.msra.mxu0 %v3058
    %3066 = vmatprep.subr.mxu0 0.0
    %3067 = vmatpush1.msra.mxu0 %v3059
    %3068 = vmatprep.subr.mxu0 0.0
    %3069 = vmatpush1.msra.mxu0 %v3062
    %3070 = vmatprep.subr.mxu0 0.0
    %3071 = vmatpush1.msra.mxu0 0.0
    %3072 = vmatprep.subr.mxu0 0.0
    %3073 = vmatpush1.msra.mxu0 0.0
    %3074 = vmatprep.subr.mxu0 0.0
    %3075 = vmatpush1.msra.mxu0 0.0
    %3076 = vmatprep.subr.mxu0 0.0
    %3077 = vmatpush1.msra.mxu0 0.0
    %3078 = vmatprep.subr.mxu0 0.0
    %3079 = vmatpush1.msra.mxu0 0.0
    %3080 = vmatprep.subr.mxu0 0.0
    %3081 = vmatpush1.msra.mxu0 0.0
    %3082 = vmatprep.subr.mxu0 0.0
    %3083 = vmatpush1.msra.mxu0 0.0
    %3084 = vmatprep.subr.mxu0 0.0
    %3085 = vmatpush1.msra.mxu0 0.0
    %3086 = vmatprep.subr.mxu0 0.0
    %3087 = vmatpush1.msra.mxu0 0.0
    %3088 = vmatprep.subr.mxu0 0.0
    %3089 = vmatpush1.msra.mxu0 0.0
    %3090 = vmatprep.subr.mxu0 0.0
    %3091 = vmatpush1.msra.mxu0 0.0
    %3092 = vmatprep.subr.mxu0 0.0
    %3093 = vmatpush1.msra.mxu0 0.0
    %3094 = vmatprep.subr.mxu0 0.0
    %3095 = vmatpush1.msra.mxu0 0.0
    %3096 = vmatprep.subr.mxu0 0.0
    %3097 = vmatpush1.msra.mxu0 0.0
    %3098 = vmatprep.subr.mxu0 0.0
    %3099 = vmatpush1.msra.mxu0 0.0
    %3100 = vmatprep.subr.mxu0 0.0
    %3101 = vmatpush1.msra.mxu0 0.0
    %3102 = vmatprep.subr.mxu0 0.0
    %3103 = vmatpush1.msra.mxu0 0.0
    %3104 = vmatprep.subr.mxu0 0.0
    %3105 = vmatpush1.msra.mxu0 0.0
    %3106 = vmatprep.subr.mxu0 0.0
    %3107 = vmatpush1.msra.mxu0 0.0
    %3108 = vmatprep.subr.mxu0 0.0
    %3109 = vmatpush1.msra.mxu0 0.0
    %3110 = vmatprep.subr.mxu0 0.0
    %3111 = vmatpush1.msra.mxu0 0.0
    %3112 = vmatprep.subr.mxu0 0.0
    %3113 = vmatpush1.msra.mxu0 0.0
    %3114 = vmatprep.subr.mxu0 0.0
    %3115 = vmatpush1.msra.mxu0 0.0
    %3116 = vmatprep.subr.mxu0 0.0
    %3117 = vmatpush1.msra.mxu0 0.0
    %3118 = vmatprep.subr.mxu0 0.0
    %3119 = vmatpush1.msra.mxu0 0.0
    %3120 = vmatprep.subr.mxu0 0.0
    %3121 = vmatpush1.msra.mxu0 0.0
    %3122 = vmatprep.subr.mxu0 0.0
    %3123 = vmatpush1.msra.mxu0 0.0
    %3124 = vmatprep.subr.mxu0 0.0
    %3125 = vmatpush1.msra.mxu0 0.0
    %3126 = vmatprep.subr.mxu0 0.0
    %3127 = vmatpush1.msra.mxu0 0.0
    %3128 = vmatprep.mubr.f32.mxu0 0.0
    %3129 = vmatmul.mubr.f32.gmra.mrb[0].mxu0 %v70
    %v3130 = vpop.f32.mrb[0].mxu0
    %v3131 = vadd.f32 %v51, %v3130
    %v3132 = vpop.f32.mrb[0].mxu0
    %3133 = vmatprep.mubr.f32.mxu0 0.0
    %3134 = vmatmul.mubr.f32.gmra.mrb[0].mxu0 %v73
    %v3135 = vpop.f32.mrb[0].mxu0
    %v3136 = vadd.f32 %v56, %v3135
    %v3137 = vpop.f32.mrb[0].mxu0
    %3138 = vmatprep.mubr.f32.mxu0 0.0
    %3139 = vmatmul.mubr.f32.gmra.mrb[0].mxu0 %v76
    %v3140 = vpop.f32.mrb[0].mxu0
    %v3141 = vadd.f32 %v61, %v3140
    %v3142 = vpop.f32.mrb[0].mxu0
    %3143 = vmatprep.mubr.f32.mxu0 0.0
    %3144 = vmatmul.mubr.f32.gmra.mrb[0].mxu0 %v79
    %v3145 = vpop.f32.mrb[0].mxu0
    %v3146 = vadd.f32 %v66, %v3145
    %v3147 = vpop.f32.mrb[0].mxu0
    %3148 = vdwg.mxu0
    %v3149 = vmul.f32 %v3131, 0.01
    %v3150 = vmul.f32 %v3136, 0.01
    %v3151 = vmul.f32 %v3141, 0.01
    %v3152 = vmul.f32 %v3146, 0.01
    %v3153 = vmax.f32 %v3131, %v3149
    %v3154 = vmax.f32 %v3136, %v3150
    %v3155 = vmax.f32 %v3141, %v3151
    %v3156 = vmax.f32 %v3146, %v3152
    %3157 = vmatprep.subr.mxu0 0.0
    %3158 = vmatpush1.msra.mxu0 %v3153
    %3159 = vmatprep.subr.mxu0 0.0
    %3160 = vmatpush1.msra.mxu0 %v3154
    %3161 = vmatprep.subr.mxu0 0.0
    %3162 = vmatpush1.msra.mxu0 %v3155
    %3163 = vmatprep.subr.mxu0 0.0
    %3164 = vmatpush1.msra.mxu0 %v3156
    %3165 = vmatprep.subr.mxu0 0.0
    %3166 = vmatpush1.msra.mxu0 0.0
    %3167 = vmatprep.subr.mxu0 0.0
    %3168 = vmatpush1.msra.mxu0 0.0
    %3169 = vmatprep.subr.mxu0 0.0
    %3170 = vmatpush1.msra.mxu0 0.0
    %3171 = vmatprep.subr.mxu0 0.0
    %3172 = vmatpush1.msra.mxu0 0.0
    %3173 = vmatprep.subr.mxu0 0.0
    %3174 = vmatpush1.msra.mxu0 0.0
    %3175 = vmatprep.subr.mxu0 0.0
    %3176 = vmatpush1.msra.mxu0 0.0
    %3177 = vmatprep.subr.mxu0 0.0
    %3178 = vmatpush1.msra.mxu0 0.0
    %3179 = vmatprep.subr.mxu0 0.0
    %3180 = vmatpush1.msra.mxu0 0.0
    %3181 = vmatprep.subr.mxu0 0.0
    %3182 = vmatpush1.msra.mxu0 0.0
    %3183 = vmatprep.subr.mxu0 0.0
    %3184 = vmatpush1.msra.mxu0 0.0
    %3185 = vmatprep.subr.mxu0 0.0
    %3186 = vmatpush1.msra.mxu0 0.0
    %3187 = vmatprep.subr.mxu0 0.0
    %3188 = vmatpush1.msra.mxu0 0.0
    %3189 = vmatprep.subr.mxu0 0.0
    %3190 = vmatpush1.msra.mxu0 0.0
    %3191 = vmatprep.subr.mxu0 0.0
    %3192 = vmatpush1.msra.mxu0 0.0
    %3193 = vmatprep.subr.mxu0 0.0
    %3194 = vmatpush1.msra.mxu0 0.0
    %3195 = vmatprep.subr.mxu0 0.0
    %3196 = vmatpush1.msra.mxu0 0.0
    %3197 = vmatprep.subr.mxu0 0.0
    %3198 = vmatpush1.msra.mxu0 0.0
    %3199 = vmatprep.subr.mxu0 0.0
    %3200 = vmatpush1.msra.mxu0 0.0
    %3201 = vmatprep.subr.mxu0 0.0
    %3202 = vmatpush1.msra.mxu0 0.0
    %3203 = vmatprep.subr.mxu0 0.0
    %3204 = vmatpush1.msra.mxu0 0.0
    %3205 = vmatprep.subr.mxu0 0.0
    %3206 = vmatpush1.msra.mxu0 0.0
    %3207 = vmatprep.subr.mxu0 0.0
    %3208 = vmatpush1.msra.mxu0 0.0
    %3209 = vmatprep.subr.mxu0 0.0
    %3210 = vmatpush1.msra.mxu0 0.0
    %3211 = vmatprep.subr.mxu0 0.0
    %3212 = vmatpush1.msra.mxu0 0.0
    %3213 = vmatprep.subr.mxu0 0.0
    %3214 = vmatpush1.msra.mxu0 0.0
    %3215 = vmatprep.subr.mxu0 0.0
    %3216 = vmatpush1.msra.mxu0 0.0
    %3217 = vmatprep.subr.mxu0 0.0
    %3218 = vmatpush1.msra.mxu0 0.0
    %3219 = vmatprep.subr.mxu0 0.0
    %3220 = vmatpush1.msra.mxu0 0.0
    %3221 = vmatprep.mubr.f32.mxu0 0.0
    %3222 = vmatmul.mubr.f32.gmra.mrb[0].mxu0 %v208
    %v3223 = vpop.f32.mrb[0].mxu0
    %v3224 = vadd.f32 %v189, %v3223
    %v3225 = vpop.f32.mrb[0].mxu0
    %3226 = vmatprep.mubr.f32.mxu0 0.0
    %3227 = vmatmul.mubr.f32.gmra.mrb[0].mxu0 %v211
    %v3228 = vpop.f32.mrb[0].mxu0
    %v3229 = vadd.f32 %v194, %v3228
    %v3230 = vpop.f32.mrb[0].mxu0
    %3231 = vmatprep.mubr.f32.mxu0 0.0
    %3232 = vmatmul.mubr.f32.gmra.mrb[0].mxu0 %v214
    %v3233 = vpop.f32.mrb[0].mxu0
    %v3234 = vadd.f32 %v199, %v3233
    %v3235 = vpop.f32.mrb[0].mxu0
    %3236 = vmatprep.mubr.f32.mxu0 0.0
    %3237 = vmatmul.mubr.f32.gmra.mrb[0].mxu0 %v217
    %v3238 = vpop.f32.mrb[0].mxu0
    %v3239 = vadd.f32 %v204, %v3238
    %v3240 = vpop.f32.mrb[0].mxu0
    %3241 = vdwg.mxu0
    %v3242 = vmul.f32 %v3224, 0.01
    %v3243 = vmul.f32 %v3229, 0.01
    %v3244 = vmul.f32 %v3234, 0.01
    %v3245 = vmul.f32 %v3239, 0.01
    %v3246 = vmax.f32 %v3224, %v3242
    %v3247 = vmax.f32 %v3229, %v3243
    %v3248 = vmax.f32 %v3234, %v3244
    %v3249 = vmax.f32 %v3239, %v3245
    %3250 = vmatprep.subr.mxu0 0.0
    %3251 = vmatpush1.msra.mxu0 %v3246
    %3252 = vmatprep.subr.mxu0 0.0
    %3253 = vmatpush1.msra.mxu0 %v3247
    %3254 = vmatprep.subr.mxu0 0.0
    %3255 = vmatpush1.msra.mxu0 %v3248
    %3256 = vmatprep.subr.mxu0 0.0
    %3257 = vmatpush1.msra.mxu0 %v3249
    %3258 = vmatprep.subr.mxu0 0.0
    %3259 = vmatpush1.msra.mxu0 0.0
    %3260 = vmatprep.subr.mxu0 0.0
    %3261 = vmatpush1.msra.mxu0 0.0
    %3262 = vmatprep.subr.mxu0 0.0
    %3263 = vmatpush1.msra.mxu0 0.0
    %3264 = vmatprep.subr.mxu0 0.0
    %3265 = vmatpush1.msra.mxu0 0.0
    %3266 = vmatprep.subr.mxu0 0.0
    %3267 = vmatpush1.msra.mxu0 0.0
    %3268 = vmatprep.subr.mxu0 0.0
    %3269 = vmatpush1.msra.mxu0 0.0
    %3270 = vmatprep.subr.mxu0 0.0
    %3271 = vmatpush1.msra.mxu0 0.0
    %3272 = vmatprep.subr.mxu0 0.0
    %3273 = vmatpush1.msra.mxu0 0.0
    %3274 = vmatprep.subr.mxu0 0.0
    %3275 = vmatpush1.msra.mxu0 0.0
    %3276 = vmatprep.subr.mxu0 0.0
    %3277 = vmatpush1.msra.mxu0 0.0
    %3278 = vmatprep.subr.mxu0 0.0
    %3279 = vmatpush1.msra.mxu0 0.0
    %3280 = vmatprep.subr.mxu0 0.0
    %3281 = vmatpush1.msra.mxu0 0.0
    %3282 = vmatprep.subr.mxu0 0.0
    %3283 = vmatpush1.msra.mxu0 0.0
    %3284 = vmatprep.subr.mxu0 0.0
    %3285 = vmatpush1.msra.mxu0 0.0
    %3286 = vmatprep.subr.mxu0 0.0
    %3287 = vmatpush1.msra.mxu0 0.0
    %3288 = vmatprep.subr.mxu0 0.0
    %3289 = vmatpush1.msra.mxu0 0.0
    %3290 = vmatprep.subr.mxu0 0.0
    %3291 = vmatpush1.msra.mxu0 0.0
    %3292 = vmatprep.subr.mxu0 0.0
    %3293 = vmatpush1.msra.mxu0 0.0
    %3294 = vmatprep.subr.mxu0 0.0
    %3295 = vmatpush1.msra.mxu0 0.0
    %3296 = vmatprep.subr.mxu0 0.0
    %3297 = vmatpush1.msra.mxu0 0.0
    %3298 = vmatprep.subr.mxu0 0.0
    %3299 = vmatpush1.msra.mxu0 0.0
    %3300 = vmatprep.subr.mxu0 0.0
    %3301 = vmatpush1.msra.mxu0 0.0
    %3302 = vmatprep.subr.mxu0 0.0
    %3303 = vmatpush1.msra.mxu0 0.0
    %3304 = vmatprep.subr.mxu0 0.0
    %3305 = vmatpush1.msra.mxu0 0.0
    %3306 = vmatprep.subr.mxu0 0.0
    %3307 = vmatpush1.msra.mxu0 0.0
    %3308 = vmatprep.subr.mxu0 0.0
    %3309 = vmatpush1.msra.mxu0 0.0
    %3310 = vmatprep.subr.mxu0 0.0
    %3311 = vmatpush1.msra.mxu0 0.0
    %3312 = vmatprep.subr.mxu0 0.0
    %3313 = vmatpush1.msra.mxu0 0.0
    %3314 = vmatprep.mubr.f32.mxu0 0.0
    %3315 = vmatmul.mubr.f32.gmra.mrb[0].mxu0 %v324
    %v3316 = vpop.f32.mrb[0].mxu0
    %v3317 = vadd.f32 %v322, %v3316
    %v3318 = vpop.f32.mrb[0].mxu0
    %3319 = vdwg.mxu0
    %v3320 = vmul.f32 %v3317, 0.01
    %v3321 = vmax.f32 %v3317, %v3320
    %v3322 = vsub.f32 %v3056, %v3321
    %v3323 = vadd.f32 %v2791, %v3322
    %s3324 = scalar_lea.vmem %s1, 144
    %v3325 = vld [vmem:[%s3324] sm:$0xff]
    %v3326 = vld [vmem:[%s3324 + $0x8] sm:$0xff]
    %v3327 = vld [vmem:[%s3324 + $0x10] sm:$0xf]
    %v3329 = vsel %vm81, %v3327, 0
    %3331 = vmatprep.subr.mxu0 0.0
    %3332 = vmatpush1.msra.mxu0 %v3325
    %3333 = vmatprep.subr.mxu0 0.0
    %3334 = vmatpush1.msra.mxu0 %v3326
    %3335 = vmatprep.subr.mxu0 0.0
    %3336 = vmatpush1.msra.mxu0 %v3329
    %3337 = vmatprep.subr.mxu0 0.0
    %3338 = vmatpush1.msra.mxu0 0.0
    %3339 = vmatprep.subr.mxu0 0.0
    %3340 = vmatpush1.msra.mxu0 0.0
    %3341 = vmatprep.subr.mxu0 0.0
    %3342 = vmatpush1.msra.mxu0 0.0
    %3343 = vmatprep.subr.mxu0 0.0
    %3344 = vmatpush1.msra.mxu0 0.0
    %3345 = vmatprep.subr.mxu0 0.0
    %3346 = vmatpush1.msra.mxu0 0.0
    %3347 = vmatprep.subr.mxu0 0.0
    %3348 = vmatpush1.msra.mxu0 0.0
    %3349 = vmatprep.subr.mxu0 0.0
    %3350 = vmatpush1.msra.mxu0 0.0
    %3351 = vmatprep.subr.mxu0 0.0
    %3352 = vmatpush1.msra.mxu0 0.0
    %3353 = vmatprep.subr.mxu0 0.0
    %3354 = vmatpush1.msra.mxu0 0.0
    %3355 = vmatprep.subr.mxu0 0.0
    %3356 = vmatpush1.msra.mxu0 0.0
    %3357 = vmatprep.subr.mxu0 0.0
    %3358 = vmatpush1.msra.mxu0 0.0
    %3359 = vmatprep.subr.mxu0 0.0
    %3360 = vmatpush1.msra.mxu0 0.0
    %3361 = vmatprep.subr.mxu0 0.0
    %3362 = vmatpush1.msra.mxu0 0.0
    %3363 = vmatprep.subr.mxu0 0.0
    %3364 = vmatpush1.msra.mxu0 0.0
    %3365 = vmatprep.subr.mxu0 0.0
    %3366 = vmatpush1.msra.mxu0 0.0
    %3367 = vmatprep.subr.mxu0 0.0
    %3368 = vmatpush1.msra.mxu0 0.0
    %3369 = vmatprep.subr.mxu0 0.0
    %3370 = vmatpush1.msra.mxu0 0.0
    %3371 = vmatprep.subr.mxu0 0.0
    %3372 = vmatpush1.msra.mxu0 0.0
    %3373 = vmatprep.subr.mxu0 0.0
    %3374 = vmatpush1.msra.mxu0 0.0
    %3375 = vmatprep.subr.mxu0 0.0
    %3376 = vmatpush1.msra.mxu0 0.0
    %3377 = vmatprep.subr.mxu0 0.0
    %3378 = vmatpush1.msra.mxu0 0.0
    %3379 = vmatprep.subr.mxu0 0.0
    %3380 = vmatpush1.msra.mxu0 0.0
    %3381 = vmatprep.subr.mxu0 0.0
    %3382 = vmatpush1.msra.mxu0 0.0
    %3383 = vmatprep.subr.mxu0 0.0
    %3384 = vmatpush1.msra.mxu0 0.0
    %3385 = vmatprep.subr.mxu0 0.0
    %3386 = vmatpush1.msra.mxu0 0.0
    %3387 = vmatprep.subr.mxu0 0.0
    %3388 = vmatpush1.msra.mxu0 0.0
    %3389 = vmatprep.subr.mxu0 0.0
    %3390 = vmatpush1.msra.mxu0 0.0
    %3391 = vmatprep.subr.mxu0 0.0
    %3392 = vmatpush1.msra.mxu0 0.0
    %3393 = vmatprep.subr.mxu0 0.0
    %3394 = vmatpush1.msra.mxu0 0.0
    %3395 = vmatprep.mubr.f32.mxu0 0.0
    %3396 = vmatmul.mubr.f32.gmra.mrb[0].mxu0 %v70
    %v3397 = vpop.f32.mrb[0].mxu0
    %v3398 = vadd.f32 %v51, %v3397
    %v3399 = vpop.f32.mrb[0].mxu0
    %3400 = vmatprep.mubr.f32.mxu0 0.0
    %3401 = vmatmul.mubr.f32.gmra.mrb[0].mxu0 %v73
    %v3402 = vpop.f32.mrb[0].mxu0
    %v3403 = vadd.f32 %v56, %v3402
    %v3404 = vpop.f32.mrb[0].mxu0
    %3405 = vmatprep.mubr.f32.mxu0 0.0
    %3406 = vmatmul.mubr.f32.gmra.mrb[0].mxu0 %v76
    %v3407 = vpop.f32.mrb[0].mxu0
    %v3408 = vadd.f32 %v61, %v3407
    %v3409 = vpop.f32.mrb[0].mxu0
    %3410 = vmatprep.mubr.f32.mxu0 0.0
    %3411 = vmatmul.mubr.f32.gmra.mrb[0].mxu0 %v79
    %v3412 = vpop.f32.mrb[0].mxu0
    %v3413 = vadd.f32 %v66, %v3412
    %v3414 = vpop.f32.mrb[0].mxu0
    %3415 = vdwg.mxu0
    %v3416 = vmul.f32 %v3398, 0.01
    %v3417 = vmul.f32 %v3403, 0.01
    %v3418 = vmul.f32 %v3408, 0.01
    %v3419 = vmul.f32 %v3413, 0.01
    %v3420 = vmax.f32 %v3398, %v3416
    %v3421 = vmax.f32 %v3403, %v3417
    %v3422 = vmax.f32 %v3408, %v3418
    %v3423 = vmax.f32 %v3413, %v3419
    %3424 = vmatprep.subr.mxu0 0.0
    %3425 = vmatpush1.msra.mxu0 %v3420
    %3426 = vmatprep.subr.mxu0 0.0
    %3427 = vmatpush1.msra.mxu0 %v3421
    %3428 = vmatprep.subr.mxu0 0.0
    %3429 = vmatpush1.msra.mxu0 %v3422
    %3430 = vmatprep.subr.mxu0 0.0
    %3431 = vmatpush1.msra.mxu0 %v3423
    %3432 = vmatprep.subr.mxu0 0.0
    %3433 = vmatpush1.msra.mxu0 0.0
    %3434 = vmatprep.subr.mxu0 0.0
    %3435 = vmatpush1.msra.mxu0 0.0
    %3436 = vmatprep.subr.mxu0 0.0
    %3437 = vmatpush1.msra.mxu0 0.0
    %3438 = vmatprep.subr.mxu0 0.0
    %3439 = vmatpush1.msra.mxu0 0.0
    %3440 = vmatprep.subr.mxu0 0.0
    %3441 = vmatpush1.msra.mxu0 0.0
    %3442 = vmatprep.subr.mxu0 0.0
    %3443 = vmatpush1.msra.mxu0 0.0
    %3444 = vmatprep.subr.mxu0 0.0
    %3445 = vmatpush1.msra.mxu0 0.0
    %3446 = vmatprep.subr.mxu0 0.0
    %3447 = vmatpush1.msra.mxu0 0.0
    %3448 = vmatprep.subr.mxu0 0.0
    %3449 = vmatpush1.msra.mxu0 0.0
    %3450 = vmatprep.subr.mxu0 0.0
    %3451 = vmatpush1.msra.mxu0 0.0
    %3452 = vmatprep.subr.mxu0 0.0
    %3453 = vmatpush1.msra.mxu0 0.0
    %3454 = vmatprep.subr.mxu0 0.0
    %3455 = vmatpush1.msra.mxu0 0.0
    %3456 = vmatprep.subr.mxu0 0.0
    %3457 = vmatpush1.msra.mxu0 0.0
    %3458 = vmatprep.subr.mxu0 0.0
    %3459 = vmatpush1.msra.mxu0 0.0
    %3460 = vmatprep.subr.mxu0 0.0
    %3461 = vmatpush1.msra.mxu0 0.0
    %3462 = vmatprep.subr.mxu0 0.0
    %3463 = vmatpush1.msra.mxu0 0.0
    %3464 = vmatprep.subr.mxu0 0.0
    %3465 = vmatpush1.msra.mxu0 0.0
    %3466 = vmatprep.subr.mxu0 0.0
    %3467 = vmatpush1.msra.mxu0 0.0
    %3468 = vmatprep.subr.mxu0 0.0
    %3469 = vmatpush1.msra.mxu0 0.0
    %3470 = vmatprep.subr.mxu0 0.0
    %3471 = vmatpush1.msra.mxu0 0.0
    %3472 = vmatprep.subr.mxu0 0.0
    %3473 = vmatpush1.msra.mxu0 0.0
    %3474 = vmatprep.subr.mxu0 0.0
    %3475 = vmatpush1.msra.mxu0 0.0
    %3476 = vmatprep.subr.mxu0 0.0
    %3477 = vmatpush1.msra.mxu0 0.0
    %3478 = vmatprep.subr.mxu0 0.0
    %3479 = vmatpush1.msra.mxu0 0.0
    %3480 = vmatprep.subr.mxu0 0.0
    %3481 = vmatpush1.msra.mxu0 0.0
    %3482 = vmatprep.subr.mxu0 0.0
    %3483 = vmatpush1.msra.mxu0 0.0
    %3484 = vmatprep.subr.mxu0 0.0
    %3485 = vmatpush1.msra.mxu0 0.0
    %3486 = vmatprep.subr.mxu0 0.0
    %3487 = vmatpush1.msra.mxu0 0.0
    %3488 = vmatprep.mubr.f32.mxu0 0.0
    %3489 = vmatmul.mubr.f32.gmra.mrb[0].mxu0 %v208
    %v3490 = vpop.f32.mrb[0].mxu0
    %v3491 = vadd.f32 %v189, %v3490
    %v3492 = vpop.f32.mrb[0].mxu0
    %3493 = vmatprep.mubr.f32.mxu0 0.0
    %3494 = vmatmul.mubr.f32.gmra.mrb[0].mxu0 %v211
    %v3495 = vpop.f32.mrb[0].mxu0
    %v3496 = vadd.f32 %v194, %v3495
    %v3497 = vpop.f32.mrb[0].mxu0
    %3498 = vmatprep.mubr.f32.mxu0 0.0
    %3499 = vmatmul.mubr.f32.gmra.mrb[0].mxu0 %v214
    %v3500 = vpop.f32.mrb[0].mxu0
    %v3501 = vadd.f32 %v199, %v3500
    %v3502 = vpop.f32.mrb[0].mxu0
    %3503 = vmatprep.mubr.f32.mxu0 0.0
    %3504 = vmatmul.mubr.f32.gmra.mrb[0].mxu0 %v217
    %v3505 = vpop.f32.mrb[0].mxu0
    %v3506 = vadd.f32 %v204, %v3505
    %v3507 = vpop.f32.mrb[0].mxu0
    %3508 = vdwg.mxu0
    %v3509 = vmul.f32 %v3491, 0.01
    %v3510 = vmul.f32 %v3496, 0.01
    %v3511 = vmul.f32 %v3501, 0.01
    %v3512 = vmul.f32 %v3506, 0.01
    %v3513 = vmax.f32 %v3491, %v3509
    %v3514 = vmax.f32 %v3496, %v3510
    %v3515 = vmax.f32 %v3501, %v3511
    %v3516 = vmax.f32 %v3506, %v3512
    %3517 = vmatprep.subr.mxu0 0.0
    %3518 = vmatpush1.msra.mxu0 %v3513
    %3519 = vmatprep.subr.mxu0 0.0
    %3520 = vmatpush1.msra.mxu0 %v3514
    %3521 = vmatprep.subr.mxu0 0.0
    %3522 = vmatpush1.msra.mxu0 %v3515
    %3523 = vmatprep.subr.mxu0 0.0
    %3524 = vmatpush1.msra.mxu0 %v3516
    %3525 = vmatprep.subr.mxu0 0.0
    %3526 = vmatpush1.msra.mxu0 0.0
    %3527 = vmatprep.subr.mxu0 0.0
    %3528 = vmatpush1.msra.mxu0 0.0
    %3529 = vmatprep.subr.mxu0 0.0
    %3530 = vmatpush1.msra.mxu0 0.0
    %3531 = vmatprep.subr.mxu0 0.0
    %3532 = vmatpush1.msra.mxu0 0.0
    %3533 = vmatprep.subr.mxu0 0.0
    %3534 = vmatpush1.msra.mxu0 0.0
    %3535 = vmatprep.subr.mxu0 0.0
    %3536 = vmatpush1.msra.mxu0 0.0
    %3537 = vmatprep.subr.mxu0 0.0
    %3538 = vmatpush1.msra.mxu0 0.0
    %3539 = vmatprep.subr.mxu0 0.0
    %3540 = vmatpush1.msra.mxu0 0.0
    %3541 = vmatprep.subr.mxu0 0.0
    %3542 = vmatpush1.msra.mxu0 0.0
    %3543 = vmatprep.subr.mxu0 0.0
    %3544 = vmatpush1.msra.mxu0 0.0
    %3545 = vmatprep.subr.mxu0 0.0
    %3546 = vmatpush1.msra.mxu0 0.0
    %3547 = vmatprep.subr.mxu0 0.0
    %3548 = vmatpush1.msra.mxu0 0.0
    %3549 = vmatprep.subr.mxu0 0.0
    %3550 = vmatpush1.msra.mxu0 0.0
    %3551 = vmatprep.subr.mxu0 0.0
    %3552 = vmatpush1.msra.mxu0 0.0
    %3553 = vmatprep.subr.mxu0 0.0
    %3554 = vmatpush1.msra.mxu0 0.0
    %3555 = vmatprep.subr.mxu0 0.0
    %3556 = vmatpush1.msra.mxu0 0.0
    %3557 = vmatprep.subr.mxu0 0.0
    %3558 = vmatpush1.msra.mxu0 0.0
    %3559 = vmatprep.subr.mxu0 0.0
    %3560 = vmatpush1.msra.mxu0 0.0
    %3561 = vmatprep.subr.mxu0 0.0
    %3562 = vmatpush1.msra.mxu0 0.0
    %3563 = vmatprep.subr.mxu0 0.0
    %3564 = vmatpush1.msra.mxu0 0.0
    %3565 = vmatprep.subr.mxu0 0.0
    %3566 = vmatpush1.msra.mxu0 0.0
    %3567 = vmatprep.subr.mxu0 0.0
    %3568 = vmatpush1.msra.mxu0 0.0
    %3569 = vmatprep.subr.mxu0 0.0
    %3570 = vmatpush1.msra.mxu0 0.0
    %3571 = vmatprep.subr.mxu0 0.0
    %3572 = vmatpush1.msra.mxu0 0.0
    %3573 = vmatprep.subr.mxu0 0.0
    %3574 = vmatpush1.msra.mxu0 0.0
    %3575 = vmatprep.subr.mxu0 0.0
    %3576 = vmatpush1.msra.mxu0 0.0
    %3577 = vmatprep.subr.mxu0 0.0
    %3578 = vmatpush1.msra.mxu0 0.0
    %3579 = vmatprep.subr.mxu0 0.0
    %3580 = vmatpush1.msra.mxu0 0.0
    %3581 = vmatprep.mubr.f32.mxu0 0.0
    %3582 = vmatmul.mubr.f32.gmra.mrb[0].mxu0 %v324
    %v3583 = vpop.f32.mrb[0].mxu0
    %v3584 = vadd.f32 %v322, %v3583
    %v3585 = vpop.f32.mrb[0].mxu0
    %3586 = vdwg.mxu0
    %v3587 = vmul.f32 %v3584, 0.01
    %v3588 = vmax.f32 %v3584, %v3587
    %s3589 = scalar_lea.vmem %s0, 144
    %v3590 = vld [vmem:[%s3589] sm:$0xff]
    %v3591 = vld [vmem:[%s3589 + $0x8] sm:$0xff]
    %v3592 = vld [vmem:[%s3589 + $0x10] sm:$0xf]
    %v3594 = vsel %vm81, %v3592, 0
    %3596 = vmatprep.subr.mxu0 0.0
    %3597 = vmatpush1.msra.mxu0 %v3590
    %3598 = vmatprep.subr.mxu0 0.0
    %3599 = vmatpush1.msra.mxu0 %v3591
    %3600 = vmatprep.subr.mxu0 0.0
    %3601 = vmatpush1.msra.mxu0 %v3594
    %3602 = vmatprep.subr.mxu0 0.0
    %3603 = vmatpush1.msra.mxu0 0.0
    %3604 = vmatprep.subr.mxu0 0.0
    %3605 = vmatpush1.msra.mxu0 0.0
    %3606 = vmatprep.subr.mxu0 0.0
    %3607 = vmatpush1.msra.mxu0 0.0
    %3608 = vmatprep.subr.mxu0 0.0
    %3609 = vmatpush1.msra.mxu0 0.0
    %3610 = vmatprep.subr.mxu0 0.0
    %3611 = vmatpush1.msra.mxu0 0.0
    %3612 = vmatprep.subr.mxu0 0.0
    %3613 = vmatpush1.msra.mxu0 0.0
    %3614 = vmatprep.subr.mxu0 0.0
    %3615 = vmatpush1.msra.mxu0 0.0
    %3616 = vmatprep.subr.mxu0 0.0
    %3617 = vmatpush1.msra.mxu0 0.0
    %3618 = vmatprep.subr.mxu0 0.0
    %3619 = vmatpush1.msra.mxu0 0.0
    %3620 = vmatprep.subr.mxu0 0.0
    %3621 = vmatpush1.msra.mxu0 0.0
    %3622 = vmatprep.subr.mxu0 0.0
    %3623 = vmatpush1.msra.mxu0 0.0
    %3624 = vmatprep.subr.mxu0 0.0
    %3625 = vmatpush1.msra.mxu0 0.0
    %3626 = vmatprep.subr.mxu0 0.0
    %3627 = vmatpush1.msra.mxu0 0.0
    %3628 = vmatprep.subr.mxu0 0.0
    %3629 = vmatpush1.msra.mxu0 0.0
    %3630 = vmatprep.subr.mxu0 0.0
    %3631 = vmatpush1.msra.mxu0 0.0
    %3632 = vmatprep.subr.mxu0 0.0
    %3633 = vmatpush1.msra.mxu0 0.0
    %3634 = vmatprep.subr.mxu0 0.0
    %3635 = vmatpush1.msra.mxu0 0.0
    %3636 = vmatprep.subr.mxu0 0.0
    %3637 = vmatpush1.msra.mxu0 0.0
    %3638 = vmatprep.subr.mxu0 0.0
    %3639 = vmatpush1.msra.mxu0 0.0
    %3640 = vmatprep.subr.mxu0 0.0
    %3641 = vmatpush1.msra.mxu0 0.0
    %3642 = vmatprep.subr.mxu0 0.0
    %3643 = vmatpush1.msra.mxu0 0.0
    %3644 = vmatprep.subr.mxu0 0.0
    %3645 = vmatpush1.msra.mxu0 0.0
    %3646 = vmatprep.subr.mxu0 0.0
    %3647 = vmatpush1.msra.mxu0 0.0
    %3648 = vmatprep.subr.mxu0 0.0
    %3649 = vmatpush1.msra.mxu0 0.0
    %3650 = vmatprep.subr.mxu0 0.0
    %3651 = vmatpush1.msra.mxu0 0.0
    %3652 = vmatprep.subr.mxu0 0.0
    %3653 = vmatpush1.msra.mxu0 0.0
    %3654 = vmatprep.subr.mxu0 0.0
    %3655 = vmatpush1.msra.mxu0 0.0
    %3656 = vmatprep.subr.mxu0 0.0
    %3657 = vmatpush1.msra.mxu0 0.0
    %3658 = vmatprep.subr.mxu0 0.0
    %3659 = vmatpush1.msra.mxu0 0.0
    %3660 = vmatprep.mubr.f32.mxu0 0.0
    %3661 = vmatmul.mubr.f32.gmra.mrb[0].mxu0 %v70
    %v3662 = vpop.f32.mrb[0].mxu0
    %v3663 = vadd.f32 %v51, %v3662
    %v3664 = vpop.f32.mrb[0].mxu0
    %3665 = vmatprep.mubr.f32.mxu0 0.0
    %3666 = vmatmul.mubr.f32.gmra.mrb[0].mxu0 %v73
    %v3667 = vpop.f32.mrb[0].mxu0
    %v3668 = vadd.f32 %v56, %v3667
    %v3669 = vpop.f32.mrb[0].mxu0
    %3670 = vmatprep.mubr.f32.mxu0 0.0
    %3671 = vmatmul.mubr.f32.gmra.mrb[0].mxu0 %v76
    %v3672 = vpop.f32.mrb[0].mxu0
    %v3673 = vadd.f32 %v61, %v3672
    %v3674 = vpop.f32.mrb[0].mxu0
    %3675 = vmatprep.mubr.f32.mxu0 0.0
    %3676 = vmatmul.mubr.f32.gmra.mrb[0].mxu0 %v79
    %v3677 = vpop.f32.mrb[0].mxu0
    %v3678 = vadd.f32 %v66, %v3677
    %v3679 = vpop.f32.mrb[0].mxu0
    %3680 = vdwg.mxu0
    %v3681 = vmul.f32 %v3663, 0.01
    %v3682 = vmul.f32 %v3668, 0.01
    %v3683 = vmul.f32 %v3673, 0.01
    %v3684 = vmul.f32 %v3678, 0.01
    %v3685 = vmax.f32 %v3663, %v3681
    %v3686 = vmax.f32 %v3668, %v3682
    %v3687 = vmax.f32 %v3673, %v3683
    %v3688 = vmax.f32 %v3678, %v3684
    %3689 = vmatprep.subr.mxu0 0.0
    %3690 = vmatpush1.msra.mxu0 %v3685
    %3691 = vmatprep.subr.mxu0 0.0
    %3692 = vmatpush1.msra.mxu0 %v3686
    %3693 = vmatprep.subr.mxu0 0.0
    %3694 = vmatpush1.msra.mxu0 %v3687
    %3695 = vmatprep.subr.mxu0 0.0
    %3696 = vmatpush1.msra.mxu0 %v3688
    %3697 = vmatprep.subr.mxu0 0.0
    %3698 = vmatpush1.msra.mxu0 0.0
    %3699 = vmatprep.subr.mxu0 0.0
    %3700 = vmatpush1.msra.mxu0 0.0
    %3701 = vmatprep.subr.mxu0 0.0
    %3702 = vmatpush1.msra.mxu0 0.0
    %3703 = vmatprep.subr.mxu0 0.0
    %3704 = vmatpush1.msra.mxu0 0.0
    %3705 = vmatprep.subr.mxu0 0.0
    %3706 = vmatpush1.msra.mxu0 0.0
    %3707 = vmatprep.subr.mxu0 0.0
    %3708 = vmatpush1.msra.mxu0 0.0
    %3709 = vmatprep.subr.mxu0 0.0
    %3710 = vmatpush1.msra.mxu0 0.0
    %3711 = vmatprep.subr.mxu0 0.0
    %3712 = vmatpush1.msra.mxu0 0.0
    %3713 = vmatprep.subr.mxu0 0.0
    %3714 = vmatpush1.msra.mxu0 0.0
    %3715 = vmatprep.subr.mxu0 0.0
    %3716 = vmatpush1.msra.mxu0 0.0
    %3717 = vmatprep.subr.mxu0 0.0
    %3718 = vmatpush1.msra.mxu0 0.0
    %3719 = vmatprep.subr.mxu0 0.0
    %3720 = vmatpush1.msra.mxu0 0.0
    %3721 = vmatprep.subr.mxu0 0.0
    %3722 = vmatpush1.msra.mxu0 0.0
    %3723 = vmatprep.subr.mxu0 0.0
    %3724 = vmatpush1.msra.mxu0 0.0
    %3725 = vmatprep.subr.mxu0 0.0
    %3726 = vmatpush1.msra.mxu0 0.0
    %3727 = vmatprep.subr.mxu0 0.0
    %3728 = vmatpush1.msra.mxu0 0.0
    %3729 = vmatprep.subr.mxu0 0.0
    %3730 = vmatpush1.msra.mxu0 0.0
    %3731 = vmatprep.subr.mxu0 0.0
    %3732 = vmatpush1.msra.mxu0 0.0
    %3733 = vmatprep.subr.mxu0 0.0
    %3734 = vmatpush1.msra.mxu0 0.0
    %3735 = vmatprep.subr.mxu0 0.0
    %3736 = vmatpush1.msra.mxu0 0.0
    %3737 = vmatprep.subr.mxu0 0.0
    %3738 = vmatpush1.msra.mxu0 0.0
    %3739 = vmatprep.subr.mxu0 0.0
    %3740 = vmatpush1.msra.mxu0 0.0
    %3741 = vmatprep.subr.mxu0 0.0
    %3742 = vmatpush1.msra.mxu0 0.0
    %3743 = vmatprep.subr.mxu0 0.0
    %3744 = vmatpush1.msra.mxu0 0.0
    %3745 = vmatprep.subr.mxu0 0.0
    %3746 = vmatpush1.msra.mxu0 0.0
    %3747 = vmatprep.subr.mxu0 0.0
    %3748 = vmatpush1.msra.mxu0 0.0
    %3749 = vmatprep.subr.mxu0 0.0
    %3750 = vmatpush1.msra.mxu0 0.0
    %3751 = vmatprep.subr.mxu0 0.0
    %3752 = vmatpush1.msra.mxu0 0.0
    %3753 = vmatprep.mubr.f32.mxu0 0.0
    %3754 = vmatmul.mubr.f32.gmra.mrb[0].mxu0 %v208
    %v3755 = vpop.f32.mrb[0].mxu0
    %v3756 = vadd.f32 %v189, %v3755
    %v3757 = vpop.f32.mrb[0].mxu0
    %3758 = vmatprep.mubr.f32.mxu0 0.0
    %3759 = vmatmul.mubr.f32.gmra.mrb[0].mxu0 %v211
    %v3760 = vpop.f32.mrb[0].mxu0
    %v3761 = vadd.f32 %v194, %v3760
    %v3762 = vpop.f32.mrb[0].mxu0
    %3763 = vmatprep.mubr.f32.mxu0 0.0
    %3764 = vmatmul.mubr.f32.gmra.mrb[0].mxu0 %v214
    %v3765 = vpop.f32.mrb[0].mxu0
    %v3766 = vadd.f32 %v199, %v3765
    %v3767 = vpop.f32.mrb[0].mxu0
    %3768 = vmatprep.mubr.f32.mxu0 0.0
    %3769 = vmatmul.mubr.f32.gmra.mrb[0].mxu0 %v217
    %v3770 = vpop.f32.mrb[0].mxu0
    %v3771 = vadd.f32 %v204, %v3770
    %v3772 = vpop.f32.mrb[0].mxu0
    %3773 = vdwg.mxu0
    %v3774 = vmul.f32 %v3756, 0.01
    %v3775 = vmul.f32 %v3761, 0.01
    %v3776 = vmul.f32 %v3766, 0.01
    %v3777 = vmul.f32 %v3771, 0.01
    %v3778 = vmax.f32 %v3756, %v3774
    %v3779 = vmax.f32 %v3761, %v3775
    %v3780 = vmax.f32 %v3766, %v3776
    %v3781 = vmax.f32 %v3771, %v3777
    %3782 = vmatprep.subr.mxu0 0.0
    %3783 = vmatpush1.msra.mxu0 %v3778
    %3784 = vmatprep.subr.mxu0 0.0
    %3785 = vmatpush1.msra.mxu0 %v3779
    %3786 = vmatprep.subr.mxu0 0.0
    %3787 = vmatpush1.msra.mxu0 %v3780
    %3788 = vmatprep.subr.mxu0 0.0
    %3789 = vmatpush1.msra.mxu0 %v3781
    %3790 = vmatprep.subr.mxu0 0.0
    %3791 = vmatpush1.msra.mxu0 0.0
    %3792 = vmatprep.subr.mxu0 0.0
    %3793 = vmatpush1.msra.mxu0 0.0
    %3794 = vmatprep.subr.mxu0 0.0
    %3795 = vmatpush1.msra.mxu0 0.0
    %3796 = vmatprep.subr.mxu0 0.0
    %3797 = vmatpush1.msra.mxu0 0.0
    %3798 = vmatprep.subr.mxu0 0.0
    %3799 = vmatpush1.msra.mxu0 0.0
    %3800 = vmatprep.subr.mxu0 0.0
    %3801 = vmatpush1.msra.mxu0 0.0
    %3802 = vmatprep.subr.mxu0 0.0
    %3803 = vmatpush1.msra.mxu0 0.0
    %3804 = vmatprep.subr.mxu0 0.0
    %3805 = vmatpush1.msra.mxu0 0.0
    %3806 = vmatprep.subr.mxu0 0.0
    %3807 = vmatpush1.msra.mxu0 0.0
    %3808 = vmatprep.subr.mxu0 0.0
    %3809 = vmatpush1.msra.mxu0 0.0
    %3810 = vmatprep.subr.mxu0 0.0
    %3811 = vmatpush1.msra.mxu0 0.0
    %3812 = vmatprep.subr.mxu0 0.0
    %3813 = vmatpush1.msra.mxu0 0.0
    %3814 = vmatprep.subr.mxu0 0.0
    %3815 = vmatpush1.msra.mxu0 0.0
    %3816 = vmatprep.subr.mxu0 0.0
    %3817 = vmatpush1.msra.mxu0 0.0
    %3818 = vmatprep.subr.mxu0 0.0
    %3819 = vmatpush1.msra.mxu0 0.0
    %3820 = vmatprep.subr.mxu0 0.0
    %3821 = vmatpush1.msra.mxu0 0.0
    %3822 = vmatprep.subr.mxu0 0.0
    %3823 = vmatpush1.msra.mxu0 0.0
    %3824 = vmatprep.subr.mxu0 0.0
    %3825 = vmatpush1.msra.mxu0 0.0
    %3826 = vmatprep.subr.mxu0 0.0
    %3827 = vmatpush1.msra.mxu0 0.0
    %3828 = vmatprep.subr.mxu0 0.0
    %3829 = vmatpush1.msra.mxu0 0.0
    %3830 = vmatprep.subr.mxu0 0.0
    %3831 = vmatpush1.msra.mxu0 0.0
    %3832 = vmatprep.subr.mxu0 0.0
    %3833 = vmatpush1.msra.mxu0 0.0
    %3834 = vmatprep.subr.mxu0 0.0
    %3835 = vmatpush1.msra.mxu0 0.0
    %3836 = vmatprep.subr.mxu0 0.0
    %3837 = vmatpush1.msra.mxu0 0.0
    %3838 = vmatprep.subr.mxu0 0.0
    %3839 = vmatpush1.msra.mxu0 0.0
    %3840 = vmatprep.subr.mxu0 0.0
    %3841 = vmatpush1.msra.mxu0 0.0
    %3842 = vmatprep.subr.mxu0 0.0
    %3843 = vmatpush1.msra.mxu0 0.0
    %3844 = vmatprep.subr.mxu0 0.0
    %3845 = vmatpush1.msra.mxu0 0.0
    %3846 = vmatprep.mubr.f32.mxu0 0.0
    %3847 = vmatmul.mubr.f32.gmra.mrb[0].mxu0 %v324
    %v3848 = vpop.f32.mrb[0].mxu0
    %v3849 = vadd.f32 %v322, %v3848
    %v3850 = vpop.f32.mrb[0].mxu0
    %3851 = vdwg.mxu0
    %v3852 = vmul.f32 %v3849, 0.01
    %v3853 = vmax.f32 %v3849, %v3852
    %v3854 = vsub.f32 %v3588, %v3853
    %v3855 = vadd.f32 %v3323, %v3854
    %s3856 = scalar_lea.vmem %s1, 168
    %v3857 = vld [vmem:[%s3856] sm:$0xff]
    %v3858 = vld [vmem:[%s3856 + $0x8] sm:$0xff]
    %v3859 = vld [vmem:[%s3856 + $0x10] sm:$0xf]
    %v3861 = vsel %vm81, %v3859, 0
    %3863 = vmatprep.subr.mxu0 0.0
    %3864 = vmatpush1.msra.mxu0 %v3857
    %3865 = vmatprep.subr.mxu0 0.0
    %3866 = vmatpush1.msra.mxu0 %v3858
    %3867 = vmatprep.subr.mxu0 0.0
    %3868 = vmatpush1.msra.mxu0 %v3861
    %3869 = vmatprep.subr.mxu0 0.0
    %3870 = vmatpush1.msra.mxu0 0.0
    %3871 = vmatprep.subr.mxu0 0.0
    %3872 = vmatpush1.msra.mxu0 0.0
    %3873 = vmatprep.subr.mxu0 0.0
    %3874 = vmatpush1.msra.mxu0 0.0
    %3875 = vmatprep.subr.mxu0 0.0
    %3876 = vmatpush1.msra.mxu0 0.0
    %3877 = vmatprep.subr.mxu0 0.0
    %3878 = vmatpush1.msra.mxu0 0.0
    %3879 = vmatprep.subr.mxu0 0.0
    %3880 = vmatpush1.msra.mxu0 0.0
    %3881 = vmatprep.subr.mxu0 0.0
    %3882 = vmatpush1.msra.mxu0 0.0
    %3883 = vmatprep.subr.mxu0 0.0
    %3884 = vmatpush1.msra.mxu0 0.0
    %3885 = vmatprep.subr.mxu0 0.0
    %3886 = vmatpush1.msra.mxu0 0.0
    %3887 = vmatprep.subr.mxu0 0.0
    %3888 = vmatpush1.msra.mxu0 0.0
    %3889 = vmatprep.subr.mxu0 0.0
    %3890 = vmatpush1.msra.mxu0 0.0
    %3891 = vmatprep.subr.mxu0 0.0
    %3892 = vmatpush1.msra.mxu0 0.0
    %3893 = vmatprep.subr.mxu0 0.0
    %3894 = vmatpush1.msra.mxu0 0.0
    %3895 = vmatprep.subr.mxu0 0.0
    %3896 = vmatpush1.msra.mxu0 0.0
    %3897 = vmatprep.subr.mxu0 0.0
    %3898 = vmatpush1.msra.mxu0 0.0
    %3899 = vmatprep.subr.mxu0 0.0
    %3900 = vmatpush1.msra.mxu0 0.0
    %3901 = vmatprep.subr.mxu0 0.0
    %3902 = vmatpush1.msra.mxu0 0.0
    %3903 = vmatprep.subr.mxu0 0.0
    %3904 = vmatpush1.msra.mxu0 0.0
    %3905 = vmatprep.subr.mxu0 0.0
    %3906 = vmatpush1.msra.mxu0 0.0
    %3907 = vmatprep.subr.mxu0 0.0
    %3908 = vmatpush1.msra.mxu0 0.0
    %3909 = vmatprep.subr.mxu0 0.0
    %3910 = vmatpush1.msra.mxu0 0.0
    %3911 = vmatprep.subr.mxu0 0.0
    %3912 = vmatpush1.msra.mxu0 0.0
    %3913 = vmatprep.subr.mxu0 0.0
    %3914 = vmatpush1.msra.mxu0 0.0
    %3915 = vmatprep.subr.mxu0 0.0
    %3916 = vmatpush1.msra.mxu0 0.0
    %3917 = vmatprep.subr.mxu0 0.0
    %3918 = vmatpush1.msra.mxu0 0.0
    %3919 = vmatprep.subr.mxu0 0.0
    %3920 = vmatpush1.msra.mxu0 0.0
    %3921 = vmatprep.subr.mxu0 0.0
    %3922 = vmatpush1.msra.mxu0 0.0
    %3923 = vmatprep.subr.mxu0 0.0
    %3924 = vmatpush1.msra.mxu0 0.0
    %3925 = vmatprep.subr.mxu0 0.0
    %3926 = vmatpush1.msra.mxu0 0.0
    %3927 = vmatprep.mubr.f32.mxu0 0.0
    %3928 = vmatmul.mubr.f32.gmra.mrb[0].mxu0 %v70
    %v3929 = vpop.f32.mrb[0].mxu0
    %v3930 = vadd.f32 %v51, %v3929
    %v3931 = vpop.f32.mrb[0].mxu0
    %3932 = vmatprep.mubr.f32.mxu0 0.0
    %3933 = vmatmul.mubr.f32.gmra.mrb[0].mxu0 %v73
    %v3934 = vpop.f32.mrb[0].mxu0
    %v3935 = vadd.f32 %v56, %v3934
    %v3936 = vpop.f32.mrb[0].mxu0
    %3937 = vmatprep.mubr.f32.mxu0 0.0
    %3938 = vmatmul.mubr.f32.gmra.mrb[0].mxu0 %v76
    %v3939 = vpop.f32.mrb[0].mxu0
    %v3940 = vadd.f32 %v61, %v3939
    %v3941 = vpop.f32.mrb[0].mxu0
    %3942 = vmatprep.mubr.f32.mxu0 0.0
    %3943 = vmatmul.mubr.f32.gmra.mrb[0].mxu0 %v79
    %v3944 = vpop.f32.mrb[0].mxu0
    %v3945 = vadd.f32 %v66, %v3944
    %v3946 = vpop.f32.mrb[0].mxu0
    %3947 = vdwg.mxu0
    %v3948 = vmul.f32 %v3930, 0.01
    %v3949 = vmul.f32 %v3935, 0.01
    %v3950 = vmul.f32 %v3940, 0.01
    %v3951 = vmul.f32 %v3945, 0.01
    %v3952 = vmax.f32 %v3930, %v3948
    %v3953 = vmax.f32 %v3935, %v3949
    %v3954 = vmax.f32 %v3940, %v3950
    %v3955 = vmax.f32 %v3945, %v3951
    %3956 = vmatprep.subr.mxu0 0.0
    %3957 = vmatpush1.msra.mxu0 %v3952
    %3958 = vmatprep.subr.mxu0 0.0
    %3959 = vmatpush1.msra.mxu0 %v3953
    %3960 = vmatprep.subr.mxu0 0.0
    %3961 = vmatpush1.msra.mxu0 %v3954
    %3962 = vmatprep.subr.mxu0 0.0
    %3963 = vmatpush1.msra.mxu0 %v3955
    %3964 = vmatprep.subr.mxu0 0.0
    %3965 = vmatpush1.msra.mxu0 0.0
    %3966 = vmatprep.subr.mxu0 0.0
    %3967 = vmatpush1.msra.mxu0 0.0
    %3968 = vmatprep.subr.mxu0 0.0
    %3969 = vmatpush1.msra.mxu0 0.0
    %3970 = vmatprep.subr.mxu0 0.0
    %3971 = vmatpush1.msra.mxu0 0.0
    %3972 = vmatprep.subr.mxu0 0.0
    %3973 = vmatpush1.msra.mxu0 0.0
    %3974 = vmatprep.subr.mxu0 0.0
    %3975 = vmatpush1.msra.mxu0 0.0
    %3976 = vmatprep.subr.mxu0 0.0
    %3977 = vmatpush1.msra.mxu0 0.0
    %3978 = vmatprep.subr.mxu0 0.0
    %3979 = vmatpush1.msra.mxu0 0.0
    %3980 = vmatprep.subr.mxu0 0.0
    %3981 = vmatpush1.msra.mxu0 0.0
    %3982 = vmatprep.subr.mxu0 0.0
    %3983 = vmatpush1.msra.mxu0 0.0
    %3984 = vmatprep.subr.mxu0 0.0
    %3985 = vmatpush1.msra.mxu0 0.0
    %3986 = vmatprep.subr.mxu0 0.0
    %3987 = vmatpush1.msra.mxu0 0.0
    %3988 = vmatprep.subr.mxu0 0.0
    %3989 = vmatpush1.msra.mxu0 0.0
    %3990 = vmatprep.subr.mxu0 0.0
    %3991 = vmatpush1.msra.mxu0 0.0
    %3992 = vmatprep.subr.mxu0 0.0
    %3993 = vmatpush1.msra.mxu0 0.0
    %3994 = vmatprep.subr.mxu0 0.0
    %3995 = vmatpush1.msra.mxu0 0.0
    %3996 = vmatprep.subr.mxu0 0.0
    %3997 = vmatpush1.msra.mxu0 0.0
    %3998 = vmatprep.subr.mxu0 0.0
    %3999 = vmatpush1.msra.mxu0 0.0
    %4000 = vmatprep.subr.mxu0 0.0
    %4001 = vmatpush1.msra.mxu0 0.0
    %4002 = vmatprep.subr.mxu0 0.0
    %4003 = vmatpush1.msra.mxu0 0.0
    %4004 = vmatprep.subr.mxu0 0.0
    %4005 = vmatpush1.msra.mxu0 0.0
    %4006 = vmatprep.subr.mxu0 0.0
    %4007 = vmatpush1.msra.mxu0 0.0
    %4008 = vmatprep.subr.mxu0 0.0
    %4009 = vmatpush1.msra.mxu0 0.0
    %4010 = vmatprep.subr.mxu0 0.0
    %4011 = vmatpush1.msra.mxu0 0.0
    %4012 = vmatprep.subr.mxu0 0.0
    %4013 = vmatpush1.msra.mxu0 0.0
    %4014 = vmatprep.subr.mxu0 0.0
    %4015 = vmatpush1.msra.mxu0 0.0
    %4016 = vmatprep.subr.mxu0 0.0
    %4017 = vmatpush1.msra.mxu0 0.0
    %4018 = vmatprep.subr.mxu0 0.0
    %4019 = vmatpush1.msra.mxu0 0.0
    %4020 = vmatprep.mubr.f32.mxu0 0.0
    %4021 = vmatmul.mubr.f32.gmra.mrb[0].mxu0 %v208
    %v4022 = vpop.f32.mrb[0].mxu0
    %v4023 = vadd.f32 %v189, %v4022
    %v4024 = vpop.f32.mrb[0].mxu0
    %4025 = vmatprep.mubr.f32.mxu0 0.0
    %4026 = vmatmul.mubr.f32.gmra.mrb[0].mxu0 %v211
    %v4027 = vpop.f32.mrb[0].mxu0
    %v4028 = vadd.f32 %v194, %v4027
    %v4029 = vpop.f32.mrb[0].mxu0
    %4030 = vmatprep.mubr.f32.mxu0 0.0
    %4031 = vmatmul.mubr.f32.gmra.mrb[0].mxu0 %v214
    %v4032 = vpop.f32.mrb[0].mxu0
    %v4033 = vadd.f32 %v199, %v4032
    %v4034 = vpop.f32.mrb[0].mxu0
    %4035 = vmatprep.mubr.f32.mxu0 0.0
    %4036 = vmatmul.mubr.f32.gmra.mrb[0].mxu0 %v217
    %v4037 = vpop.f32.mrb[0].mxu0
    %v4038 = vadd.f32 %v204, %v4037
    %v4039 = vpop.f32.mrb[0].mxu0
    %4040 = vdwg.mxu0
    %v4041 = vmul.f32 %v4023, 0.01
    %v4042 = vmul.f32 %v4028, 0.01
    %v4043 = vmul.f32 %v4033, 0.01
    %v4044 = vmul.f32 %v4038, 0.01
    %v4045 = vmax.f32 %v4023, %v4041
    %v4046 = vmax.f32 %v4028, %v4042
    %v4047 = vmax.f32 %v4033, %v4043
    %v4048 = vmax.f32 %v4038, %v4044
    %4049 = vmatprep.subr.mxu0 0.0
    %4050 = vmatpush1.msra.mxu0 %v4045
    %4051 = vmatprep.subr.mxu0 0.0
    %4052 = vmatpush1.msra.mxu0 %v4046
    %4053 = vmatprep.subr.mxu0 0.0
    %4054 = vmatpush1.msra.mxu0 %v4047
    %4055 = vmatprep.subr.mxu0 0.0
    %4056 = vmatpush1.msra.mxu0 %v4048
    %4057 = vmatprep.subr.mxu0 0.0
    %4058 = vmatpush1.msra.mxu0 0.0
    %4059 = vmatprep.subr.mxu0 0.0
    %4060 = vmatpush1.msra.mxu0 0.0
    %4061 = vmatprep.subr.mxu0 0.0
    %4062 = vmatpush1.msra.mxu0 0.0
    %4063 = vmatprep.subr.mxu0 0.0
    %4064 = vmatpush1.msra.mxu0 0.0
    %4065 = vmatprep.subr.mxu0 0.0
    %4066 = vmatpush1.msra.mxu0 0.0
    %4067 = vmatprep.subr.mxu0 0.0
    %4068 = vmatpush1.msra.mxu0 0.0
    %4069 = vmatprep.subr.mxu0 0.0
    %4070 = vmatpush1.msra.mxu0 0.0
    %4071 = vmatprep.subr.mxu0 0.0
    %4072 = vmatpush1.msra.mxu0 0.0
    %4073 = vmatprep.subr.mxu0 0.0
    %4074 = vmatpush1.msra.mxu0 0.0
    %4075 = vmatprep.subr.mxu0 0.0
    %4076 = vmatpush1.msra.mxu0 0.0
    %4077 = vmatprep.subr.mxu0 0.0
    %4078 = vmatpush1.msra.mxu0 0.0
    %4079 = vmatprep.subr.mxu0 0.0
    %4080 = vmatpush1.msra.mxu0 0.0
    %4081 = vmatprep.subr.mxu0 0.0
    %4082 = vmatpush1.msra.mxu0 0.0
    %4083 = vmatprep.subr.mxu0 0.0
    %4084 = vmatpush1.msra.mxu0 0.0
    %4085 = vmatprep.subr.mxu0 0.0
    %4086 = vmatpush1.msra.mxu0 0.0
    %4087 = vmatprep.subr.mxu0 0.0
    %4088 = vmatpush1.msra.mxu0 0.0
    %4089 = vmatprep.subr.mxu0 0.0
    %4090 = vmatpush1.msra.mxu0 0.0
    %4091 = vmatprep.subr.mxu0 0.0
    %4092 = vmatpush1.msra.mxu0 0.0
    %4093 = vmatprep.subr.mxu0 0.0
    %4094 = vmatpush1.msra.mxu0 0.0
    %4095 = vmatprep.subr.mxu0 0.0
    %4096 = vmatpush1.msra.mxu0 0.0
    %4097 = vmatprep.subr.mxu0 0.0
    %4098 = vmatpush1.msra.mxu0 0.0
    %4099 = vmatprep.subr.mxu0 0.0
    %4100 = vmatpush1.msra.mxu0 0.0
    %4101 = vmatprep.subr.mxu0 0.0
    %4102 = vmatpush1.msra.mxu0 0.0
    %4103 = vmatprep.subr.mxu0 0.0
    %4104 = vmatpush1.msra.mxu0 0.0
    %4105 = vmatprep.subr.mxu0 0.0
    %4106 = vmatpush1.msra.mxu0 0.0
    %4107 = vmatprep.subr.mxu0 0.0
    %4108 = vmatpush1.msra.mxu0 0.0
    %4109 = vmatprep.subr.mxu0 0.0
    %4110 = vmatpush1.msra.mxu0 0.0
    %4111 = vmatprep.subr.mxu0 0.0
    %4112 = vmatpush1.msra.mxu0 0.0
    %4113 = vmatprep.mubr.f32.mxu0 0.0
    %4114 = vmatmul.mubr.f32.gmra.mrb[0].mxu0 %v324
    %v4115 = vpop.f32.mrb[0].mxu0
    %v4116 = vadd.f32 %v322, %v4115
    %v4117 = vpop.f32.mrb[0].mxu0
    %4118 = vdwg.mxu0
    %v4119 = vmul.f32 %v4116, 0.01
    %v4120 = vmax.f32 %v4116, %v4119
    %s4121 = scalar_lea.vmem %s0, 168
    %v4122 = vld [vmem:[%s4121] sm:$0xff]
    %v4123 = vld [vmem:[%s4121 + $0x8] sm:$0xff]
    %v4124 = vld [vmem:[%s4121 + $0x10] sm:$0xf]
    %v4126 = vsel %vm81, %v4124, 0
    %4128 = vmatprep.subr.mxu0 0.0
    %4129 = vmatpush1.msra.mxu0 %v4122
    %4130 = vmatprep.subr.mxu0 0.0
    %4131 = vmatpush1.msra.mxu0 %v4123
    %4132 = vmatprep.subr.mxu0 0.0
    %4133 = vmatpush1.msra.mxu0 %v4126
    %4134 = vmatprep.subr.mxu0 0.0
    %4135 = vmatpush1.msra.mxu0 0.0
    %4136 = vmatprep.subr.mxu0 0.0
    %4137 = vmatpush1.msra.mxu0 0.0
    %4138 = vmatprep.subr.mxu0 0.0
    %4139 = vmatpush1.msra.mxu0 0.0
    %4140 = vmatprep.subr.mxu0 0.0
    %4141 = vmatpush1.msra.mxu0 0.0
    %4142 = vmatprep.subr.mxu0 0.0
    %4143 = vmatpush1.msra.mxu0 0.0
    %4144 = vmatprep.subr.mxu0 0.0
    %4145 = vmatpush1.msra.mxu0 0.0
    %4146 = vmatprep.subr.mxu0 0.0
    %4147 = vmatpush1.msra.mxu0 0.0
    %4148 = vmatprep.subr.mxu0 0.0
    %4149 = vmatpush1.msra.mxu0 0.0
    %4150 = vmatprep.subr.mxu0 0.0
    %4151 = vmatpush1.msra.mxu0 0.0
    %4152 = vmatprep.subr.mxu0 0.0
    %4153 = vmatpush1.msra.mxu0 0.0
    %4154 = vmatprep.subr.mxu0 0.0
    %4155 = vmatpush1.msra.mxu0 0.0
    %4156 = vmatprep.subr.mxu0 0.0
    %4157 = vmatpush1.msra.mxu0 0.0
    %4158 = vmatprep.subr.mxu0 0.0
    %4159 = vmatpush1.msra.mxu0 0.0
    %4160 = vmatprep.subr.mxu0 0.0
    %4161 = vmatpush1.msra.mxu0 0.0
    %4162 = vmatprep.subr.mxu0 0.0
    %4163 = vmatpush1.msra.mxu0 0.0
    %4164 = vmatprep.subr.mxu0 0.0
    %4165 = vmatpush1.msra.mxu0 0.0
    %4166 = vmatprep.subr.mxu0 0.0
    %4167 = vmatpush1.msra.mxu0 0.0
    %4168 = vmatprep.subr.mxu0 0.0
    %4169 = vmatpush1.msra.mxu0 0.0
    %4170 = vmatprep.subr.mxu0 0.0
    %4171 = vmatpush1.msra.mxu0 0.0
    %4172 = vmatprep.subr.mxu0 0.0
    %4173 = vmatpush1.msra.mxu0 0.0
    %4174 = vmatprep.subr.mxu0 0.0
    %4175 = vmatpush1.msra.mxu0 0.0
    %4176 = vmatprep.subr.mxu0 0.0
    %4177 = vmatpush1.msra.mxu0 0.0
    %4178 = vmatprep.subr.mxu0 0.0
    %4179 = vmatpush1.msra.mxu0 0.0
    %4180 = vmatprep.subr.mxu0 0.0
    %4181 = vmatpush1.msra.mxu0 0.0
    %4182 = vmatprep.subr.mxu0 0.0
    %4183 = vmatpush1.msra.mxu0 0.0
    %4184 = vmatprep.subr.mxu0 0.0
    %4185 = vmatpush1.msra.mxu0 0.0
    %4186 = vmatprep.subr.mxu0 0.0
    %4187 = vmatpush1.msra.mxu0 0.0
    %4188 = vmatprep.subr.mxu0 0.0
    %4189 = vmatpush1.msra.mxu0 0.0
    %4190 = vmatprep.subr.mxu0 0.0
    %4191 = vmatpush1.msra.mxu0 0.0
    %4192 = vmatprep.mubr.f32.mxu0 0.0
    %4193 = vmatmul.mubr.f32.gmra.mrb[0].mxu0 %v70
    %v4194 = vpop.f32.mrb[0].mxu0
    %v4195 = vadd.f32 %v51, %v4194
    %v4196 = vpop.f32.mrb[0].mxu0
    %4197 = vmatprep.mubr.f32.mxu0 0.0
    %4198 = vmatmul.mubr.f32.gmra.mrb[0].mxu0 %v73
    %v4199 = vpop.f32.mrb[0].mxu0
    %v4200 = vadd.f32 %v56, %v4199
    %v4201 = vpop.f32.mrb[0].mxu0
    %4202 = vmatprep.mubr.f32.mxu0 0.0
    %4203 = vmatmul.mubr.f32.gmra.mrb[0].mxu0 %v76
    %v4204 = vpop.f32.mrb[0].mxu0
    %v4205 = vadd.f32 %v61, %v4204
    %v4206 = vpop.f32.mrb[0].mxu0
    %4207 = vmatprep.mubr.f32.mxu0 0.0
    %4208 = vmatmul.mubr.f32.gmra.mrb[0].mxu0 %v79
    %v4209 = vpop.f32.mrb[0].mxu0
    %v4210 = vadd.f32 %v66, %v4209
    %v4211 = vpop.f32.mrb[0].mxu0
    %4212 = vdwg.mxu0
    %v4213 = vmul.f32 %v4195, 0.01
    %v4214 = vmul.f32 %v4200, 0.01
    %v4215 = vmul.f32 %v4205, 0.01
    %v4216 = vmul.f32 %v4210, 0.01
    %v4217 = vmax.f32 %v4195, %v4213
    %v4218 = vmax.f32 %v4200, %v4214
    %v4219 = vmax.f32 %v4205, %v4215
    %v4220 = vmax.f32 %v4210, %v4216
    %4221 = vmatprep.subr.mxu0 0.0
    %4222 = vmatpush1.msra.mxu0 %v4217
    %4223 = vmatprep.subr.mxu0 0.0
    %4224 = vmatpush1.msra.mxu0 %v4218
    %4225 = vmatprep.subr.mxu0 0.0
    %4226 = vmatpush1.msra.mxu0 %v4219
    %4227 = vmatprep.subr.mxu0 0.0
    %4228 = vmatpush1.msra.mxu0 %v4220
    %4229 = vmatprep.subr.mxu0 0.0
    %4230 = vmatpush1.msra.mxu0 0.0
    %4231 = vmatprep.subr.mxu0 0.0
    %4232 = vmatpush1.msra.mxu0 0.0
    %4233 = vmatprep.subr.mxu0 0.0
    %4234 = vmatpush1.msra.mxu0 0.0
    %4235 = vmatprep.subr.mxu0 0.0
    %4236 = vmatpush1.msra.mxu0 0.0
    %4237 = vmatprep.subr.mxu0 0.0
    %4238 = vmatpush1.msra.mxu0 0.0
    %4239 = vmatprep.subr.mxu0 0.0
    %4240 = vmatpush1.msra.mxu0 0.0
    %4241 = vmatprep.subr.mxu0 0.0
    %4242 = vmatpush1.msra.mxu0 0.0
    %4243 = vmatprep.subr.mxu0 0.0
    %4244 = vmatpush1.msra.mxu0 0.0
    %4245 = vmatprep.subr.mxu0 0.0
    %4246 = vmatpush1.msra.mxu0 0.0
    %4247 = vmatprep.subr.mxu0 0.0
    %4248 = vmatpush1.msra.mxu0 0.0
    %4249 = vmatprep.subr.mxu0 0.0
    %4250 = vmatpush1.msra.mxu0 0.0
    %4251 = vmatprep.subr.mxu0 0.0
    %4252 = vmatpush1.msra.mxu0 0.0
    %4253 = vmatprep.subr.mxu0 0.0
    %4254 = vmatpush1.msra.mxu0 0.0
    %4255 = vmatprep.subr.mxu0 0.0
    %4256 = vmatpush1.msra.mxu0 0.0
    %4257 = vmatprep.subr.mxu0 0.0
    %4258 = vmatpush1.msra.mxu0 0.0
    %4259 = vmatprep.subr.mxu0 0.0
    %4260 = vmatpush1.msra.mxu0 0.0
    %4261 = vmatprep.subr.mxu0 0.0
    %4262 = vmatpush1.msra.mxu0 0.0
    %4263 = vmatprep.subr.mxu0 0.0
    %4264 = vmatpush1.msra.mxu0 0.0
    %4265 = vmatprep.subr.mxu0 0.0
    %4266 = vmatpush1.msra.mxu0 0.0
    %4267 = vmatprep.subr.mxu0 0.0
    %4268 = vmatpush1.msra.mxu0 0.0
    %4269 = vmatprep.subr.mxu0 0.0
    %4270 = vmatpush1.msra.mxu0 0.0
    %4271 = vmatprep.subr.mxu0 0.0
    %4272 = vmatpush1.msra.mxu0 0.0
    %4273 = vmatprep.subr.mxu0 0.0
    %4274 = vmatpush1.msra.mxu0 0.0
    %4275 = vmatprep.subr.mxu0 0.0
    %4276 = vmatpush1.msra.mxu0 0.0
    %4277 = vmatprep.subr.mxu0 0.0
    %4278 = vmatpush1.msra.mxu0 0.0
    %4279 = vmatprep.subr.mxu0 0.0
    %4280 = vmatpush1.msra.mxu0 0.0
    %4281 = vmatprep.subr.mxu0 0.0
    %4282 = vmatpush1.msra.mxu0 0.0
    %4283 = vmatprep.subr.mxu0 0.0
    %4284 = vmatpush1.msra.mxu0 0.0
    %4285 = vmatprep.mubr.f32.mxu0 0.0
    %4286 = vmatmul.mubr.f32.gmra.mrb[0].mxu0 %v208
    %v4287 = vpop.f32.mrb[0].mxu0
    %v4288 = vadd.f32 %v189, %v4287
    %v4289 = vpop.f32.mrb[0].mxu0
    %4290 = vmatprep.mubr.f32.mxu0 0.0
    %4291 = vmatmul.mubr.f32.gmra.mrb[0].mxu0 %v211
    %v4292 = vpop.f32.mrb[0].mxu0
    %v4293 = vadd.f32 %v194, %v4292
    %v4294 = vpop.f32.mrb[0].mxu0
    %4295 = vmatprep.mubr.f32.mxu0 0.0
    %4296 = vmatmul.mubr.f32.gmra.mrb[0].mxu0 %v214
    %v4297 = vpop.f32.mrb[0].mxu0
    %v4298 = vadd.f32 %v199, %v4297
    %v4299 = vpop.f32.mrb[0].mxu0
    %4300 = vmatprep.mubr.f32.mxu0 0.0
    %4301 = vmatmul.mubr.f32.gmra.mrb[0].mxu0 %v217
    %v4302 = vpop.f32.mrb[0].mxu0
    %v4303 = vadd.f32 %v204, %v4302
    %v4304 = vpop.f32.mrb[0].mxu0
    %4305 = vdwg.mxu0
    %v4306 = vmul.f32 %v4288, 0.01
    %v4307 = vmul.f32 %v4293, 0.01
    %v4308 = vmul.f32 %v4298, 0.01
    %v4309 = vmul.f32 %v4303, 0.01
    %v4310 = vmax.f32 %v4288, %v4306
    %v4311 = vmax.f32 %v4293, %v4307
    %v4312 = vmax.f32 %v4298, %v4308
    %v4313 = vmax.f32 %v4303, %v4309
    %4314 = vmatprep.subr.mxu0 0.0
    %4315 = vmatpush1.msra.mxu0 %v4310
    %4316 = vmatprep.subr.mxu0 0.0
    %4317 = vmatpush1.msra.mxu0 %v4311
    %4318 = vmatprep.subr.mxu0 0.0
    %4319 = vmatpush1.msra.mxu0 %v4312
    %4320 = vmatprep.subr.mxu0 0.0
    %4321 = vmatpush1.msra.mxu0 %v4313
    %4322 = vmatprep.subr.mxu0 0.0
    %4323 = vmatpush1.msra.mxu0 0.0
    %4324 = vmatprep.subr.mxu0 0.0
    %4325 = vmatpush1.msra.mxu0 0.0
    %4326 = vmatprep.subr.mxu0 0.0
    %4327 = vmatpush1.msra.mxu0 0.0
    %4328 = vmatprep.subr.mxu0 0.0
    %4329 = vmatpush1.msra.mxu0 0.0
    %4330 = vmatprep.subr.mxu0 0.0
    %4331 = vmatpush1.msra.mxu0 0.0
    %4332 = vmatprep.subr.mxu0 0.0
    %4333 = vmatpush1.msra.mxu0 0.0
    %4334 = vmatprep.subr.mxu0 0.0
    %4335 = vmatpush1.msra.mxu0 0.0
    %4336 = vmatprep.subr.mxu0 0.0
    %4337 = vmatpush1.msra.mxu0 0.0
    %4338 = vmatprep.subr.mxu0 0.0
    %4339 = vmatpush1.msra.mxu0 0.0
    %4340 = vmatprep.subr.mxu0 0.0
    %4341 = vmatpush1.msra.mxu0 0.0
    %4342 = vmatprep.subr.mxu0 0.0
    %4343 = vmatpush1.msra.mxu0 0.0
    %4344 = vmatprep.subr.mxu0 0.0
    %4345 = vmatpush1.msra.mxu0 0.0
    %4346 = vmatprep.subr.mxu0 0.0
    %4347 = vmatpush1.msra.mxu0 0.0
    %4348 = vmatprep.subr.mxu0 0.0
    %4349 = vmatpush1.msra.mxu0 0.0
    %4350 = vmatprep.subr.mxu0 0.0
    %4351 = vmatpush1.msra.mxu0 0.0
    %4352 = vmatprep.subr.mxu0 0.0
    %4353 = vmatpush1.msra.mxu0 0.0
    %4354 = vmatprep.subr.mxu0 0.0
    %4355 = vmatpush1.msra.mxu0 0.0
    %4356 = vmatprep.subr.mxu0 0.0
    %4357 = vmatpush1.msra.mxu0 0.0
    %4358 = vmatprep.subr.mxu0 0.0
    %4359 = vmatpush1.msra.mxu0 0.0
    %4360 = vmatprep.subr.mxu0 0.0
    %4361 = vmatpush1.msra.mxu0 0.0
    %4362 = vmatprep.subr.mxu0 0.0
    %4363 = vmatpush1.msra.mxu0 0.0
    %4364 = vmatprep.subr.mxu0 0.0
    %4365 = vmatpush1.msra.mxu0 0.0
    %4366 = vmatprep.subr.mxu0 0.0
    %4367 = vmatpush1.msra.mxu0 0.0
    %4368 = vmatprep.subr.mxu0 0.0
    %4369 = vmatpush1.msra.mxu0 0.0
    %4370 = vmatprep.subr.mxu0 0.0
    %4371 = vmatpush1.msra.mxu0 0.0
    %4372 = vmatprep.subr.mxu0 0.0
    %4373 = vmatpush1.msra.mxu0 0.0
    %4374 = vmatprep.subr.mxu0 0.0
    %4375 = vmatpush1.msra.mxu0 0.0
    %4376 = vmatprep.subr.mxu0 0.0
    %4377 = vmatpush1.msra.mxu0 0.0
    %4378 = vmatprep.mubr.f32.mxu0 0.0
    %4379 = vmatmul.mubr.f32.gmra.mrb[0].mxu0 %v324
    %v4380 = vpop.f32.mrb[0].mxu0
    %v4381 = vadd.f32 %v322, %v4380
    %v4382 = vpop.f32.mrb[0].mxu0
    %4383 = vdwg.mxu0
    %v4384 = vmul.f32 %v4381, 0.01
    %v4385 = vmax.f32 %v4381, %v4384
    %v4386 = vsub.f32 %v4120, %v4385
    %v4387 = vadd.f32 %v3855, %v4386
    %v4388 = vld [vmem:[#allocation3] sm:$0x1]
    %4390 = vset.pattern.permute.xlu0 0
    %4391 = vperm.xlu0 %4390, %v4388
    %v4392 = vpop.permute.xlu0 %4391
    %v4394 = vlaneseq
    %v4395 = vshrl.u32 %v4394, 7
    %v4396 = vsub.s32 0, %v4395
    %v4397 = vrot.slane %v4392, %v4396
    %v4398 = vmul.f32 %v4387, %v4397
    %v4399 = vsub.f32 0.0, %v4398
    %v4400 = vmul.f32 %v4399, 1.442695
    %v4401 = vpow.pop %v4400
    %v4402 = vadd.f32 %v4401, 1.0
    %v4403 = vrcp.pop %v4402
    %v4404 = vmul.f32 1.0, %v4403
    %vm4405 = vcmask 8192
    %4406 = vst.msk [vmem:[#allocation4] sm:$0x1] %vm4405, %v4404
    // Predicated region
    $region38: #{tpu_custom_call.1} parent=1 // pred_check
      _
    $region39: #{tpu_custom_call.1} parent=1 // pred_check_branch
      %4408 = sbr.rel (0) target = $region41
    $region40: #{tpu_custom_call.1} parent=1 // pred_region
      %s4410 = ssub.s32 16, 16
      %4411 = vsyncadd [#allocation5], %s4410
      %s4413 = sshll.u32 [#allocation4], 4
      %s4414 = int_to_ptr.vmem [resolvable:$true] %s4413
      %4416 = dma.vmem_to_hbm [thread:$0]  %s4414, 16, %s9, [#allocation5]
    $region41: #{tpu_custom_call.1} parent=1 // pred_fallthru
      _
    // Predicated region
    $region42: #{tpu_custom_call.1} parent=1 // pred_check
      _
    $region43: #{tpu_custom_call.1} parent=1 // pred_check_branch
      %4418 = sbr.rel (0) target = $region45
    $region44: #{tpu_custom_call.1} parent=1 // pred_region
      %4419 = dma.done [#allocation5], 16
    $region45: #{tpu_custom_call.1} parent=1 // pred_fallthru
      _
    %4420 = vsyncpa [#allocation5], 1

</llo_original>
